<compile_context>
chip_gen: v7x
topology: tpu7x:2x2x1
jax: 0.10.0
libtpu: 0.0.40
codegen_flags: <defaults>
</compile_context>

<pallas_src>
import numpy as np
import jax
import jax.numpy as jnp
from jax import lax
from jax.experimental import pallas as pl
from jax.experimental.pallas import tpu as pltpu

LANE = 128
M_TILE_CAP = 256          # rows of the GEMM per grid step (multiple of 8)
VMEM_LIMIT = 32 * 1024 * 1024


def _round_up(x, m):
    return (x + m - 1) // m * m


# ---------------------------------------------------------------------------
# Wrapper-side layout plumbing: fold the 27 conv taps into the contraction dim
# ---------------------------------------------------------------------------
def _im2col_k3_s2_p1(x):
    """x: [N, D, H, W, C] (bf16) -> ([N, Do*Ho*Wo, 27*C] bf16, (Do, Ho, Wo)).

    K ordering is (kd, kh, kw, c) with c minor, matching _prep_weight below."""
    N, D, H, W, C = x.shape
    Do, Ho, Wo = (D - 1) // 2 + 1, (H - 1) // 2 + 1, (W - 1) // 2 + 1
    xp = jnp.pad(x, ((0, 0), (1, 1), (1, 1), (1, 1), (0, 0)))
    taps = []
    for kd in range(3):
        for kh in range(3):
            for kw in range(3):
                taps.append(lax.slice(
                    xp,
                    (0, kd, kh, kw, 0),
                    (N, kd + 2 * Do - 1, kh + 2 * Ho - 1, kw + 2 * Wo - 1, C),
                    (1, 2, 2, 2, 1)))
    xc = jnp.stack(taps, axis=4)                     # [N, Do, Ho, Wo, 27, C]
    xc = xc.reshape(N, Do * Ho * Wo, 27 * C)
    return xc, (Do, Ho, Wo)


def _prep_weight(w, cin_act, cout_pad, k_pad):
    """w: [Cout, Cin_true, 3, 3, 3] (PyTorch) -> [k_pad, cout_pad] bf16 with the
    same (kd, kh, kw, c) K ordering as the im2col; padded rows/cols are zero."""
    Cout, Cin_true = int(w.shape[0]), int(w.shape[1])
    wt = jnp.transpose(w.astype(jnp.float32), (2, 3, 4, 1, 0))   # [3,3,3,Ci,Co]
    wt = jnp.pad(wt, ((0, 0), (0, 0), (0, 0),
                      (0, cin_act - Cin_true), (0, cout_pad - Cout)))
    wt = wt.reshape(27 * cin_act, cout_pad)
    wt = jnp.pad(wt, ((0, k_pad - 27 * cin_act), (0, 0)))
    return wt.astype(jnp.bfloat16)


def _prep_bias(b, cout_pad):
    Cout = int(b.shape[0])
    return jnp.pad(b.astype(jnp.float32), (0, cout_pad - Cout)).reshape(1, cout_pad)


def _adaptive_pool_matrix(in_size, out_size):
    P = np.zeros((out_size, in_size), np.float32)
    for i in range(out_size):
        s = (i * in_size) // out_size
        e = -((-(i + 1) * in_size) // out_size)      # ceil((i+1)*in/out)
        P[i, s:e] = 1.0 / (e - s)
    return P


# ---------------------------------------------------------------------------
# Pallas kernels
# ---------------------------------------------------------------------------
def _gemm_bias_kernel(x_ref, w_ref, b_ref, o_ref):
    # x: [tm, K] bf16, w: [K, coutp] bf16 (VMEM-resident), b: [1, coutp] f32.
    acc = jnp.dot(x_ref[0], w_ref[...], preferred_element_type=jnp.float32)
    o_ref[0] = (acc + b_ref[...]).astype(o_ref.dtype)


def _gemm_bias_pool_kernel(x_ref, w_ref, b_ref, p_ref, o_ref):
    # conv3 + fused AdaptiveAvgPool3d: pool matrix applied to the f32 accumulator.
    acc = jnp.dot(x_ref[0], w_ref[...], preferred_element_type=jnp.float32)
    acc = acc + b_ref[...]                                   # [M3, coutp] f32
    o_ref[0] = jnp.dot(p_ref[...], acc,
                       preferred_element_type=jnp.float32)   # [npool, coutp] f32


def _gemm_bias(x_col, w, b, out_dtype):
    """x_col: [N, M, K] bf16; w: [K, coutp] bf16; b: [1, coutp] f32.
    Returns [N, M, coutp] out_dtype.  Weights/bias are VMEM-resident (constant
    index_map); M is tiled so VMEM stays small on every TPU generation."""
    N, M, K = x_col.shape
    coutp = int(w.shape[1])
    if M <= M_TILE_CAP:
        tm, Mp = M, M
    else:
        tm = M_TILE_CAP
        Mp = _round_up(M, tm)
        x_col = jnp.pad(x_col, ((0, 0), (0, Mp - M), (0, 0)))
    nm = Mp // tm

    out = pl.pallas_call(
        _gemm_bias_kernel,
        out_shape=jax.ShapeDtypeStruct((N, Mp, coutp), out_dtype),
        grid=(N, nm),
        in_specs=[
            pl.BlockSpec((1, tm, K), lambda n, m: (n, m, 0)),
            pl.BlockSpec((K, coutp), lambda n, m: (0, 0)),    # resident weights
            pl.BlockSpec((1, coutp), lambda n, m: (0, 0)),    # resident bias
        ],
        out_specs=pl.BlockSpec((1, tm, coutp), lambda n, m: (n, m, 0)),
        compiler_params=pltpu.CompilerParams(
            dimension_semantics=("parallel", "parallel"),
            vmem_limit_bytes=VMEM_LIMIT),
    )(x_col, w, b)
    return out[:, :M] if Mp != M else out


# ---------------------------------------------------------------------------
# Conv3d(k=3, s=2, p=1) wrappers
# ---------------------------------------------------------------------------
def conv3d_k3_s2_p1(x, w, b):
    """x: [N, D, H, W, Cin_act] (channels possibly zero-padded); w: PyTorch layout
    [Cout, Cin_true, 3, 3, 3]; b: [Cout].  Returns [N, Do, Ho, Wo, coutp] bf16 with
    coutp = round_up(Cout, 128) and the extra channels exactly zero."""
    N = x.shape[0]
    cin_act = int(x.shape[-1])
    coutp = _round_up(int(w.shape[0]), LANE)

    xc, (Do, Ho, Wo) = _im2col_k3_s2_p1(x.astype(jnp.bfloat16))
    K = 27 * cin_act
    Kp = _round_up(K, LANE)
    if Kp != K:
        xc = jnp.pad(xc, ((0, 0), (0, 0), (0, Kp - K)))
    wk = _prep_weight(w, cin_act, coutp, Kp)
    bp = _prep_bias(b, coutp)

    y = _gemm_bias(xc, wk, bp, jnp.bfloat16)
    return y.reshape(N, Do, Ho, Wo, coutp)


def conv3d_k3_s2_p1_fused_pool(x, w, b, pool_out_shape):
    """Final conv + AdaptiveAvgPool3d fused into one pallas_call per batch.
    Returns [N, do*dh*dw, coutp] f32 (exact PyTorch floor/ceil pooling bins)."""
    N = x.shape[0]
    cin_act = int(x.shape[-1])
    coutp = _round_up(int(w.shape[0]), LANE)

    xc, (Do, Ho, Wo) = _im2col_k3_s2_p1(x.astype(jnp.bfloat16))
    K = 27 * cin_act
    Kp = _round_up(K, LANE)
    if Kp != K:
        xc = jnp.pad(xc, ((0, 0), (0, 0), (0, Kp - K)))
    wk = _prep_weight(w, cin_act, coutp, Kp)
    bp = _prep_bias(b, coutp)

    do, dh, dw = pool_out_shape
    npool, M3 = do * dh * dw, Do * Ho * Wo
    P = np.einsum("ad,bh,cw->abcdhw",
                  _adaptive_pool_matrix(Do, do),
                  _adaptive_pool_matrix(Ho, dh),
                  _adaptive_pool_matrix(Wo, dw)).reshape(npool, M3)
    P = jnp.asarray(P, jnp.float32)

    # TODO(synk): with N == 1 on v7x this single-axis grid feeds only one
    # TensorCore; promote an M tile axis if the final conv ever grows.
    out = pl.pallas_call(
        _gemm_bias_pool_kernel,
        out_shape=jax.ShapeDtypeStruct((N, npool, coutp), jnp.float32),
        grid=(N,),
        in_specs=[
            pl.BlockSpec((1, M3, Kp), lambda n: (n, 0, 0)),
            pl.BlockSpec((Kp, coutp), lambda n: (0, 0)),      # resident weights
            pl.BlockSpec((1, coutp), lambda n: (0, 0)),       # resident bias
            pl.BlockSpec((npool, M3), lambda n: (0, 0)),      # resident pool matrix
        ],
        out_specs=pl.BlockSpec((1, npool, coutp), lambda n: (n, 0, 0)),
        compiler_params=pltpu.CompilerParams(
            dimension_semantics=("parallel",),
            vmem_limit_bytes=VMEM_LIMIT),
    )(xc, wk, bp, P)
    return out


# ---------------------------------------------------------------------------
# ExtraDataEncoder: parameters + forward
# ---------------------------------------------------------------------------
def init_params(key, in_channels, bottleneck_channels):
    ks = jax.random.split(key, 6)

    def conv_params(kw, kb, cin, cout):
        fan_in = cin * 27
        bound = 1.0 / np.sqrt(fan_in)
        w = jax.random.uniform(kw, (cout, cin, 3, 3, 3), jnp.float32, -bound, bound)
        b = jax.random.uniform(kb, (cout,), jnp.float32, -bound, bound)
        return w, b

    w1, b1 = conv_params(ks[0], ks[1], in_channels, 64)
    w2, b2 = conv_params(ks[2], ks[3], 64, 128)
    w3, b3 = conv_params(ks[4], ks[5], 128, bottleneck_channels)
    return dict(w1=w1, b1=b1, w2=w2, b2=b2, w3=w3, b3=b3)


def extra_data_encoder_forward(params, x_ncdhw, bottleneck_shape, bottleneck_channels):
    x = jnp.transpose(x_ncdhw, (0, 2, 3, 4, 1))                 # NCDHW -> NDHWC
    x = conv3d_k3_s2_p1(x, params["w1"], params["b1"])          # channels padded to 128
    x = conv3d_k3_s2_p1(x, params["w2"], params["b2"])
    x = conv3d_k3_s2_p1_fused_pool(x, params["w3"], params["b3"], bottleneck_shape)
    x = x[..., :bottleneck_channels]                            # drop lane padding
    do, dh, dw = bottleneck_shape
    x = x.reshape(x.shape[0], do, dh, dw, bottleneck_channels)
    return jnp.transpose(x, (0, 4, 1, 2, 3))                    # NDHWC -> NCDHW


# ---------------------------------------------------------------------------
# Pure-JAX f32 reference (correctness check only)
# ---------------------------------------------------------------------------
def reference_forward(params, x_ncdhw, bottleneck_shape):
    x = jnp.transpose(x_ncdhw, (0, 2, 3, 4, 1)).astype(jnp.float32)

    def conv(x, w, b):
        wj = jnp.transpose(w, (2, 3, 4, 1, 0)).astype(jnp.float32)
        y = lax.conv_general_dilated(
            x, wj, window_strides=(2, 2, 2),
            padding=((1, 1), (1, 1), (1, 1)),
            dimension_numbers=("NDHWC", "DHWIO", "NDHWC"))
        return y + b.astype(jnp.float32)

    x = conv(x, params["w1"], params["b1"])
    x = conv(x, params["w2"], params["b2"])
    x = conv(x, params["w3"], params["b3"])
    N, D, H, W, C = x.shape
    do, dh, dw = bottleneck_shape
    Pd = jnp.asarray(_adaptive_pool_matrix(D, do))
    Ph = jnp.asarray(_adaptive_pool_matrix(H, dh))
    Pw = jnp.asarray(_adaptive_pool_matrix(W, dw))
    x = jnp.einsum("pd,qh,rw,ndhwe->npqre", Pd, Ph, Pw, x)
    return jnp.transpose(x, (0, 4, 1, 2, 3))


if __name__ == "__main__":
    key = jax.random.PRNGKey(0)
    k_in, k_par = jax.random.split(key)

    in_channels = 4
    bottleneck_channels = 32
    bottleneck_shape = (1, 2, 2)

    # NCDHW input, matching the PyTorch Conv3d convention.
    x = jax.random.normal(k_in, (2, in_channels, 16, 16, 16), jnp.float32)
    params = init_params(k_par, in_channels, bottleneck_channels)

    fwd = jax.jit(lambda p, xx: extra_data_encoder_forward(
        p, xx, bottleneck_shape, bottleneck_channels))
    out = jax.block_until_ready(fwd(params, x))

    ref = jax.block_until_ready(reference_forward(params, x, bottleneck_shape))
    assert out.shape == (2, bottleneck_channels) + bottleneck_shape, out.shape
    np.testing.assert_allclose(np.asarray(out), np.asarray(ref), rtol=3e-2, atol=3e-2)

    print("KERNEL_OK")
</pallas_src>

<mosaic_0001>
module attributes {stable_mosaic.version = 11 : i64} {
  func.func @_gemm_bias_kernel(%arg0: i32, %arg1: i32, %arg2: memref<1x256x128xbf16, #tpu.memory_space<vmem>>, %arg3: memref<128x128xbf16, #tpu.memory_space<vmem>>, %arg4: memref<1x128xf32, #tpu.memory_space<vmem>>, %arg5: memref<1x256x128xbf16, #tpu.memory_space<vmem>>) attributes {dimension_semantics = [#tpu.dimension_semantics<parallel>, #tpu.dimension_semantics<parallel>], iteration_bounds = array<i64: 2, 2>, scalar_prefetch = 0 : i64, scratch_operands = 0 : i64, tpu.core_type = #tpu.core_type<tc>, window_params = [{transform_indices = @transform_0, window_bounds = array<i64: 1, 256, 128>}, {pipeline_mode = #tpu.pipeline_mode<synchronous>, transform_indices = @transform_1, window_bounds = array<i64: 128, 128>}, {pipeline_mode = #tpu.pipeline_mode<synchronous>, transform_indices = @transform_2, window_bounds = array<i64: 1, 128>}, {transform_indices = @transform_3, window_bounds = array<i64: 1, 256, 128>}]} {
    %c0 = arith.constant 0 : index
    %c0_0 = arith.constant 0 : index
    %c0_1 = arith.constant 0 : index
    %0 = vector.load %arg2[%c0, %c0_0, %c0_1] : memref<1x256x128xbf16, #tpu.memory_space<vmem>>, vector<1x256x128xbf16>
    %1 = vector.shape_cast %0 : vector<1x256x128xbf16> to vector<256x128xbf16>
    %c0_2 = arith.constant 0 : index
    %c0_3 = arith.constant 0 : index
    %2 = vector.load %arg3[%c0_2, %c0_3] : memref<128x128xbf16, #tpu.memory_space<vmem>>, vector<128x128xbf16>
    %cst = arith.constant dense<0.000000e+00> : vector<256x128xf32>
    %3 = tpu.matmul %1, %2, %cst {dimension_numbers = #tpu.dot_dimension_numbers<[1], [0], [0], [1], [0, 0, 1, 1], [], []>} : vector<256x128xbf16>, vector<128x128xbf16>, vector<256x128xf32> -> vector<256x128xf32>
    %c0_4 = arith.constant 0 : index
    %c0_5 = arith.constant 0 : index
    %4 = vector.load %arg4[%c0_4, %c0_5] : memref<1x128xf32, #tpu.memory_space<vmem>>, vector<1x128xf32>
    %5 = vector.broadcast %4 : vector<1x128xf32> to vector<256x128xf32>
    %6 = arith.addf %3, %5 : vector<256x128xf32>
    %7 = arith.truncf %6 : vector<256x128xf32> to vector<256x128xbf16>
    %c0_6 = arith.constant 0 : index
    %c0_7 = arith.constant 0 : index
    %c0_8 = arith.constant 0 : index
    %8 = vector.load %arg5[%c0_6, %c0_7, %c0_8] : memref<1x256x128xbf16, #tpu.memory_space<vmem>>, vector<1x256x128xbf16>
    %9 = vector.shape_cast %8 : vector<1x256x128xbf16> to vector<256x128xbf16>
    %10 = vector.shape_cast %7 : vector<256x128xbf16> to vector<1x256x128xbf16>
    tpu.vector_store %arg5[%c0_6, %c0_7, %c0_8], %10 {strides = array<i32>} : memref<1x256x128xbf16, #tpu.memory_space<vmem>>, vector<1x256x128xbf16>,
    return
  }
  func.func @transform_0(%arg0: i32, %arg1: i32) -> (i32, i32, i32) {
    %c0_i32 = arith.constant 0 : i32
    %c0_i32_0 = arith.constant 0 : i32
    return %arg0, %arg1, %c0_i32 : i32, i32, i32
  }
  func.func @transform_1(%arg0: i32, %arg1: i32) -> (i32, i32) {
    %c0_i32 = arith.constant 0 : i32
    %c0_i32_0 = arith.constant 0 : i32
    %c0_i32_1 = arith.constant 0 : i32
    return %c0_i32, %c0_i32_0 : i32, i32
  }
  func.func @transform_2(%arg0: i32, %arg1: i32) -> (i32, i32) {
    %c0_i32 = arith.constant 0 : i32
    %c0_i32_0 = arith.constant 0 : i32
    %c0_i32_1 = arith.constant 0 : i32
    return %c0_i32, %c0_i32_0 : i32, i32
  }
  func.func @transform_3(%arg0: i32, %arg1: i32) -> (i32, i32, i32) {
    %c0_i32 = arith.constant 0 : i32
    %c0_i32_0 = arith.constant 0 : i32
    return %arg0, %arg1, %c0_i32 : i32, i32, i32
  }
}

module attributes {stable_mosaic.version = 11 : i64} {
  func.func @_gemm_bias_kernel(%arg0: i32, %arg1: i32, %arg2: memref<1x64x3456xbf16, #tpu.memory_space<vmem>>, %arg3: memref<3456x128xbf16, #tpu.memory_space<vmem>>, %arg4: memref<1x128xf32, #tpu.memory_space<vmem>>, %arg5: memref<1x64x128xbf16, #tpu.memory_space<vmem>>) attributes {dimension_semantics = [#tpu.dimension_semantics<parallel>, #tpu.dimension_semantics<parallel>], iteration_bounds = array<i64: 2, 1>, scalar_prefetch = 0 : i64, scratch_operands = 0 : i64, tpu.core_type = #tpu.core_type<tc>, window_params = [{transform_indices = @transform_0, window_bounds = array<i64: 1, 64, 3456>}, {pipeline_mode = #tpu.pipeline_mode<synchronous>, transform_indices = @transform_1, window_bounds = array<i64: 3456, 128>}, {pipeline_mode = #tpu.pipeline_mode<synchronous>, transform_indices = @transform_2, window_bounds = array<i64: 1, 128>}, {transform_indices = @transform_3, window_bounds = array<i64: 1, 64, 128>}]} {
    %c0 = arith.constant 0 : index
    %c0_0 = arith.constant 0 : index
    %c0_1 = arith.constant 0 : index
    %0 = vector.load %arg2[%c0, %c0_0, %c0_1] : memref<1x64x3456xbf16, #tpu.memory_space<vmem>>, vector<1x64x3456xbf16>
    %1 = vector.shape_cast %0 : vector<1x64x3456xbf16> to vector<64x3456xbf16>
    %c0_2 = arith.constant 0 : index
    %c0_3 = arith.constant 0 : index
    %2 = vector.load %arg3[%c0_2, %c0_3] : memref<3456x128xbf16, #tpu.memory_space<vmem>>, vector<3456x128xbf16>
    %cst = arith.constant dense<0.000000e+00> : vector<64x128xf32>
    %3 = tpu.matmul %1, %2, %cst {dimension_numbers = #tpu.dot_dimension_numbers<[1], [0], [0], [1], [0, 0, 1, 1], [], []>} : vector<64x3456xbf16>, vector<3456x128xbf16>, vector<64x128xf32> -> vector<64x128xf32>
    %c0_4 = arith.constant 0 : index
    %c0_5 = arith.constant 0 : index
    %4 = vector.load %arg4[%c0_4, %c0_5] : memref<1x128xf32, #tpu.memory_space<vmem>>, vector<1x128xf32>
    %5 = vector.broadcast %4 : vector<1x128xf32> to vector<64x128xf32>
    %6 = arith.addf %3, %5 : vector<64x128xf32>
    %7 = arith.truncf %6 : vector<64x128xf32> to vector<64x128xbf16>
    %c0_6 = arith.constant 0 : index
    %c0_7 = arith.constant 0 : index
    %c0_8 = arith.constant 0 : index
    %8 = vector.load %arg5[%c0_6, %c0_7, %c0_8] : memref<1x64x128xbf16, #tpu.memory_space<vmem>>, vector<1x64x128xbf16>
    %9 = vector.shape_cast %8 : vector<1x64x128xbf16> to vector<64x128xbf16>
    %10 = vector.shape_cast %7 : vector<64x128xbf16> to vector<1x64x128xbf16>
    tpu.vector_store %arg5[%c0_6, %c0_7, %c0_8], %10 {strides = array<i32>} : memref<1x64x128xbf16, #tpu.memory_space<vmem>>, vector<1x64x128xbf16>,
    return
  }
  func.func @transform_0(%arg0: i32, %arg1: i32) -> (i32, i32, i32) {
    %c0_i32 = arith.constant 0 : i32
    %c0_i32_0 = arith.constant 0 : i32
    return %arg0, %arg1, %c0_i32 : i32, i32, i32
  }
  func.func @transform_1(%arg0: i32, %arg1: i32) -> (i32, i32) {
    %c0_i32 = arith.constant 0 : i32
    %c0_i32_0 = arith.constant 0 : i32
    %c0_i32_1 = arith.constant 0 : i32
    return %c0_i32, %c0_i32_0 : i32, i32
  }
  func.func @transform_2(%arg0: i32, %arg1: i32) -> (i32, i32) {
    %c0_i32 = arith.constant 0 : i32
    %c0_i32_0 = arith.constant 0 : i32
    %c0_i32_1 = arith.constant 0 : i32
    return %c0_i32, %c0_i32_0 : i32, i32
  }
  func.func @transform_3(%arg0: i32, %arg1: i32) -> (i32, i32, i32) {
    %c0_i32 = arith.constant 0 : i32
    %c0_i32_0 = arith.constant 0 : i32
    return %arg0, %arg1, %c0_i32 : i32, i32, i32
  }
}

module attributes {stable_mosaic.version = 11 : i64} {
  func.func @_gemm_bias_pool_kernel(%arg0: i32, %arg1: memref<1x8x3456xbf16, #tpu.memory_space<vmem>>, %arg2: memref<3456x128xbf16, #tpu.memory_space<vmem>>, %arg3: memref<1x128xf32, #tpu.memory_space<vmem>>, %arg4: memref<4x8xf32, #tpu.memory_space<vmem>>, %arg5: memref<1x4x128xf32, #tpu.memory_space<vmem>>) attributes {dimension_semantics = [#tpu.dimension_semantics<parallel>], iteration_bounds = array<i64: 2>, scalar_prefetch = 0 : i64, scratch_operands = 0 : i64, tpu.core_type = #tpu.core_type<tc>, window_params = [{transform_indices = @transform_0, window_bounds = array<i64: 1, 8, 3456>}, {pipeline_mode = #tpu.pipeline_mode<synchronous>, transform_indices = @transform_1, window_bounds = array<i64: 3456, 128>}, {pipeline_mode = #tpu.pipeline_mode<synchronous>, transform_indices = @transform_2, window_bounds = array<i64: 1, 128>}, {pipeline_mode = #tpu.pipeline_mode<synchronous>, transform_indices = @transform_3, window_bounds = array<i64: 4, 8>}, {transform_indices = @transform_4, window_bounds = array<i64: 1, 4, 128>}]} {
    %c0 = arith.constant 0 : index
    %c0_0 = arith.constant 0 : index
    %c0_1 = arith.constant 0 : index
    %0 = vector.load %arg1[%c0, %c0_0, %c0_1] : memref<1x8x3456xbf16, #tpu.memory_space<vmem>>, vector<1x8x3456xbf16>
    %1 = vector.shape_cast %0 : vector<1x8x3456xbf16> to vector<8x3456xbf16>
    %c0_2 = arith.constant 0 : index
    %c0_3 = arith.constant 0 : index
    %2 = vector.load %arg2[%c0_2, %c0_3] : memref<3456x128xbf16, #tpu.memory_space<vmem>>, vector<3456x128xbf16>
    %cst = arith.constant dense<0.000000e+00> : vector<8x128xf32>
    %3 = tpu.matmul %1, %2, %cst {dimension_numbers = #tpu.dot_dimension_numbers<[1], [0], [0], [1], [0, 0, 1, 1], [], []>} : vector<8x3456xbf16>, vector<3456x128xbf16>, vector<8x128xf32> -> vector<8x128xf32>
    %c0_4 = arith.constant 0 : index
    %c0_5 = arith.constant 0 : index
    %4 = vector.load %arg3[%c0_4, %c0_5] : memref<1x128xf32, #tpu.memory_space<vmem>>, vector<1x128xf32>
    %5 = vector.broadcast %4 : vector<1x128xf32> to vector<8x128xf32>
    %6 = arith.addf %3, %5 : vector<8x128xf32>
    %c0_6 = arith.constant 0 : index
    %c0_7 = arith.constant 0 : index
    %7 = vector.load %arg4[%c0_6, %c0_7] : memref<4x8xf32, #tpu.memory_space<vmem>>, vector<4x8xf32>
    %cst_8 = arith.constant dense<0.000000e+00> : vector<4x128xf32>
    %8 = tpu.matmul %7, %6, %cst_8 {dimension_numbers = #tpu.dot_dimension_numbers<[1], [0], [0], [1], [0, 0, 1, 1], [], []>} : vector<4x8xf32>, vector<8x128xf32>, vector<4x128xf32> -> vector<4x128xf32>
    %c0_9 = arith.constant 0 : index
    %c0_10 = arith.constant 0 : index
    %c0_11 = arith.constant 0 : index
    %9 = vector.load %arg5[%c0_9, %c0_10, %c0_11] : memref<1x4x128xf32, #tpu.memory_space<vmem>>, vector<1x4x128xf32>
    %10 = vector.shape_cast %9 : vector<1x4x128xf32> to vector<4x128xf32>
    %11 = vector.shape_cast %8 : vector<4x128xf32> to vector<1x4x128xf32>
    tpu.vector_store %arg5[%c0_9, %c0_10, %c0_11], %11 {strides = array<i32>} : memref<1x4x128xf32, #tpu.memory_space<vmem>>, vector<1x4x128xf32>,
    return
  }
  func.func @transform_0(%arg0: i32) -> (i32, i32, i32) {
    %c0_i32 = arith.constant 0 : i32
    %c0_i32_0 = arith.constant 0 : i32
    %c0_i32_1 = arith.constant 0 : i32
    return %arg0, %c0_i32, %c0_i32_0 : i32, i32, i32
  }
  func.func @transform_1(%arg0: i32) -> (i32, i32) {
    %c0_i32 = arith.constant 0 : i32
    %c0_i32_0 = arith.constant 0 : i32
    %c0_i32_1 = arith.constant 0 : i32
    return %c0_i32, %c0_i32_0 : i32, i32
  }
  func.func @transform_2(%arg0: i32) -> (i32, i32) {
    %c0_i32 = arith.constant 0 : i32
    %c0_i32_0 = arith.constant 0 : i32
    %c0_i32_1 = arith.constant 0 : i32
    return %c0_i32, %c0_i32_0 : i32, i32
  }
  func.func @transform_3(%arg0: i32) -> (i32, i32) {
    %c0_i32 = arith.constant 0 : i32
    %c0_i32_0 = arith.constant 0 : i32
    %c0_i32_1 = arith.constant 0 : i32
    return %c0_i32, %c0_i32_0 : i32, i32
  }
  func.func @transform_4(%arg0: i32) -> (i32, i32, i32) {
    %c0_i32 = arith.constant 0 : i32
    %c0_i32_0 = arith.constant 0 : i32
    %c0_i32_1 = arith.constant 0 : i32
    return %arg0, %c0_i32, %c0_i32_0 : i32, i32, i32
  }
}

</mosaic_0001>

<llo_original>
// kernel: _lambda_.3
$region0: #{_lambda_.3}
  #allocation0 [shape = 'u32[]', space=smem, size = 0x4, offset = 0x4, fixed_abs, tag = 'smem constant byte address 0x4 - core index']
  #allocation1 [shape = 'u32[144,128]{1,0:T(1,128)}', space=vmem, size = 0x12000, scoped, tag = 'internal scratch']
  %s0 = inlined_call_operand.vmem [shape: bf16[2,512,128], index: 0, kind: input, shape index: {}]
  %s1 = inlined_call_operand.vmem [shape: bf16[128,128], index: 1, kind: input, shape index: {}]
  %s2 = inlined_call_operand.vmem [shape: f32[1,128], index: 2, kind: input, shape index: {}]
  %s3 = inlined_call_operand.vmem [shape: bf16[2,512,128], index: 3, kind: output, shape index: {}]
  %s4 = sld [smem:[#allocation0]]
  $region45: #{_lambda_.3} parent=0
    _
  %s6 = ssub.s32 1, %s4
  %s7 = scalar_select 0, %s6, %s4
  loop: start=0, step=1, limit=6
  $region2: #{_lambda_.3} parent=0 // loop_pre_header
    _
  $region3: #{_lambda_.3} parent=0 // loop_header
    %s9 = sphi 0, %s13
    %p10 = scmp.ge.s32.totalorder %s9, 6
    %s16 = sphi 0, %s28
    %s17 = sphi 0, %s24
    %s18 = sphi 0, %s16
    %s19 = sphi 0, %s17
    %s20 = sphi 0, %s18
    %s21 = sphi 0, %s19
    %s33 = sphi 0, %s35
    %s36 = sphi 0, %s33
    %s37 = sphi 0, %s36
    %s53 = sphi 0, %s37
    %s57 = sphi 0, %s57
    %s59 = sphi 0, %s57
    %s60 = sphi 0, %s59
    %s74 = sphi 0, %s60
    %s78 = sphi 0, %s78
    %s80 = sphi 0, %s78
    %s81 = sphi 0, %s80
    %s95 = sphi 0, %s81
    %s103 = sphi 0, %s105
    %s106 = sphi 0, %s103
    %s107 = sphi 0, %s106
    %s123 = sphi 0, %s107
  $region4: #{_lambda_.3} parent=0 // loop_header_branch
    %12 = sbr.rel (%p10) target = $region8
  $region5: #{_lambda_.3} parent=0 // loop_body
    %s14 = ssub.s32 %s9, 1
    %s15 = ssub.s32 %s9, 2
    %s22 = sadd.s32 1, %s17
    %p23 = scmp.ge.s32.totalorder %s22, 2
    %s24 = scalar_select %p23, 0, %s22
    %s25 = sadd.s32 1, %s16
    %s26 = scalar_select %p23, %s25, %s16
    %p27 = scmp.ge.s32.totalorder %s26, 2
    %s28 = scalar_select %p27, 0, %s26
    %s29 = ssub.s32 %s16, %s28
    %s30 = ssub.s32 %s17, %s24
    %s31 = sor.u32 %s29, %s30
    %p32 = scmp.eq.s32.totalorder %s31, 0
    %s34 = sadd.s32 %s33, 1
    %s35 = scalar_select %p32, %s33, %s34
    %p38 = pneg %p32
    %p39 = scmp.eq.s32.totalorder %s9, 3
    %p40 = por %p38, %p39
    %p41 = scmp.ne.s32.totalorder %s33, %s36
    %p42 = scmp.eq.s32.totalorder %s9, 0
    %p43 = por %p41, %p42
    %p44 = scmp.ne.s32.totalorder %s33, %s36
    %p45 = scmp.eq.s32.totalorder %s14, 3
    %p46 = por %p44, %p45
    %p47 = scmp.ne.s32.totalorder %s36, %s37
    %p48 = scmp.eq.s32.totalorder %s14, 0
    %p49 = por %p47, %p48
    %p50 = scmp.ne.s32.totalorder %s36, %s37
    %p51 = scmp.eq.s32.totalorder %s15, 3
    %p52 = por %p50, %p51
    %p54 = scmp.ne.s32.totalorder %s37, %s53
    %p55 = scmp.eq.s32.totalorder %s15, 0
    %p56 = por %p54, %p55
    %s58 = sadd.s32 %s57, 1
    %p61 = scmp.eq.s32.totalorder %s9, 3
    %p62 = scmp.ne.s32.totalorder %s57, %s59
    %p63 = scmp.eq.s32.totalorder %s9, 0
    %p64 = por %p62, %p63
    %p65 = scmp.ne.s32.totalorder %s57, %s59
    %p66 = scmp.eq.s32.totalorder %s14, 3
    %p67 = por %p65, %p66
    %p68 = scmp.ne.s32.totalorder %s59, %s60
    %p69 = scmp.eq.s32.totalorder %s14, 0
    %p70 = por %p68, %p69
    %p71 = scmp.ne.s32.totalorder %s59, %s60
    %p72 = scmp.eq.s32.totalorder %s15, 3
    %p73 = por %p71, %p72
    %p75 = scmp.ne.s32.totalorder %s60, %s74
    %p76 = scmp.eq.s32.totalorder %s15, 0
    %p77 = por %p75, %p76
    %s79 = sadd.s32 %s78, 1
    %p82 = scmp.eq.s32.totalorder %s9, 3
    %p83 = scmp.ne.s32.totalorder %s78, %s80
    %p84 = scmp.eq.s32.totalorder %s9, 0
    %p85 = por %p83, %p84
    %p86 = scmp.ne.s32.totalorder %s78, %s80
    %p87 = scmp.eq.s32.totalorder %s14, 3
    %p88 = por %p86, %p87
    %p89 = scmp.ne.s32.totalorder %s80, %s81
    %p90 = scmp.eq.s32.totalorder %s14, 0
    %p91 = por %p89, %p90
    %p92 = scmp.ne.s32.totalorder %s80, %s81
    %p93 = scmp.eq.s32.totalorder %s15, 3
    %p94 = por %p92, %p93
    %p96 = scmp.ne.s32.totalorder %s81, %s95
    %p97 = scmp.eq.s32.totalorder %s15, 0
    %p98 = por %p96, %p97
    %s99 = ssub.s32 %s16, %s28
    %s100 = ssub.s32 %s17, %s24
    %s101 = sor.u32 %s99, %s100
    %p102 = scmp.eq.s32.totalorder %s101, 0
    %s104 = sadd.s32 %s103, 1
    %s105 = scalar_select %p102, %s103, %s104
    %p108 = pneg %p102
    %p109 = scmp.eq.s32.totalorder %s9, 3
    %p110 = por %p108, %p109
    %p111 = scmp.ne.s32.totalorder %s103, %s106
    %p112 = scmp.eq.s32.totalorder %s9, 0
    %p113 = por %p111, %p112
    %p114 = scmp.ne.s32.totalorder %s103, %s106
    %p115 = scmp.eq.s32.totalorder %s14, 3
    %p116 = por %p114, %p115
    %p117 = scmp.ne.s32.totalorder %s106, %s107
    %p118 = scmp.eq.s32.totalorder %s14, 0
    %p119 = por %p117, %p118
    %p120 = scmp.ne.s32.totalorder %s106, %s107
    %p121 = scmp.eq.s32.totalorder %s15, 3
    %p122 = por %p120, %p121
    %p124 = scmp.ne.s32.totalorder %s107, %s123
    %p125 = scmp.eq.s32.totalorder %s15, 0
    %p126 = por %p124, %p125
    %p127 = scmp.le.s32.totalorder 1, %s9
    %p128 = scmp.lt.s32.totalorder %s9, 5
    %p129 = pnand %p127, %p128
    %p130 = pneg %p129
    // Predicated region
    $region9: #{_lambda_.3} parent=5 // pred_check
      _
    $region10: #{_lambda_.3} parent=5 // pred_check_branch
      %132 = sbr.rel (%p129) target = $region12
    $region11: #{_lambda_.3} parent=5 // pred_region
      %s133 = ssub.s32 %s9, 1
      // Predicated region
      $region13: #{_lambda_.3} parent=11 // pred_check
        %p134 = pneg %p70
      $region14: #{_lambda_.3} parent=11 // pred_check_branch
        %136 = sbr.rel (%p134) target = $region16
      $region15: #{_lambda_.3} parent=11 // pred_region
        _
      $region16: #{_lambda_.3} parent=11 // pred_fallthru
        _
      // Predicated region
      $region17: #{_lambda_.3} parent=11 // pred_check
        %p137 = pneg %p91
      $region18: #{_lambda_.3} parent=11 // pred_check_branch
        %139 = sbr.rel (%p137) target = $region20
      $region19: #{_lambda_.3} parent=11 // pred_region
        _
      $region20: #{_lambda_.3} parent=11 // pred_fallthru
        _
    $region12: #{_lambda_.3} parent=5 // pred_fallthru
      _
    %p140 = scmp.lt.s32.totalorder %s9, 4
    // Predicated region
    $region21: #{_lambda_.3} parent=5 // pred_check
      %p141 = pneg %p140
    $region22: #{_lambda_.3} parent=5 // pred_check_branch
      %143 = sbr.rel (%p141) target = $region24
    $region23: #{_lambda_.3} parent=5 // pred_region
      // Predicated region
      $region25: #{_lambda_.3} parent=23 // pred_check
        %p144 = pneg %p43
      $region26: #{_lambda_.3} parent=23 // pred_check_branch
        %146 = sbr.rel (%p144) target = $region28
      $region27: #{_lambda_.3} parent=23 // pred_region
        %s147 = smul.u32 32, %s17
        %p148 = scmp.lt.s32.totalorder %s16, 1
        %s149 = scalar_select %p148, %s16, 1
        %p150 = scmp.lt.s32.totalorder %s147, 63
        %s151 = scalar_select %p150, %s147, 63
        %s152 = smul.addr %s149, 64
        %s153 = sadd.s32 %s151, %s152
        %s154 = smul.addr %s153, 4
        %s155 = scalar_lea.vmem %s0, %s154
        %s156 = smul.u32 32, %s17
      $region28: #{_lambda_.3} parent=23 // pred_fallthru
        _
    $region24: #{_lambda_.3} parent=5 // pred_fallthru
      _
    %p157 = scmp.le.s32.totalorder 1, %s9
    %p158 = scmp.lt.s32.totalorder %s9, 5
    %p159 = pnand %p157, %p158
    %p160 = pneg %p159
    // Predicated region
    $region29: #{_lambda_.3} parent=5 // pred_check
      _
    $region30: #{_lambda_.3} parent=5 // pred_check_branch
      %162 = sbr.rel (%p159) target = $region32
    $region31: #{_lambda_.3} parent=5 // pred_region
      %s163 = ssub.s32 %s9, 1
      %s164 = smul.u32 32, %s19
      %p165 = scmp.lt.s32.totalorder %s18, 1
      %s166 = scalar_select %p165, %s18, 1
      %p167 = scmp.lt.s32.totalorder %s164, 63
      %s168 = scalar_select %p167, %s164, 63
      %s169 = smul.addr %s166, 64
      %s170 = sadd.s32 %s168, %s169
      %s171 = smul.addr %s170, 4
      %s172 = scalar_lea.vmem %s0, %s171
      %p173 = pneg %p49
      %p174 = pneg %p46
      %p175 = pneg %p70
      %p176 = pneg %p67
      %p177 = pneg %p91
      %p178 = pneg %p88
      %p179 = pneg %p119
      %p180 = pneg %p116
      %s181 = smul.u32 32, %s19
      %p182 = scmp.lt.s32.totalorder %s18, 1
      %s183 = scalar_select %p182, %s18, 1
      %p184 = scmp.lt.s32.totalorder %s181, 63
      %s185 = scalar_select %p184, %s181, 63
      %s186 = smul.addr %s183, 64
      %s187 = sadd.s32 %s185, %s186
      %s188 = smul.addr %s187, 4
      %s189 = scalar_lea.vmem %s3, %s188
      %s190 = smul.u32 32, %s19
      %p191 = scmp.lt.s32.totalorder %s18, 1
      %s192 = scalar_select %p191, %s18, 1
      %p193 = scmp.lt.s32.totalorder %s190, 63
      %s194 = scalar_select %p193, %s190, 63
      %s195 = smul.addr %s192, 64
      %s196 = sadd.s32 %s194, %s195
      %s197 = smul.addr %s196, 4
      %s198 = scalar_lea.vmem %s0, %s197
      %s199 = smul.u32 32, %s19
      %s200 = smul.u32 32, %s19
      %p201 = scmp.lt.s32.totalorder %s18, 1
      %s202 = scalar_select %p201, %s18, 1
      %p203 = scmp.lt.s32.totalorder %s200, 63
      %s204 = scalar_select %p203, %s200, 63
      %s205 = smul.addr %s202, 64
      %s206 = sadd.s32 %s204, %s205
      %s207 = smul.addr %s206, 4
      %s208 = scalar_lea.vmem %s3, %s207
      %s209 = smul.u32 32, %s19
      %v211 = vld [vmem:[%s198] sm:$0xf]
      %v212 = vld [vmem:[%s198 + $0x4] sm:$0xf]
      %v213 = vld [vmem:[%s198 + $0x8] sm:$0xf]
      %v214 = vld [vmem:[%s198 + $0xc] sm:$0xf]
      %v215 = vld [vmem:[%s198 + $0x10] sm:$0xf]
      %v216 = vld [vmem:[%s198 + $0x14] sm:$0xf]
      %v217 = vld [vmem:[%s198 + $0x18] sm:$0xf]
      %v218 = vld [vmem:[%s198 + $0x1c] sm:$0xf]
      %v219 = vld [vmem:[%s198 + $0x20] sm:$0xf]
      %v220 = vld [vmem:[%s198 + $0x24] sm:$0xf]
      %v221 = vld [vmem:[%s198 + $0x28] sm:$0xf]
      %v222 = vld [vmem:[%s198 + $0x2c] sm:$0xf]
      %v223 = vld [vmem:[%s198 + $0x30] sm:$0xf]
      %v224 = vld [vmem:[%s198 + $0x34] sm:$0xf]
      %v225 = vld [vmem:[%s198 + $0x38] sm:$0xf]
      %v226 = vld [vmem:[%s198 + $0x3c] sm:$0xf]
      %v227 = vld [vmem:[%s198 + $0x40] sm:$0xf]
      %v228 = vld [vmem:[%s198 + $0x44] sm:$0xf]
      %v229 = vld [vmem:[%s198 + $0x48] sm:$0xf]
      %v230 = vld [vmem:[%s198 + $0x4c] sm:$0xf]
      %v231 = vld [vmem:[%s198 + $0x50] sm:$0xf]
      %v232 = vld [vmem:[%s198 + $0x54] sm:$0xf]
      %v233 = vld [vmem:[%s198 + $0x58] sm:$0xf]
      %v234 = vld [vmem:[%s198 + $0x5c] sm:$0xf]
      %v235 = vld [vmem:[%s198 + $0x60] sm:$0xf]
      %v236 = vld [vmem:[%s198 + $0x64] sm:$0xf]
      %v237 = vld [vmem:[%s198 + $0x68] sm:$0xf]
      %v238 = vld [vmem:[%s198 + $0x6c] sm:$0xf]
      %v239 = vld [vmem:[%s198 + $0x70] sm:$0xf]
      %v240 = vld [vmem:[%s198 + $0x74] sm:$0xf]
      %v241 = vld [vmem:[%s198 + $0x78] sm:$0xf]
      %v242 = vld [vmem:[%s198 + $0x7c] sm:$0xf]
      %v243 = vld [vmem:[%s1] sm:$0xf]
      %v244 = vld [vmem:[%s1 + $0x4] sm:$0xf]
      %v245 = vld [vmem:[%s1 + $0x8] sm:$0xf]
      %v246 = vld [vmem:[%s1 + $0xc] sm:$0xf]
      %v247 = vld [vmem:[%s1 + $0x10] sm:$0xf]
      %v248 = vld [vmem:[%s1 + $0x14] sm:$0xf]
      %v249 = vld [vmem:[%s1 + $0x18] sm:$0xf]
      %v250 = vld [vmem:[%s1 + $0x1c] sm:$0xf]
      %v251 = vld [vmem:[%s1 + $0x20] sm:$0xf]
      %v252 = vld [vmem:[%s1 + $0x24] sm:$0xf]
      %v253 = vld [vmem:[%s1 + $0x28] sm:$0xf]
      %v254 = vld [vmem:[%s1 + $0x2c] sm:$0xf]
      %v255 = vld [vmem:[%s1 + $0x30] sm:$0xf]
      %v256 = vld [vmem:[%s1 + $0x34] sm:$0xf]
      %v257 = vld [vmem:[%s1 + $0x38] sm:$0xf]
      %v258 = vld [vmem:[%s1 + $0x3c] sm:$0xf]
      %v259 = vld [vmem:[%s2] sm:$0x1]
      %v261 = vlaneseq
      %v262 = vshrl.u32 %v261, 7
      %v263 = vsub.s32 0, %v262
      %v264 = vrot.slane %v259, %v263
      %v298 = vunpack.c.l.b16 %v211
      %v299 = vunpack.c.l.b16 %v212
      %v300 = vunpack.c.l.b16 %v213
      %v301 = vunpack.c.l.b16 %v214
      %v302 = vunpack.c.l.b16 %v215
      %v303 = vunpack.c.l.b16 %v216
      %v304 = vunpack.c.l.b16 %v217
      %v305 = vunpack.c.l.b16 %v218
      %v306 = vunpack.c.l.b16 %v219
      %v307 = vunpack.c.l.b16 %v220
      %v308 = vunpack.c.l.b16 %v221
      %v309 = vunpack.c.l.b16 %v222
      %v310 = vunpack.c.l.b16 %v223
      %v311 = vunpack.c.l.b16 %v224
      %v312 = vunpack.c.l.b16 %v225
      %v313 = vunpack.c.l.b16 %v226
      %v314 = vunpack.c.l.b16 %v227
      %v315 = vunpack.c.l.b16 %v228
      %v316 = vunpack.c.l.b16 %v229
      %v317 = vunpack.c.l.b16 %v230
      %v318 = vunpack.c.l.b16 %v231
      %v319 = vunpack.c.l.b16 %v232
      %v320 = vunpack.c.l.b16 %v233
      %v321 = vunpack.c.l.b16 %v234
      %v322 = vunpack.c.l.b16 %v235
      %v323 = vunpack.c.l.b16 %v236
      %v324 = vunpack.c.l.b16 %v237
      %v325 = vunpack.c.l.b16 %v238
      %v326 = vunpack.c.l.b16 %v239
      %v327 = vunpack.c.l.b16 %v240
      %v328 = vunpack.c.l.b16 %v241
      %v329 = vunpack.c.l.b16 %v242
      %v330 = vpack.c.b16 %v299, %v298
      %v331 = vpack.c.b16 %v301, %v300
      %v332 = vpack.c.b16 %v303, %v302
      %v333 = vpack.c.b16 %v305, %v304
      %v334 = vpack.c.b16 %v307, %v306
      %v335 = vpack.c.b16 %v309, %v308
      %v336 = vpack.c.b16 %v311, %v310
      %v337 = vpack.c.b16 %v313, %v312
      %v338 = vpack.c.b16 %v315, %v314
      %v339 = vpack.c.b16 %v317, %v316
      %v340 = vpack.c.b16 %v319, %v318
      %v341 = vpack.c.b16 %v321, %v320
      %v342 = vpack.c.b16 %v323, %v322
      %v343 = vpack.c.b16 %v325, %v324
      %v344 = vpack.c.b16 %v327, %v326
      %v345 = vpack.c.b16 %v329, %v328
      %v378 = vunpack.c.l.b16 %v243
      %v379 = vunpack.c.l.b16 %v244
      %v380 = vunpack.c.l.b16 %v245
      %v381 = vunpack.c.l.b16 %v246
      %v382 = vunpack.c.l.b16 %v247
      %v383 = vunpack.c.l.b16 %v248
      %v384 = vunpack.c.l.b16 %v249
      %v385 = vunpack.c.l.b16 %v250
      %v386 = vunpack.c.l.b16 %v251
      %v387 = vunpack.c.l.b16 %v252
      %v388 = vunpack.c.l.b16 %v253
      %v389 = vunpack.c.l.b16 %v254
      %v390 = vunpack.c.l.b16 %v255
      %v391 = vunpack.c.l.b16 %v256
      %v392 = vunpack.c.l.b16 %v257
      %v393 = vunpack.c.l.b16 %v258
      %v394 = vpack.c.b16 %v379, %v378
      %v395 = vpack.c.b16 %v381, %v380
      %v396 = vpack.c.b16 %v383, %v382
      %v397 = vpack.c.b16 %v385, %v384
      %v398 = vpack.c.b16 %v387, %v386
      %v399 = vpack.c.b16 %v389, %v388
      %v400 = vpack.c.b16 %v391, %v390
      %v401 = vpack.c.b16 %v393, %v392
      %410 = vmatprep.subr.bf16.mxu0 0
      %411 = vmatpush1.bf16.msra.mxu0 %v394
      %412 = vmatprep.subr.bf16.mxu0 0
      %413 = vmatpush1.bf16.msra.mxu0 %v395
      %414 = vmatprep.subr.bf16.mxu0 0
      %415 = vmatpush1.bf16.msra.mxu0 %v396
      %416 = vmatprep.subr.bf16.mxu0 0
      %417 = vmatpush1.bf16.msra.mxu0 %v397
      %418 = vmatprep.subr.bf16.mxu0 0
      %419 = vmatpush1.bf16.msra.mxu0 %v398
      %420 = vmatprep.subr.bf16.mxu0 0
      %421 = vmatpush1.bf16.msra.mxu0 %v399
      %422 = vmatprep.subr.bf16.mxu0 0
      %423 = vmatpush1.bf16.msra.mxu0 %v400
      %424 = vmatprep.subr.bf16.mxu0 0
      %425 = vmatpush1.bf16.msra.mxu0 %v401
      %426 = vmatprep.subr.bf16.mxu0 0
      %427 = vmatpush1.bf16.msra.mxu0 0
      %428 = vmatprep.subr.bf16.mxu0 0
      %429 = vmatpush1.bf16.msra.mxu0 0
      %430 = vmatprep.subr.bf16.mxu0 0
      %431 = vmatpush1.bf16.msra.mxu0 0
      %432 = vmatprep.subr.bf16.mxu0 0
      %433 = vmatpush1.bf16.msra.mxu0 0
      %434 = vmatprep.subr.bf16.mxu0 0
      %435 = vmatpush1.bf16.msra.mxu0 0
      %436 = vmatprep.subr.bf16.mxu0 0
      %437 = vmatpush1.bf16.msra.mxu0 0
      %438 = vmatprep.subr.bf16.mxu0 0
      %439 = vmatpush1.bf16.msra.mxu0 0
      %440 = vmatprep.subr.bf16.mxu0 0
      %441 = vmatpush1.bf16.msra.mxu0 0
      %442 = vmatprep.mubr.bf16.mxu0 0
      %443 = vmatmul.mubr.bf16.gmra.mrb[0].mxu0 %v330
      %v444 = vpop.f32.mrb[0].mxu0
      %v445 = vadd.f32 %v264, %v444
      %v446 = vpop.f32.mrb[0].mxu0
      %v447 = vpop.f32.mrb[0].mxu0
      %v448 = vadd.f32 %v264, %v447
      %v449 = vpop.f32.mrb[0].mxu0
      %450 = vmatprep.mubr.bf16.mxu0 0
      %451 = vmatmul.mubr.bf16.gmra.mrb[0].mxu0 %v331
      %v452 = vpop.f32.mrb[0].mxu0
      %v453 = vadd.f32 %v264, %v452
      %v454 = vpop.f32.mrb[0].mxu0
      %v455 = vpop.f32.mrb[0].mxu0
      %v456 = vadd.f32 %v264, %v455
      %v457 = vpop.f32.mrb[0].mxu0
      %458 = vmatprep.mubr.bf16.mxu0 0
      %459 = vmatmul.mubr.bf16.gmra.mrb[0].mxu0 %v332
      %v460 = vpop.f32.mrb[0].mxu0
      %v461 = vadd.f32 %v264, %v460
      %v462 = vpop.f32.mrb[0].mxu0
      %v463 = vpop.f32.mrb[0].mxu0
      %v464 = vadd.f32 %v264, %v463
      %v465 = vpop.f32.mrb[0].mxu0
      %466 = vmatprep.mubr.bf16.mxu0 0
      %467 = vmatmul.mubr.bf16.gmra.mrb[0].mxu0 %v333
      %v468 = vpop.f32.mrb[0].mxu0
      %v469 = vadd.f32 %v264, %v468
      %v470 = vpop.f32.mrb[0].mxu0
      %v471 = vpop.f32.mrb[0].mxu0
      %v472 = vadd.f32 %v264, %v471
      %v473 = vpop.f32.mrb[0].mxu0
      %474 = vmatprep.mubr.bf16.mxu0 0
      %475 = vmatmul.mubr.bf16.gmra.mrb[0].mxu0 %v334
      %v476 = vpop.f32.mrb[0].mxu0
      %v477 = vadd.f32 %v264, %v476
      %v478 = vpop.f32.mrb[0].mxu0
      %v479 = vpop.f32.mrb[0].mxu0
      %v480 = vadd.f32 %v264, %v479
      %v481 = vpop.f32.mrb[0].mxu0
      %482 = vmatprep.mubr.bf16.mxu0 0
      %483 = vmatmul.mubr.bf16.gmra.mrb[0].mxu0 %v335
      %v484 = vpop.f32.mrb[0].mxu0
      %v485 = vadd.f32 %v264, %v484
      %v486 = vpop.f32.mrb[0].mxu0
      %v487 = vpop.f32.mrb[0].mxu0
      %v488 = vadd.f32 %v264, %v487
      %v489 = vpop.f32.mrb[0].mxu0
      %490 = vmatprep.mubr.bf16.mxu0 0
      %491 = vmatmul.mubr.bf16.gmra.mrb[0].mxu0 %v336
      %v492 = vpop.f32.mrb[0].mxu0
      %v493 = vadd.f32 %v264, %v492
      %v494 = vpop.f32.mrb[0].mxu0
      %v495 = vpop.f32.mrb[0].mxu0
      %v496 = vadd.f32 %v264, %v495
      %v497 = vpop.f32.mrb[0].mxu0
      %498 = vmatprep.mubr.bf16.mxu0 0
      %499 = vmatmul.mubr.bf16.gmra.mrb[0].mxu0 %v337
      %v500 = vpop.f32.mrb[0].mxu0
      %v501 = vadd.f32 %v264, %v500
      %v502 = vpop.f32.mrb[0].mxu0
      %v503 = vpop.f32.mrb[0].mxu0
      %v504 = vadd.f32 %v264, %v503
      %v505 = vpop.f32.mrb[0].mxu0
      %506 = vmatprep.mubr.bf16.mxu0 0
      %507 = vmatmul.mubr.bf16.gmra.mrb[0].mxu0 %v338
      %v508 = vpop.f32.mrb[0].mxu0
      %v509 = vadd.f32 %v264, %v508
      %v510 = vpop.f32.mrb[0].mxu0
      %v511 = vpop.f32.mrb[0].mxu0
      %v512 = vadd.f32 %v264, %v511
      %v513 = vpop.f32.mrb[0].mxu0
      %514 = vmatprep.mubr.bf16.mxu0 0
      %515 = vmatmul.mubr.bf16.gmra.mrb[0].mxu0 %v339
      %v516 = vpop.f32.mrb[0].mxu0
      %v517 = vadd.f32 %v264, %v516
      %v518 = vpop.f32.mrb[0].mxu0
      %v519 = vpop.f32.mrb[0].mxu0
      %v520 = vadd.f32 %v264, %v519
      %v521 = vpop.f32.mrb[0].mxu0
      %522 = vmatprep.mubr.bf16.mxu0 0
      %523 = vmatmul.mubr.bf16.gmra.mrb[0].mxu0 %v340
      %v524 = vpop.f32.mrb[0].mxu0
      %v525 = vadd.f32 %v264, %v524
      %v526 = vpop.f32.mrb[0].mxu0
      %v527 = vpop.f32.mrb[0].mxu0
      %v528 = vadd.f32 %v264, %v527
      %v529 = vpop.f32.mrb[0].mxu0
      %530 = vmatprep.mubr.bf16.mxu0 0
      %531 = vmatmul.mubr.bf16.gmra.mrb[0].mxu0 %v341
      %v532 = vpop.f32.mrb[0].mxu0
      %v533 = vadd.f32 %v264, %v532
      %v534 = vpop.f32.mrb[0].mxu0
      %v535 = vpop.f32.mrb[0].mxu0
      %v536 = vadd.f32 %v264, %v535
      %v537 = vpop.f32.mrb[0].mxu0
      %538 = vmatprep.mubr.bf16.mxu0 0
      %539 = vmatmul.mubr.bf16.gmra.mrb[0].mxu0 %v342
      %v540 = vpop.f32.mrb[0].mxu0
      %v541 = vadd.f32 %v264, %v540
      %v542 = vpop.f32.mrb[0].mxu0
      %v543 = vpop.f32.mrb[0].mxu0
      %v544 = vadd.f32 %v264, %v543
      %v545 = vpop.f32.mrb[0].mxu0
      %546 = vmatprep.mubr.bf16.mxu0 0
      %547 = vmatmul.mubr.bf16.gmra.mrb[0].mxu0 %v343
      %v548 = vpop.f32.mrb[0].mxu0
      %v549 = vadd.f32 %v264, %v548
      %v550 = vpop.f32.mrb[0].mxu0
      %v551 = vpop.f32.mrb[0].mxu0
      %v552 = vadd.f32 %v264, %v551
      %v553 = vpop.f32.mrb[0].mxu0
      %554 = vmatprep.mubr.bf16.mxu0 0
      %555 = vmatmul.mubr.bf16.gmra.mrb[0].mxu0 %v344
      %v556 = vpop.f32.mrb[0].mxu0
      %v557 = vadd.f32 %v264, %v556
      %v558 = vpop.f32.mrb[0].mxu0
      %v559 = vpop.f32.mrb[0].mxu0
      %v560 = vadd.f32 %v264, %v559
      %v561 = vpop.f32.mrb[0].mxu0
      %562 = vmatprep.mubr.bf16.mxu0 0
      %563 = vmatmul.mubr.bf16.gmra.mrb[0].mxu0 %v345
      %v564 = vpop.f32.mrb[0].mxu0
      %v565 = vadd.f32 %v264, %v564
      %v566 = vpop.f32.mrb[0].mxu0
      %v567 = vpop.f32.mrb[0].mxu0
      %v568 = vadd.f32 %v264, %v567
      %v569 = vpop.f32.mrb[0].mxu0
      %570 = vdwg.mxu0
      %v571 = vpack.c.bf16 %v448, %v445
      %v572 = vpack.c.bf16 %v456, %v453
      %v573 = vpack.c.bf16 %v464, %v461
      %v574 = vpack.c.bf16 %v472, %v469
      %v575 = vpack.c.bf16 %v480, %v477
      %v576 = vpack.c.bf16 %v488, %v485
      %v577 = vpack.c.bf16 %v496, %v493
      %v578 = vpack.c.bf16 %v504, %v501
      %v579 = vpack.c.bf16 %v512, %v509
      %v580 = vpack.c.bf16 %v520, %v517
      %v581 = vpack.c.bf16 %v528, %v525
      %v582 = vpack.c.bf16 %v536, %v533
      %v583 = vpack.c.bf16 %v544, %v541
      %v584 = vpack.c.bf16 %v552, %v549
      %v585 = vpack.c.bf16 %v560, %v557
      %v586 = vpack.c.bf16 %v568, %v565
      %v603 = vunpack.c.l.b16 %v571
      %v604 = vunpack.c.h.b16 %v571
      %v605 = vunpack.c.l.b16 %v572
      %v606 = vunpack.c.h.b16 %v572
      %v607 = vunpack.c.l.b16 %v573
      %v608 = vunpack.c.h.b16 %v573
      %v609 = vunpack.c.l.b16 %v574
      %v610 = vunpack.c.h.b16 %v574
      %v611 = vunpack.c.l.b16 %v575
      %v612 = vunpack.c.h.b16 %v575
      %v613 = vunpack.c.l.b16 %v576
      %v614 = vunpack.c.h.b16 %v576
      %v615 = vunpack.c.l.b16 %v577
      %v616 = vunpack.c.h.b16 %v577
      %v617 = vunpack.c.l.b16 %v578
      %v618 = vunpack.c.h.b16 %v578
      %v619 = vunpack.c.l.b16 %v579
      %v620 = vunpack.c.h.b16 %v579
      %v621 = vunpack.c.l.b16 %v580
      %v622 = vunpack.c.h.b16 %v580
      %v623 = vunpack.c.l.b16 %v581
      %v624 = vunpack.c.h.b16 %v581
      %v625 = vunpack.c.l.b16 %v582
      %v626 = vunpack.c.h.b16 %v582
      %v627 = vunpack.c.l.b16 %v583
      %v628 = vunpack.c.h.b16 %v583
      %v629 = vunpack.c.l.b16 %v584
      %v630 = vunpack.c.h.b16 %v584
      %v631 = vunpack.c.l.b16 %v585
      %v632 = vunpack.c.h.b16 %v585
      %v633 = vunpack.c.l.b16 %v586
      %v634 = vunpack.c.h.b16 %v586
      %v635 = vpack.c.b16 %v603, %v603
      %v636 = vpack.c.b16 %v604, %v604
      %v637 = vpack.c.b16 %v605, %v605
      %v638 = vpack.c.b16 %v606, %v606
      %v639 = vpack.c.b16 %v607, %v607
      %v640 = vpack.c.b16 %v608, %v608
      %v641 = vpack.c.b16 %v609, %v609
      %v642 = vpack.c.b16 %v610, %v610
      %v643 = vpack.c.b16 %v611, %v611
      %v644 = vpack.c.b16 %v612, %v612
      %v645 = vpack.c.b16 %v613, %v613
      %v646 = vpack.c.b16 %v614, %v614
      %v647 = vpack.c.b16 %v615, %v615
      %v648 = vpack.c.b16 %v616, %v616
      %v649 = vpack.c.b16 %v617, %v617
      %v650 = vpack.c.b16 %v618, %v618
      %v651 = vpack.c.b16 %v619, %v619
      %v652 = vpack.c.b16 %v620, %v620
      %v653 = vpack.c.b16 %v621, %v621
      %v654 = vpack.c.b16 %v622, %v622
      %v655 = vpack.c.b16 %v623, %v623
      %v656 = vpack.c.b16 %v624, %v624
      %v657 = vpack.c.b16 %v625, %v625
      %v658 = vpack.c.b16 %v626, %v626
      %v659 = vpack.c.b16 %v627, %v627
      %v660 = vpack.c.b16 %v628, %v628
      %v661 = vpack.c.b16 %v629, %v629
      %v662 = vpack.c.b16 %v630, %v630
      %v663 = vpack.c.b16 %v631, %v631
      %v664 = vpack.c.b16 %v632, %v632
      %v665 = vpack.c.b16 %v633, %v633
      %v666 = vpack.c.b16 %v634, %v634
      %699 = vst [vmem:[%s208] sm:$0xf] %v635
      %700 = vst [vmem:[%s208 + $0x4] sm:$0xf] %v636
      %701 = vst [vmem:[%s208 + $0x8] sm:$0xf] %v637
      %702 = vst [vmem:[%s208 + $0xc] sm:$0xf] %v638
      %703 = vst [vmem:[%s208 + $0x10] sm:$0xf] %v639
      %704 = vst [vmem:[%s208 + $0x14] sm:$0xf] %v640
      %705 = vst [vmem:[%s208 + $0x18] sm:$0xf] %v641
      %706 = vst [vmem:[%s208 + $0x1c] sm:$0xf] %v642
      %707 = vst [vmem:[%s208 + $0x20] sm:$0xf] %v643
      %708 = vst [vmem:[%s208 + $0x24] sm:$0xf] %v644
      %709 = vst [vmem:[%s208 + $0x28] sm:$0xf] %v645
      %710 = vst [vmem:[%s208 + $0x2c] sm:$0xf] %v646
      %711 = vst [vmem:[%s208 + $0x30] sm:$0xf] %v647
      %712 = vst [vmem:[%s208 + $0x34] sm:$0xf] %v648
      %713 = vst [vmem:[%s208 + $0x38] sm:$0xf] %v649
      %714 = vst [vmem:[%s208 + $0x3c] sm:$0xf] %v650
      %715 = vst [vmem:[%s208 + $0x40] sm:$0xf] %v651
      %716 = vst [vmem:[%s208 + $0x44] sm:$0xf] %v652
      %717 = vst [vmem:[%s208 + $0x48] sm:$0xf] %v653
      %718 = vst [vmem:[%s208 + $0x4c] sm:$0xf] %v654
      %719 = vst [vmem:[%s208 + $0x50] sm:$0xf] %v655
      %720 = vst [vmem:[%s208 + $0x54] sm:$0xf] %v656
      %721 = vst [vmem:[%s208 + $0x58] sm:$0xf] %v657
      %722 = vst [vmem:[%s208 + $0x5c] sm:$0xf] %v658
      %723 = vst [vmem:[%s208 + $0x60] sm:$0xf] %v659
      %724 = vst [vmem:[%s208 + $0x64] sm:$0xf] %v660
      %725 = vst [vmem:[%s208 + $0x68] sm:$0xf] %v661
      %726 = vst [vmem:[%s208 + $0x6c] sm:$0xf] %v662
      %727 = vst [vmem:[%s208 + $0x70] sm:$0xf] %v663
      %728 = vst [vmem:[%s208 + $0x74] sm:$0xf] %v664
      %729 = vst [vmem:[%s208 + $0x78] sm:$0xf] %v665
      %730 = vst [vmem:[%s208 + $0x7c] sm:$0xf] %v666
      %s731 = smul.u32 32, %s19
      %p732 = scmp.lt.s32.totalorder %s18, 1
      %s733 = scalar_select %p732, %s18, 1
      %p734 = scmp.lt.s32.totalorder %s731, 63
      %s735 = scalar_select %p734, %s731, 63
      %s736 = smul.addr %s733, 64
      %s737 = sadd.s32 %s735, %s736
      %s738 = smul.addr %s737, 4
      %s739 = scalar_lea.vmem %s3, %s738
      // Predicated region
      $region33: #{_lambda_.3} parent=31 // pred_check
        %p740 = pneg %p116
      $region34: #{_lambda_.3} parent=31 // pred_check_branch
        %742 = sbr.rel (%p740) target = $region36
      $region35: #{_lambda_.3} parent=31 // pred_region
        %s743 = smul.u32 32, %s19
      $region36: #{_lambda_.3} parent=31 // pred_fallthru
        _
    $region32: #{_lambda_.3} parent=5 // pred_fallthru
      _
    %p744 = scmp.le.s32.totalorder 2, %s9
    // Predicated region
    $region37: #{_lambda_.3} parent=5 // pred_check
      %p745 = pneg %p744
    $region38: #{_lambda_.3} parent=5 // pred_check_branch
      %747 = sbr.rel (%p745) target = $region40
    $region39: #{_lambda_.3} parent=5 // pred_region
      %s748 = ssub.s32 %s9, 2
      // Predicated region
      $region41: #{_lambda_.3} parent=39 // pred_check
        %p749 = pneg %p122
      $region42: #{_lambda_.3} parent=39 // pred_check_branch
        %751 = sbr.rel (%p749) target = $region44
      $region43: #{_lambda_.3} parent=39 // pred_region
        %s752 = smul.u32 32, %s21
        %p753 = scmp.lt.s32.totalorder %s20, 1
        %s754 = scalar_select %p753, %s20, 1
        %p755 = scmp.lt.s32.totalorder %s752, 63
        %s756 = scalar_select %p755, %s752, 63
        %s757 = smul.addr %s754, 64
        %s758 = sadd.s32 %s756, %s757
        %s759 = smul.addr %s758, 4
        %s760 = scalar_lea.vmem %s3, %s759
      $region44: #{_lambda_.3} parent=39 // pred_fallthru
        _
    $region40: #{_lambda_.3} parent=5 // pred_fallthru
      _
  $region6: #{_lambda_.3} parent=0 // loop_footer
    %s13 = sadd.s32 1, %s9
  $region7: #{_lambda_.3} parent=0 // loop_footer_branch
    %8 = sbr.rel target = $region3
  $region8: #{_lambda_.3} parent=0 // loop_exit
    _

// kernel: _lambda_.4
$region0: #{_lambda_.4}
  #allocation0 [shape = 'u32[]', space=smem, size = 0x4, offset = 0x4, fixed_abs, tag = 'smem constant byte address 0x4 - core index']
  #allocation1 [shape = 'u32[144,128]{1,0:T(1,128)}', space=vmem, size = 0x12000, scoped, tag = 'internal scratch']
  %s0 = inlined_call_operand.vmem [shape: bf16[2,64,3456], index: 0, kind: input, shape index: {}]
  %s1 = inlined_call_operand.vmem [shape: bf16[3456,128], index: 1, kind: input, shape index: {}]
  %s2 = inlined_call_operand.vmem [shape: f32[1,128], index: 2, kind: input, shape index: {}]
  %s3 = inlined_call_operand.vmem [shape: bf16[2,64,128], index: 3, kind: output, shape index: {}]
  %s4 = sld [smem:[#allocation0]]
  $region45: #{_lambda_.4} parent=0
    _
  %s6 = ssub.s32 1, %s4
  %s7 = scalar_select 0, %s6, %s4
  loop: start=0, step=1, limit=4
  $region2: #{_lambda_.4} parent=0 // loop_pre_header
    _
  $region3: #{_lambda_.4} parent=0 // loop_header
    %s9 = sphi 0, %s13
    %p10 = scmp.ge.s32.totalorder %s9, 4
    %s16 = sphi 0, %s28
    %s17 = sphi 0, %s24
    %s18 = sphi 0, %s16
    %s19 = sphi 0, %s17
    %s20 = sphi 0, %s18
    %s21 = sphi 0, %s19
    %s33 = sphi 0, %s35
    %s36 = sphi 0, %s33
    %s37 = sphi 0, %s36
    %s53 = sphi 0, %s37
    %s57 = sphi 0, %s57
    %s59 = sphi 0, %s57
    %s60 = sphi 0, %s59
    %s74 = sphi 0, %s60
    %s78 = sphi 0, %s78
    %s80 = sphi 0, %s78
    %s81 = sphi 0, %s80
    %s95 = sphi 0, %s81
    %s103 = sphi 0, %s105
    %s106 = sphi 0, %s103
    %s107 = sphi 0, %s106
    %s123 = sphi 0, %s107
  $region4: #{_lambda_.4} parent=0 // loop_header_branch
    %12 = sbr.rel (%p10) target = $region8
  $region5: #{_lambda_.4} parent=0 // loop_body
    %s14 = ssub.s32 %s9, 1
    %s15 = ssub.s32 %s9, 2
    %s22 = sadd.s32 1, %s17
    %p23 = scmp.ge.s32.totalorder %s22, 1
    %s24 = scalar_select %p23, 0, %s22
    %s25 = sadd.s32 1, %s16
    %s26 = scalar_select %p23, %s25, %s16
    %p27 = scmp.ge.s32.totalorder %s26, 2
    %s28 = scalar_select %p27, 0, %s26
    %s29 = ssub.s32 %s16, %s28
    %s30 = ssub.s32 %s17, %s24
    %s31 = sor.u32 %s29, %s30
    %p32 = scmp.eq.s32.totalorder %s31, 0
    %s34 = sadd.s32 %s33, 1
    %s35 = scalar_select %p32, %s33, %s34
    %p38 = pneg %p32
    %p39 = scmp.eq.s32.totalorder %s9, 1
    %p40 = por %p38, %p39
    %p41 = scmp.ne.s32.totalorder %s33, %s36
    %p42 = scmp.eq.s32.totalorder %s9, 0
    %p43 = por %p41, %p42
    %p44 = scmp.ne.s32.totalorder %s33, %s36
    %p45 = scmp.eq.s32.totalorder %s14, 1
    %p46 = por %p44, %p45
    %p47 = scmp.ne.s32.totalorder %s36, %s37
    %p48 = scmp.eq.s32.totalorder %s14, 0
    %p49 = por %p47, %p48
    %p50 = scmp.ne.s32.totalorder %s36, %s37
    %p51 = scmp.eq.s32.totalorder %s15, 1
    %p52 = por %p50, %p51
    %p54 = scmp.ne.s32.totalorder %s37, %s53
    %p55 = scmp.eq.s32.totalorder %s15, 0
    %p56 = por %p54, %p55
    %s58 = sadd.s32 %s57, 1
    %p61 = scmp.eq.s32.totalorder %s9, 1
    %p62 = scmp.ne.s32.totalorder %s57, %s59
    %p63 = scmp.eq.s32.totalorder %s9, 0
    %p64 = por %p62, %p63
    %p65 = scmp.ne.s32.totalorder %s57, %s59
    %p66 = scmp.eq.s32.totalorder %s14, 1
    %p67 = por %p65, %p66
    %p68 = scmp.ne.s32.totalorder %s59, %s60
    %p69 = scmp.eq.s32.totalorder %s14, 0
    %p70 = por %p68, %p69
    %p71 = scmp.ne.s32.totalorder %s59, %s60
    %p72 = scmp.eq.s32.totalorder %s15, 1
    %p73 = por %p71, %p72
    %p75 = scmp.ne.s32.totalorder %s60, %s74
    %p76 = scmp.eq.s32.totalorder %s15, 0
    %p77 = por %p75, %p76
    %s79 = sadd.s32 %s78, 1
    %p82 = scmp.eq.s32.totalorder %s9, 1
    %p83 = scmp.ne.s32.totalorder %s78, %s80
    %p84 = scmp.eq.s32.totalorder %s9, 0
    %p85 = por %p83, %p84
    %p86 = scmp.ne.s32.totalorder %s78, %s80
    %p87 = scmp.eq.s32.totalorder %s14, 1
    %p88 = por %p86, %p87
    %p89 = scmp.ne.s32.totalorder %s80, %s81
    %p90 = scmp.eq.s32.totalorder %s14, 0
    %p91 = por %p89, %p90
    %p92 = scmp.ne.s32.totalorder %s80, %s81
    %p93 = scmp.eq.s32.totalorder %s15, 1
    %p94 = por %p92, %p93
    %p96 = scmp.ne.s32.totalorder %s81, %s95
    %p97 = scmp.eq.s32.totalorder %s15, 0
    %p98 = por %p96, %p97
    %s99 = ssub.s32 %s16, %s28
    %s100 = ssub.s32 %s17, %s24
    %s101 = sor.u32 %s99, %s100
    %p102 = scmp.eq.s32.totalorder %s101, 0
    %s104 = sadd.s32 %s103, 1
    %s105 = scalar_select %p102, %s103, %s104
    %p108 = pneg %p102
    %p109 = scmp.eq.s32.totalorder %s9, 1
    %p110 = por %p108, %p109
    %p111 = scmp.ne.s32.totalorder %s103, %s106
    %p112 = scmp.eq.s32.totalorder %s9, 0
    %p113 = por %p111, %p112
    %p114 = scmp.ne.s32.totalorder %s103, %s106
    %p115 = scmp.eq.s32.totalorder %s14, 1
    %p116 = por %p114, %p115
    %p117 = scmp.ne.s32.totalorder %s106, %s107
    %p118 = scmp.eq.s32.totalorder %s14, 0
    %p119 = por %p117, %p118
    %p120 = scmp.ne.s32.totalorder %s106, %s107
    %p121 = scmp.eq.s32.totalorder %s15, 1
    %p122 = por %p120, %p121
    %p124 = scmp.ne.s32.totalorder %s107, %s123
    %p125 = scmp.eq.s32.totalorder %s15, 0
    %p126 = por %p124, %p125
    %p127 = scmp.le.s32.totalorder 1, %s9
    %p128 = scmp.lt.s32.totalorder %s9, 3
    %p129 = pnand %p127, %p128
    %p130 = pneg %p129
    // Predicated region
    $region9: #{_lambda_.4} parent=5 // pred_check
      _
    $region10: #{_lambda_.4} parent=5 // pred_check_branch
      %132 = sbr.rel (%p129) target = $region12
    $region11: #{_lambda_.4} parent=5 // pred_region
      %s133 = ssub.s32 %s9, 1
      // Predicated region
      $region13: #{_lambda_.4} parent=11 // pred_check
        %p134 = pneg %p70
      $region14: #{_lambda_.4} parent=11 // pred_check_branch
        %136 = sbr.rel (%p134) target = $region16
      $region15: #{_lambda_.4} parent=11 // pred_region
        _
      $region16: #{_lambda_.4} parent=11 // pred_fallthru
        _
      // Predicated region
      $region17: #{_lambda_.4} parent=11 // pred_check
        %p137 = pneg %p91
      $region18: #{_lambda_.4} parent=11 // pred_check_branch
        %139 = sbr.rel (%p137) target = $region20
      $region19: #{_lambda_.4} parent=11 // pred_region
        _
      $region20: #{_lambda_.4} parent=11 // pred_fallthru
        _
    $region12: #{_lambda_.4} parent=5 // pred_fallthru
      _
    %p140 = scmp.lt.s32.totalorder %s9, 2
    // Predicated region
    $region21: #{_lambda_.4} parent=5 // pred_check
      %p141 = pneg %p140
    $region22: #{_lambda_.4} parent=5 // pred_check_branch
      %143 = sbr.rel (%p141) target = $region24
    $region23: #{_lambda_.4} parent=5 // pred_region
      // Predicated region
      $region25: #{_lambda_.4} parent=23 // pred_check
        %p144 = pneg %p43
      $region26: #{_lambda_.4} parent=23 // pred_check_branch
        %146 = sbr.rel (%p144) target = $region28
      $region27: #{_lambda_.4} parent=23 // pred_region
        %s147 = smul.u32 8, %s17
        %p148 = scmp.lt.s32.totalorder %s16, 1
        %s149 = scalar_select %p148, %s16, 1
        %p150 = scmp.lt.s32.totalorder %s147, 7
        %s151 = scalar_select %p150, %s147, 7
        %s152 = smul.addr %s151, 27
        %s153 = smul.addr %s149, 216
        %s154 = sadd.s32 %s152, %s153
        %s155 = smul.addr %s154, 4
        %s156 = scalar_lea.vmem %s0, %s155
        %s157 = smul.u32 8, %s17
      $region28: #{_lambda_.4} parent=23 // pred_fallthru
        _
    $region24: #{_lambda_.4} parent=5 // pred_fallthru
      _
    %p158 = scmp.le.s32.totalorder 1, %s9
    %p159 = scmp.lt.s32.totalorder %s9, 3
    %p160 = pnand %p158, %p159
    %p161 = pneg %p160
    // Predicated region
    $region29: #{_lambda_.4} parent=5 // pred_check
      _
    $region30: #{_lambda_.4} parent=5 // pred_check_branch
      %163 = sbr.rel (%p160) target = $region32
    $region31: #{_lambda_.4} parent=5 // pred_region
      %s164 = ssub.s32 %s9, 1
      %s165 = smul.u32 8, %s19
      %p166 = scmp.lt.s32.totalorder %s18, 1
      %s167 = scalar_select %p166, %s18, 1
      %p168 = scmp.lt.s32.totalorder %s165, 7
      %s169 = scalar_select %p168, %s165, 7
      %s170 = smul.addr %s169, 27
      %s171 = smul.addr %s167, 216
      %s172 = sadd.s32 %s170, %s171
      %s173 = smul.addr %s172, 4
      %s174 = scalar_lea.vmem %s0, %s173
      %p175 = pneg %p49
      %p176 = pneg %p46
      %p177 = pneg %p70
      %p178 = pneg %p67
      %p179 = pneg %p91
      %p180 = pneg %p88
      %p181 = pneg %p119
      %p182 = pneg %p116
      %s183 = smul.u32 8, %s19
      %p184 = scmp.lt.s32.totalorder %s18, 1
      %s185 = scalar_select %p184, %s18, 1
      %p186 = scmp.lt.s32.totalorder %s183, 7
      %s187 = scalar_select %p186, %s183, 7
      %s188 = smul.addr %s185, 8
      %s189 = sadd.s32 %s187, %s188
      %s190 = smul.addr %s189, 4
      %s191 = scalar_lea.vmem %s3, %s190
      %s192 = smul.u32 8, %s19
      %p193 = scmp.lt.s32.totalorder %s18, 1
      %s194 = scalar_select %p193, %s18, 1
      %p195 = scmp.lt.s32.totalorder %s192, 7
      %s196 = scalar_select %p195, %s192, 7
      %s197 = smul.addr %s196, 27
      %s198 = smul.addr %s194, 216
      %s199 = sadd.s32 %s197, %s198
      %s200 = smul.addr %s199, 4
      %s201 = scalar_lea.vmem %s0, %s200
      %s202 = smul.u32 8, %s19
      %s203 = smul.u32 8, %s19
      %p204 = scmp.lt.s32.totalorder %s18, 1
      %s205 = scalar_select %p204, %s18, 1
      %p206 = scmp.lt.s32.totalorder %s203, 7
      %s207 = scalar_select %p206, %s203, 7
      %s208 = smul.addr %s205, 8
      %s209 = sadd.s32 %s207, %s208
      %s210 = smul.addr %s209, 4
      %s211 = scalar_lea.vmem %s3, %s210
      %s212 = smul.u32 8, %s19
      %v214 = vld [vmem:[%s201] sm:$0xff]
      %v215 = vld [vmem:[%s201 + $0x8] sm:$0xff]
      %v216 = vld [vmem:[%s201 + $0x10] sm:$0xff]
      %v217 = vld [vmem:[%s201 + $0x18] sm:$0xff]
      %v218 = vld [vmem:[%s201 + $0x20] sm:$0xff]
      %v219 = vld [vmem:[%s201 + $0x28] sm:$0xff]
      %v220 = vld [vmem:[%s201 + $0x30] sm:$0xff]
      %v221 = vld [vmem:[%s201 + $0x38] sm:$0xff]
      %v222 = vld [vmem:[%s201 + $0x40] sm:$0xff]
      %v223 = vld [vmem:[%s201 + $0x48] sm:$0xff]
      %v224 = vld [vmem:[%s201 + $0x50] sm:$0xff]
      %v225 = vld [vmem:[%s201 + $0x58] sm:$0xff]
      %v226 = vld [vmem:[%s201 + $0x60] sm:$0xff]
      %v227 = vld [vmem:[%s201 + $0x68] sm:$0xf]
      %v228 = vld [vmem:[%s201 + $0x6c] sm:$0xff]
      %v229 = vld [vmem:[%s201 + $0x74] sm:$0xff]
      %v230 = vld [vmem:[%s201 + $0x7c] sm:$0xff]
      %v231 = vld [vmem:[%s201 + $0x84] sm:$0xff]
      %v232 = vld [vmem:[%s201 + $0x8c] sm:$0xff]
      %v233 = vld [vmem:[%s201 + $0x94] sm:$0xff]
      %v234 = vld [vmem:[%s201 + $0x9c] sm:$0xff]
      %v235 = vld [vmem:[%s201 + $0xa4] sm:$0xff]
      %v236 = vld [vmem:[%s201 + $0xac] sm:$0xff]
      %v237 = vld [vmem:[%s201 + $0xb4] sm:$0xff]
      %v238 = vld [vmem:[%s201 + $0xbc] sm:$0xff]
      %v239 = vld [vmem:[%s201 + $0xc4] sm:$0xff]
      %v240 = vld [vmem:[%s201 + $0xcc] sm:$0xff]
      %v241 = vld [vmem:[%s201 + $0xd4] sm:$0xf]
      %v242 = vld [vmem:[%s201 + $0xd8] sm:$0xff]
      %v243 = vld [vmem:[%s201 + $0xe0] sm:$0xff]
      %v244 = vld [vmem:[%s201 + $0xe8] sm:$0xff]
      %v245 = vld [vmem:[%s201 + $0xf0] sm:$0xff]
      %v246 = vld [vmem:[%s201 + $0xf8] sm:$0xff]
      %v247 = vld [vmem:[%s201 + $0x100] sm:$0xff]
      %v248 = vld [vmem:[%s201 + $0x108] sm:$0xff]
      %v249 = vld [vmem:[%s201 + $0x110] sm:$0xff]
      %v250 = vld [vmem:[%s201 + $0x118] sm:$0xff]
      %v251 = vld [vmem:[%s201 + $0x120] sm:$0xff]
      %v252 = vld [vmem:[%s201 + $0x128] sm:$0xff]
      %v253 = vld [vmem:[%s201 + $0x130] sm:$0xff]
      %v254 = vld [vmem:[%s201 + $0x138] sm:$0xff]
      %v255 = vld [vmem:[%s201 + $0x140] sm:$0xf]
      %v256 = vld [vmem:[%s201 + $0x144] sm:$0xff]
      %v257 = vld [vmem:[%s201 + $0x14c] sm:$0xff]
      %v258 = vld [vmem:[%s201 + $0x154] sm:$0xff]
      %v259 = vld [vmem:[%s201 + $0x15c] sm:$0xff]
      %v260 = vld [vmem:[%s201 + $0x164] sm:$0xff]
      %v261 = vld [vmem:[%s201 + $0x16c] sm:$0xff]
      %v262 = vld [vmem:[%s201 + $0x174] sm:$0xff]
      %v263 = vld [vmem:[%s201 + $0x17c] sm:$0xff]
      %v264 = vld [vmem:[%s201 + $0x184] sm:$0xff]
      %v265 = vld [vmem:[%s201 + $0x18c] sm:$0xff]
      %v266 = vld [vmem:[%s201 + $0x194] sm:$0xff]
      %v267 = vld [vmem:[%s201 + $0x19c] sm:$0xff]
      %v268 = vld [vmem:[%s201 + $0x1a4] sm:$0xff]
      %v269 = vld [vmem:[%s201 + $0x1ac] sm:$0xf]
      %v270 = vld [vmem:[%s201 + $0x1b0] sm:$0xff]
      %v271 = vld [vmem:[%s201 + $0x1b8] sm:$0xff]
      %v272 = vld [vmem:[%s201 + $0x1c0] sm:$0xff]
      %v273 = vld [vmem:[%s201 + $0x1c8] sm:$0xff]
      %v274 = vld [vmem:[%s201 + $0x1d0] sm:$0xff]
      %v275 = vld [vmem:[%s201 + $0x1d8] sm:$0xff]
      %v276 = vld [vmem:[%s201 + $0x1e0] sm:$0xff]
      %v277 = vld [vmem:[%s201 + $0x1e8] sm:$0xff]
      %v278 = vld [vmem:[%s201 + $0x1f0] sm:$0xff]
      %v279 = vld [vmem:[%s201 + $0x1f8] sm:$0xff]
      %v280 = vld [vmem:[%s201 + $0x200] sm:$0xff]
      %v281 = vld [vmem:[%s201 + $0x208] sm:$0xff]
      %v282 = vld [vmem:[%s201 + $0x210] sm:$0xff]
      %v283 = vld [vmem:[%s201 + $0x218] sm:$0xf]
      %v284 = vld [vmem:[%s201 + $0x21c] sm:$0xff]
      %v285 = vld [vmem:[%s201 + $0x224] sm:$0xff]
      %v286 = vld [vmem:[%s201 + $0x22c] sm:$0xff]
      %v287 = vld [vmem:[%s201 + $0x234] sm:$0xff]
      %v288 = vld [vmem:[%s201 + $0x23c] sm:$0xff]
      %v289 = vld [vmem:[%s201 + $0x244] sm:$0xff]
      %v290 = vld [vmem:[%s201 + $0x24c] sm:$0xff]
      %v291 = vld [vmem:[%s201 + $0x254] sm:$0xff]
      %v292 = vld [vmem:[%s201 + $0x25c] sm:$0xff]
      %v293 = vld [vmem:[%s201 + $0x264] sm:$0xff]
      %v294 = vld [vmem:[%s201 + $0x26c] sm:$0xff]
      %v295 = vld [vmem:[%s201 + $0x274] sm:$0xff]
      %v296 = vld [vmem:[%s201 + $0x27c] sm:$0xff]
      %v297 = vld [vmem:[%s201 + $0x284] sm:$0xf]
      %v298 = vld [vmem:[%s201 + $0x288] sm:$0xff]
      %v299 = vld [vmem:[%s201 + $0x290] sm:$0xff]
      %v300 = vld [vmem:[%s201 + $0x298] sm:$0xff]
      %v301 = vld [vmem:[%s201 + $0x2a0] sm:$0xff]
      %v302 = vld [vmem:[%s201 + $0x2a8] sm:$0xff]
      %v303 = vld [vmem:[%s201 + $0x2b0] sm:$0xff]
      %v304 = vld [vmem:[%s201 + $0x2b8] sm:$0xff]
      %v305 = vld [vmem:[%s201 + $0x2c0] sm:$0xff]
      %v306 = vld [vmem:[%s201 + $0x2c8] sm:$0xff]
      %v307 = vld [vmem:[%s201 + $0x2d0] sm:$0xff]
      %v308 = vld [vmem:[%s201 + $0x2d8] sm:$0xff]
      %v309 = vld [vmem:[%s201 + $0x2e0] sm:$0xff]
      %v310 = vld [vmem:[%s201 + $0x2e8] sm:$0xff]
      %v311 = vld [vmem:[%s201 + $0x2f0] sm:$0xf]
      %v312 = vld [vmem:[%s201 + $0x2f4] sm:$0xff]
      %v313 = vld [vmem:[%s201 + $0x2fc] sm:$0xff]
      %v314 = vld [vmem:[%s201 + $0x304] sm:$0xff]
      %v315 = vld [vmem:[%s201 + $0x30c] sm:$0xff]
      %v316 = vld [vmem:[%s201 + $0x314] sm:$0xff]
      %v317 = vld [vmem:[%s201 + $0x31c] sm:$0xff]
      %v318 = vld [vmem:[%s201 + $0x324] sm:$0xff]
      %v319 = vld [vmem:[%s201 + $0x32c] sm:$0xff]
      %v320 = vld [vmem:[%s201 + $0x334] sm:$0xff]
      %v321 = vld [vmem:[%s201 + $0x33c] sm:$0xff]
      %v322 = vld [vmem:[%s201 + $0x344] sm:$0xff]
      %v323 = vld [vmem:[%s201 + $0x34c] sm:$0xff]
      %v324 = vld [vmem:[%s201 + $0x354] sm:$0xff]
      %v325 = vld [vmem:[%s201 + $0x35c] sm:$0xf]
      %v326 = vld [vmem:[%s1] sm:$0xf]
      %v327 = vld [vmem:[%s1 + $0x4] sm:$0xf]
      %v328 = vld [vmem:[%s1 + $0x8] sm:$0xf]
      %v329 = vld [vmem:[%s1 + $0xc] sm:$0xf]
      %v330 = vld [vmem:[%s1 + $0x10] sm:$0xf]
      %v331 = vld [vmem:[%s1 + $0x14] sm:$0xf]
      %v332 = vld [vmem:[%s1 + $0x18] sm:$0xf]
      %v333 = vld [vmem:[%s1 + $0x1c] sm:$0xf]
      %v334 = vld [vmem:[%s1 + $0x20] sm:$0xf]
      %v335 = vld [vmem:[%s1 + $0x24] sm:$0xf]
      %v336 = vld [vmem:[%s1 + $0x28] sm:$0xf]
      %v337 = vld [vmem:[%s1 + $0x2c] sm:$0xf]
      %v338 = vld [vmem:[%s1 + $0x30] sm:$0xf]
      %v339 = vld [vmem:[%s1 + $0x34] sm:$0xf]
      %v340 = vld [vmem:[%s1 + $0x38] sm:$0xf]
      %v341 = vld [vmem:[%s1 + $0x3c] sm:$0xf]
      %v342 = vld [vmem:[%s1 + $0x40] sm:$0xf]
      %v343 = vld [vmem:[%s1 + $0x44] sm:$0xf]
      %v344 = vld [vmem:[%s1 + $0x48] sm:$0xf]
      %v345 = vld [vmem:[%s1 + $0x4c] sm:$0xf]
      %v346 = vld [vmem:[%s1 + $0x50] sm:$0xf]
      %v347 = vld [vmem:[%s1 + $0x54] sm:$0xf]
      %v348 = vld [vmem:[%s1 + $0x58] sm:$0xf]
      %v349 = vld [vmem:[%s1 + $0x5c] sm:$0xf]
      %v350 = vld [vmem:[%s1 + $0x60] sm:$0xf]
      %v351 = vld [vmem:[%s1 + $0x64] sm:$0xf]
      %v352 = vld [vmem:[%s1 + $0x68] sm:$0xf]
      %v353 = vld [vmem:[%s1 + $0x6c] sm:$0xf]
      %v354 = vld [vmem:[%s1 + $0x70] sm:$0xf]
      %v355 = vld [vmem:[%s1 + $0x74] sm:$0xf]
      %v356 = vld [vmem:[%s1 + $0x78] sm:$0xf]
      %v357 = vld [vmem:[%s1 + $0x7c] sm:$0xf]
      %v358 = vld [vmem:[%s1 + $0x80] sm:$0xf]
      %v359 = vld [vmem:[%s1 + $0x84] sm:$0xf]
      %v360 = vld [vmem:[%s1 + $0x88] sm:$0xf]
      %v361 = vld [vmem:[%s1 + $0x8c] sm:$0xf]
      %v362 = vld [vmem:[%s1 + $0x90] sm:$0xf]
      %v363 = vld [vmem:[%s1 + $0x94] sm:$0xf]
      %v364 = vld [vmem:[%s1 + $0x98] sm:$0xf]
      %v365 = vld [vmem:[%s1 + $0x9c] sm:$0xf]
      %v366 = vld [vmem:[%s1 + $0xa0] sm:$0xf]
      %v367 = vld [vmem:[%s1 + $0xa4] sm:$0xf]
      %v368 = vld [vmem:[%s1 + $0xa8] sm:$0xf]
      %v369 = vld [vmem:[%s1 + $0xac] sm:$0xf]
      %v370 = vld [vmem:[%s1 + $0xb0] sm:$0xf]
      %v371 = vld [vmem:[%s1 + $0xb4] sm:$0xf]
      %v372 = vld [vmem:[%s1 + $0xb8] sm:$0xf]
      %v373 = vld [vmem:[%s1 + $0xbc] sm:$0xf]
      %v374 = vld [vmem:[%s1 + $0xc0] sm:$0xf]
      %v375 = vld [vmem:[%s1 + $0xc4] sm:$0xf]
      %v376 = vld [vmem:[%s1 + $0xc8] sm:$0xf]
      %v377 = vld [vmem:[%s1 + $0xcc] sm:$0xf]
      %v378 = vld [vmem:[%s1 + $0xd0] sm:$0xf]
      %v379 = vld [vmem:[%s1 + $0xd4] sm:$0xf]
      %v380 = vld [vmem:[%s1 + $0xd8] sm:$0xf]
      %v381 = vld [vmem:[%s1 + $0xdc] sm:$0xf]
      %v382 = vld [vmem:[%s1 + $0xe0] sm:$0xf]
      %v383 = vld [vmem:[%s1 + $0xe4] sm:$0xf]
      %v384 = vld [vmem:[%s1 + $0xe8] sm:$0xf]
      %v385 = vld [vmem:[%s1 + $0xec] sm:$0xf]
      %v386 = vld [vmem:[%s1 + $0xf0] sm:$0xf]
      %v387 = vld [vmem:[%s1 + $0xf4] sm:$0xf]
      %v388 = vld [vmem:[%s1 + $0xf8] sm:$0xf]
      %v389 = vld [vmem:[%s1 + $0xfc] sm:$0xf]
      %v390 = vld [vmem:[%s1 + $0x100] sm:$0xf]
      %v391 = vld [vmem:[%s1 + $0x104] sm:$0xf]
      %v392 = vld [vmem:[%s1 + $0x108] sm:$0xf]
      %v393 = vld [vmem:[%s1 + $0x10c] sm:$0xf]
      %v394 = vld [vmem:[%s1 + $0x110] sm:$0xf]
      %v395 = vld [vmem:[%s1 + $0x114] sm:$0xf]
      %v396 = vld [vmem:[%s1 + $0x118] sm:$0xf]
      %v397 = vld [vmem:[%s1 + $0x11c] sm:$0xf]
      %v398 = vld [vmem:[%s1 + $0x120] sm:$0xf]
      %v399 = vld [vmem:[%s1 + $0x124] sm:$0xf]
      %v400 = vld [vmem:[%s1 + $0x128] sm:$0xf]
      %v401 = vld [vmem:[%s1 + $0x12c] sm:$0xf]
      %v402 = vld [vmem:[%s1 + $0x130] sm:$0xf]
      %v403 = vld [vmem:[%s1 + $0x134] sm:$0xf]
      %v404 = vld [vmem:[%s1 + $0x138] sm:$0xf]
      %v405 = vld [vmem:[%s1 + $0x13c] sm:$0xf]
      %v406 = vld [vmem:[%s1 + $0x140] sm:$0xf]
      %v407 = vld [vmem:[%s1 + $0x144] sm:$0xf]
      %v408 = vld [vmem:[%s1 + $0x148] sm:$0xf]
      %v409 = vld [vmem:[%s1 + $0x14c] sm:$0xf]
      %v410 = vld [vmem:[%s1 + $0x150] sm:$0xf]
      %v411 = vld [vmem:[%s1 + $0x154] sm:$0xf]
      %v412 = vld [vmem:[%s1 + $0x158] sm:$0xf]
      %v413 = vld [vmem:[%s1 + $0x15c] sm:$0xf]
      %v414 = vld [vmem:[%s1 + $0x160] sm:$0xf]
      %v415 = vld [vmem:[%s1 + $0x164] sm:$0xf]
      %v416 = vld [vmem:[%s1 + $0x168] sm:$0xf]
      %v417 = vld [vmem:[%s1 + $0x16c] sm:$0xf]
      %v418 = vld [vmem:[%s1 + $0x170] sm:$0xf]
      %v419 = vld [vmem:[%s1 + $0x174] sm:$0xf]
      %v420 = vld [vmem:[%s1 + $0x178] sm:$0xf]
      %v421 = vld [vmem:[%s1 + $0x17c] sm:$0xf]
      %v422 = vld [vmem:[%s1 + $0x180] sm:$0xf]
      %v423 = vld [vmem:[%s1 + $0x184] sm:$0xf]
      %v424 = vld [vmem:[%s1 + $0x188] sm:$0xf]
      %v425 = vld [vmem:[%s1 + $0x18c] sm:$0xf]
      %v426 = vld [vmem:[%s1 + $0x190] sm:$0xf]
      %v427 = vld [vmem:[%s1 + $0x194] sm:$0xf]
      %v428 = vld [vmem:[%s1 + $0x198] sm:$0xf]
      %v429 = vld [vmem:[%s1 + $0x19c] sm:$0xf]
      %v430 = vld [vmem:[%s1 + $0x1a0] sm:$0xf]
      %v431 = vld [vmem:[%s1 + $0x1a4] sm:$0xf]
      %v432 = vld [vmem:[%s1 + $0x1a8] sm:$0xf]
      %v433 = vld [vmem:[%s1 + $0x1ac] sm:$0xf]
      %v434 = vld [vmem:[%s1 + $0x1b0] sm:$0xf]
      %v435 = vld [vmem:[%s1 + $0x1b4] sm:$0xf]
      %v436 = vld [vmem:[%s1 + $0x1b8] sm:$0xf]
      %v437 = vld [vmem:[%s1 + $0x1bc] sm:$0xf]
      %v438 = vld [vmem:[%s1 + $0x1c0] sm:$0xf]
      %v439 = vld [vmem:[%s1 + $0x1c4] sm:$0xf]
      %v440 = vld [vmem:[%s1 + $0x1c8] sm:$0xf]
      %v441 = vld [vmem:[%s1 + $0x1cc] sm:$0xf]
      %v442 = vld [vmem:[%s1 + $0x1d0] sm:$0xf]
      %v443 = vld [vmem:[%s1 + $0x1d4] sm:$0xf]
      %v444 = vld [vmem:[%s1 + $0x1d8] sm:$0xf]
      %v445 = vld [vmem:[%s1 + $0x1dc] sm:$0xf]
      %v446 = vld [vmem:[%s1 + $0x1e0] sm:$0xf]
      %v447 = vld [vmem:[%s1 + $0x1e4] sm:$0xf]
      %v448 = vld [vmem:[%s1 + $0x1e8] sm:$0xf]
      %v449 = vld [vmem:[%s1 + $0x1ec] sm:$0xf]
      %v450 = vld [vmem:[%s1 + $0x1f0] sm:$0xf]
      %v451 = vld [vmem:[%s1 + $0x1f4] sm:$0xf]
      %v452 = vld [vmem:[%s1 + $0x1f8] sm:$0xf]
      %v453 = vld [vmem:[%s1 + $0x1fc] sm:$0xf]
      %v454 = vld [vmem:[%s1 + $0x200] sm:$0xf]
      %v455 = vld [vmem:[%s1 + $0x204] sm:$0xf]
      %v456 = vld [vmem:[%s1 + $0x208] sm:$0xf]
      %v457 = vld [vmem:[%s1 + $0x20c] sm:$0xf]
      %v458 = vld [vmem:[%s1 + $0x210] sm:$0xf]
      %v459 = vld [vmem:[%s1 + $0x214] sm:$0xf]
      %v460 = vld [vmem:[%s1 + $0x218] sm:$0xf]
      %v461 = vld [vmem:[%s1 + $0x21c] sm:$0xf]
      %v462 = vld [vmem:[%s1 + $0x220] sm:$0xf]
      %v463 = vld [vmem:[%s1 + $0x224] sm:$0xf]
      %v464 = vld [vmem:[%s1 + $0x228] sm:$0xf]
      %v465 = vld [vmem:[%s1 + $0x22c] sm:$0xf]
      %v466 = vld [vmem:[%s1 + $0x230] sm:$0xf]
      %v467 = vld [vmem:[%s1 + $0x234] sm:$0xf]
      %v468 = vld [vmem:[%s1 + $0x238] sm:$0xf]
      %v469 = vld [vmem:[%s1 + $0x23c] sm:$0xf]
      %v470 = vld [vmem:[%s1 + $0x240] sm:$0xf]
      %v471 = vld [vmem:[%s1 + $0x244] sm:$0xf]
      %v472 = vld [vmem:[%s1 + $0x248] sm:$0xf]
      %v473 = vld [vmem:[%s1 + $0x24c] sm:$0xf]
      %v474 = vld [vmem:[%s1 + $0x250] sm:$0xf]
      %v475 = vld [vmem:[%s1 + $0x254] sm:$0xf]
      %v476 = vld [vmem:[%s1 + $0x258] sm:$0xf]
      %v477 = vld [vmem:[%s1 + $0x25c] sm:$0xf]
      %v478 = vld [vmem:[%s1 + $0x260] sm:$0xf]
      %v479 = vld [vmem:[%s1 + $0x264] sm:$0xf]
      %v480 = vld [vmem:[%s1 + $0x268] sm:$0xf]
      %v481 = vld [vmem:[%s1 + $0x26c] sm:$0xf]
      %v482 = vld [vmem:[%s1 + $0x270] sm:$0xf]
      %v483 = vld [vmem:[%s1 + $0x274] sm:$0xf]
      %v484 = vld [vmem:[%s1 + $0x278] sm:$0xf]
      %v485 = vld [vmem:[%s1 + $0x27c] sm:$0xf]
      %v486 = vld [vmem:[%s1 + $0x280] sm:$0xf]
      %v487 = vld [vmem:[%s1 + $0x284] sm:$0xf]
      %v488 = vld [vmem:[%s1 + $0x288] sm:$0xf]
      %v489 = vld [vmem:[%s1 + $0x28c] sm:$0xf]
      %v490 = vld [vmem:[%s1 + $0x290] sm:$0xf]
      %v491 = vld [vmem:[%s1 + $0x294] sm:$0xf]
      %v492 = vld [vmem:[%s1 + $0x298] sm:$0xf]
      %v493 = vld [vmem:[%s1 + $0x29c] sm:$0xf]
      %v494 = vld [vmem:[%s1 + $0x2a0] sm:$0xf]
      %v495 = vld [vmem:[%s1 + $0x2a4] sm:$0xf]
      %v496 = vld [vmem:[%s1 + $0x2a8] sm:$0xf]
      %v497 = vld [vmem:[%s1 + $0x2ac] sm:$0xf]
      %v498 = vld [vmem:[%s1 + $0x2b0] sm:$0xf]
      %v499 = vld [vmem:[%s1 + $0x2b4] sm:$0xf]
      %v500 = vld [vmem:[%s1 + $0x2b8] sm:$0xf]
      %v501 = vld [vmem:[%s1 + $0x2bc] sm:$0xf]
      %v502 = vld [vmem:[%s1 + $0x2c0] sm:$0xf]
      %v503 = vld [vmem:[%s1 + $0x2c4] sm:$0xf]
      %v504 = vld [vmem:[%s1 + $0x2c8] sm:$0xf]
      %v505 = vld [vmem:[%s1 + $0x2cc] sm:$0xf]
      %v506 = vld [vmem:[%s1 + $0x2d0] sm:$0xf]
      %v507 = vld [vmem:[%s1 + $0x2d4] sm:$0xf]
      %v508 = vld [vmem:[%s1 + $0x2d8] sm:$0xf]
      %v509 = vld [vmem:[%s1 + $0x2dc] sm:$0xf]
      %v510 = vld [vmem:[%s1 + $0x2e0] sm:$0xf]
      %v511 = vld [vmem:[%s1 + $0x2e4] sm:$0xf]
      %v512 = vld [vmem:[%s1 + $0x2e8] sm:$0xf]
      %v513 = vld [vmem:[%s1 + $0x2ec] sm:$0xf]
      %v514 = vld [vmem:[%s1 + $0x2f0] sm:$0xf]
      %v515 = vld [vmem:[%s1 + $0x2f4] sm:$0xf]
      %v516 = vld [vmem:[%s1 + $0x2f8] sm:$0xf]
      %v517 = vld [vmem:[%s1 + $0x2fc] sm:$0xf]
      %v518 = vld [vmem:[%s1 + $0x300] sm:$0xf]
      %v519 = vld [vmem:[%s1 + $0x304] sm:$0xf]
      %v520 = vld [vmem:[%s1 + $0x308] sm:$0xf]
      %v521 = vld [vmem:[%s1 + $0x30c] sm:$0xf]
      %v522 = vld [vmem:[%s1 + $0x310] sm:$0xf]
      %v523 = vld [vmem:[%s1 + $0x314] sm:$0xf]
      %v524 = vld [vmem:[%s1 + $0x318] sm:$0xf]
      %v525 = vld [vmem:[%s1 + $0x31c] sm:$0xf]
      %v526 = vld [vmem:[%s1 + $0x320] sm:$0xf]
      %v527 = vld [vmem:[%s1 + $0x324] sm:$0xf]
      %v528 = vld [vmem:[%s1 + $0x328] sm:$0xf]
      %v529 = vld [vmem:[%s1 + $0x32c] sm:$0xf]
      %v530 = vld [vmem:[%s1 + $0x330] sm:$0xf]
      %v531 = vld [vmem:[%s1 + $0x334] sm:$0xf]
      %v532 = vld [vmem:[%s1 + $0x338] sm:$0xf]
      %v533 = vld [vmem:[%s1 + $0x33c] sm:$0xf]
      %v534 = vld [vmem:[%s1 + $0x340] sm:$0xf]
      %v535 = vld [vmem:[%s1 + $0x344] sm:$0xf]
      %v536 = vld [vmem:[%s1 + $0x348] sm:$0xf]
      %v537 = vld [vmem:[%s1 + $0x34c] sm:$0xf]
      %v538 = vld [vmem:[%s1 + $0x350] sm:$0xf]
      %v539 = vld [vmem:[%s1 + $0x354] sm:$0xf]
      %v540 = vld [vmem:[%s1 + $0x358] sm:$0xf]
      %v541 = vld [vmem:[%s1 + $0x35c] sm:$0xf]
      %v542 = vld [vmem:[%s1 + $0x360] sm:$0xf]
      %v543 = vld [vmem:[%s1 + $0x364] sm:$0xf]
      %v544 = vld [vmem:[%s1 + $0x368] sm:$0xf]
      %v545 = vld [vmem:[%s1 + $0x36c] sm:$0xf]
      %v546 = vld [vmem:[%s1 + $0x370] sm:$0xf]
      %v547 = vld [vmem:[%s1 + $0x374] sm:$0xf]
      %v548 = vld [vmem:[%s1 + $0x378] sm:$0xf]
      %v549 = vld [vmem:[%s1 + $0x37c] sm:$0xf]
      %v550 = vld [vmem:[%s1 + $0x380] sm:$0xf]
      %v551 = vld [vmem:[%s1 + $0x384] sm:$0xf]
      %v552 = vld [vmem:[%s1 + $0x388] sm:$0xf]
      %v553 = vld [vmem:[%s1 + $0x38c] sm:$0xf]
      %v554 = vld [vmem:[%s1 + $0x390] sm:$0xf]
      %v555 = vld [vmem:[%s1 + $0x394] sm:$0xf]
      %v556 = vld [vmem:[%s1 + $0x398] sm:$0xf]
      %v557 = vld [vmem:[%s1 + $0x39c] sm:$0xf]
      %v558 = vld [vmem:[%s1 + $0x3a0] sm:$0xf]
      %v559 = vld [vmem:[%s1 + $0x3a4] sm:$0xf]
      %v560 = vld [vmem:[%s1 + $0x3a8] sm:$0xf]
      %v561 = vld [vmem:[%s1 + $0x3ac] sm:$0xf]
      %v562 = vld [vmem:[%s1 + $0x3b0] sm:$0xf]
      %v563 = vld [vmem:[%s1 + $0x3b4] sm:$0xf]
      %v564 = vld [vmem:[%s1 + $0x3b8] sm:$0xf]
      %v565 = vld [vmem:[%s1 + $0x3bc] sm:$0xf]
      %v566 = vld [vmem:[%s1 + $0x3c0] sm:$0xf]
      %v567 = vld [vmem:[%s1 + $0x3c4] sm:$0xf]
      %v568 = vld [vmem:[%s1 + $0x3c8] sm:$0xf]
      %v569 = vld [vmem:[%s1 + $0x3cc] sm:$0xf]
      %v570 = vld [vmem:[%s1 + $0x3d0] sm:$0xf]
      %v571 = vld [vmem:[%s1 + $0x3d4] sm:$0xf]
      %v572 = vld [vmem:[%s1 + $0x3d8] sm:$0xf]
      %v573 = vld [vmem:[%s1 + $0x3dc] sm:$0xf]
      %v574 = vld [vmem:[%s1 + $0x3e0] sm:$0xf]
      %v575 = vld [vmem:[%s1 + $0x3e4] sm:$0xf]
      %v576 = vld [vmem:[%s1 + $0x3e8] sm:$0xf]
      %v577 = vld [vmem:[%s1 + $0x3ec] sm:$0xf]
      %v578 = vld [vmem:[%s1 + $0x3f0] sm:$0xf]
      %v579 = vld [vmem:[%s1 + $0x3f4] sm:$0xf]
      %v580 = vld [vmem:[%s1 + $0x3f8] sm:$0xf]
      %v581 = vld [vmem:[%s1 + $0x3fc] sm:$0xf]
      %v582 = vld [vmem:[%s1 + $0x400] sm:$0xf]
      %v583 = vld [vmem:[%s1 + $0x404] sm:$0xf]
      %v584 = vld [vmem:[%s1 + $0x408] sm:$0xf]
      %v585 = vld [vmem:[%s1 + $0x40c] sm:$0xf]
      %v586 = vld [vmem:[%s1 + $0x410] sm:$0xf]
      %v587 = vld [vmem:[%s1 + $0x414] sm:$0xf]
      %v588 = vld [vmem:[%s1 + $0x418] sm:$0xf]
      %v589 = vld [vmem:[%s1 + $0x41c] sm:$0xf]
      %v590 = vld [vmem:[%s1 + $0x420] sm:$0xf]
      %v591 = vld [vmem:[%s1 + $0x424] sm:$0xf]
      %v592 = vld [vmem:[%s1 + $0x428] sm:$0xf]
      %v593 = vld [vmem:[%s1 + $0x42c] sm:$0xf]
      %v594 = vld [vmem:[%s1 + $0x430] sm:$0xf]
      %v595 = vld [vmem:[%s1 + $0x434] sm:$0xf]
      %v596 = vld [vmem:[%s1 + $0x438] sm:$0xf]
      %v597 = vld [vmem:[%s1 + $0x43c] sm:$0xf]
      %v598 = vld [vmem:[%s1 + $0x440] sm:$0xf]
      %v599 = vld [vmem:[%s1 + $0x444] sm:$0xf]
      %v600 = vld [vmem:[%s1 + $0x448] sm:$0xf]
      %v601 = vld [vmem:[%s1 + $0x44c] sm:$0xf]
      %v602 = vld [vmem:[%s1 + $0x450] sm:$0xf]
      %v603 = vld [vmem:[%s1 + $0x454] sm:$0xf]
      %v604 = vld [vmem:[%s1 + $0x458] sm:$0xf]
      %v605 = vld [vmem:[%s1 + $0x45c] sm:$0xf]
      %v606 = vld [vmem:[%s1 + $0x460] sm:$0xf]
      %v607 = vld [vmem:[%s1 + $0x464] sm:$0xf]
      %v608 = vld [vmem:[%s1 + $0x468] sm:$0xf]
      %v609 = vld [vmem:[%s1 + $0x46c] sm:$0xf]
      %v610 = vld [vmem:[%s1 + $0x470] sm:$0xf]
      %v611 = vld [vmem:[%s1 + $0x474] sm:$0xf]
      %v612 = vld [vmem:[%s1 + $0x478] sm:$0xf]
      %v613 = vld [vmem:[%s1 + $0x47c] sm:$0xf]
      %v614 = vld [vmem:[%s1 + $0x480] sm:$0xf]
      %v615 = vld [vmem:[%s1 + $0x484] sm:$0xf]
      %v616 = vld [vmem:[%s1 + $0x488] sm:$0xf]
      %v617 = vld [vmem:[%s1 + $0x48c] sm:$0xf]
      %v618 = vld [vmem:[%s1 + $0x490] sm:$0xf]
      %v619 = vld [vmem:[%s1 + $0x494] sm:$0xf]
      %v620 = vld [vmem:[%s1 + $0x498] sm:$0xf]
      %v621 = vld [vmem:[%s1 + $0x49c] sm:$0xf]
      %v622 = vld [vmem:[%s1 + $0x4a0] sm:$0xf]
      %v623 = vld [vmem:[%s1 + $0x4a4] sm:$0xf]
      %v624 = vld [vmem:[%s1 + $0x4a8] sm:$0xf]
      %v625 = vld [vmem:[%s1 + $0x4ac] sm:$0xf]
      %v626 = vld [vmem:[%s1 + $0x4b0] sm:$0xf]
      %v627 = vld [vmem:[%s1 + $0x4b4] sm:$0xf]
      %v628 = vld [vmem:[%s1 + $0x4b8] sm:$0xf]
      %v629 = vld [vmem:[%s1 + $0x4bc] sm:$0xf]
      %v630 = vld [vmem:[%s1 + $0x4c0] sm:$0xf]
      %v631 = vld [vmem:[%s1 + $0x4c4] sm:$0xf]
      %v632 = vld [vmem:[%s1 + $0x4c8] sm:$0xf]
      %v633 = vld [vmem:[%s1 + $0x4cc] sm:$0xf]
      %v634 = vld [vmem:[%s1 + $0x4d0] sm:$0xf]
      %v635 = vld [vmem:[%s1 + $0x4d4] sm:$0xf]
      %v636 = vld [vmem:[%s1 + $0x4d8] sm:$0xf]
      %v637 = vld [vmem:[%s1 + $0x4dc] sm:$0xf]
      %v638 = vld [vmem:[%s1 + $0x4e0] sm:$0xf]
      %v639 = vld [vmem:[%s1 + $0x4e4] sm:$0xf]
      %v640 = vld [vmem:[%s1 + $0x4e8] sm:$0xf]
      %v641 = vld [vmem:[%s1 + $0x4ec] sm:$0xf]
      %v642 = vld [vmem:[%s1 + $0x4f0] sm:$0xf]
      %v643 = vld [vmem:[%s1 + $0x4f4] sm:$0xf]
      %v644 = vld [vmem:[%s1 + $0x4f8] sm:$0xf]
      %v645 = vld [vmem:[%s1 + $0x4fc] sm:$0xf]
      %v646 = vld [vmem:[%s1 + $0x500] sm:$0xf]
      %v647 = vld [vmem:[%s1 + $0x504] sm:$0xf]
      %v648 = vld [vmem:[%s1 + $0x508] sm:$0xf]
      %v649 = vld [vmem:[%s1 + $0x50c] sm:$0xf]
      %v650 = vld [vmem:[%s1 + $0x510] sm:$0xf]
      %v651 = vld [vmem:[%s1 + $0x514] sm:$0xf]
      %v652 = vld [vmem:[%s1 + $0x518] sm:$0xf]
      %v653 = vld [vmem:[%s1 + $0x51c] sm:$0xf]
      %v654 = vld [vmem:[%s1 + $0x520] sm:$0xf]
      %v655 = vld [vmem:[%s1 + $0x524] sm:$0xf]
      %v656 = vld [vmem:[%s1 + $0x528] sm:$0xf]
      %v657 = vld [vmem:[%s1 + $0x52c] sm:$0xf]
      %v658 = vld [vmem:[%s1 + $0x530] sm:$0xf]
      %v659 = vld [vmem:[%s1 + $0x534] sm:$0xf]
      %v660 = vld [vmem:[%s1 + $0x538] sm:$0xf]
      %v661 = vld [vmem:[%s1 + $0x53c] sm:$0xf]
      %v662 = vld [vmem:[%s1 + $0x540] sm:$0xf]
      %v663 = vld [vmem:[%s1 + $0x544] sm:$0xf]
      %v664 = vld [vmem:[%s1 + $0x548] sm:$0xf]
      %v665 = vld [vmem:[%s1 + $0x54c] sm:$0xf]
      %v666 = vld [vmem:[%s1 + $0x550] sm:$0xf]
      %v667 = vld [vmem:[%s1 + $0x554] sm:$0xf]
      %v668 = vld [vmem:[%s1 + $0x558] sm:$0xf]
      %v669 = vld [vmem:[%s1 + $0x55c] sm:$0xf]
      %v670 = vld [vmem:[%s1 + $0x560] sm:$0xf]
      %v671 = vld [vmem:[%s1 + $0x564] sm:$0xf]
      %v672 = vld [vmem:[%s1 + $0x568] sm:$0xf]
      %v673 = vld [vmem:[%s1 + $0x56c] sm:$0xf]
      %v674 = vld [vmem:[%s1 + $0x570] sm:$0xf]
      %v675 = vld [vmem:[%s1 + $0x574] sm:$0xf]
      %v676 = vld [vmem:[%s1 + $0x578] sm:$0xf]
      %v677 = vld [vmem:[%s1 + $0x57c] sm:$0xf]
      %v678 = vld [vmem:[%s1 + $0x580] sm:$0xf]
      %v679 = vld [vmem:[%s1 + $0x584] sm:$0xf]
      %v680 = vld [vmem:[%s1 + $0x588] sm:$0xf]
      %v681 = vld [vmem:[%s1 + $0x58c] sm:$0xf]
      %v682 = vld [vmem:[%s1 + $0x590] sm:$0xf]
      %v683 = vld [vmem:[%s1 + $0x594] sm:$0xf]
      %v684 = vld [vmem:[%s1 + $0x598] sm:$0xf]
      %v685 = vld [vmem:[%s1 + $0x59c] sm:$0xf]
      %v686 = vld [vmem:[%s1 + $0x5a0] sm:$0xf]
      %v687 = vld [vmem:[%s1 + $0x5a4] sm:$0xf]
      %v688 = vld [vmem:[%s1 + $0x5a8] sm:$0xf]
      %v689 = vld [vmem:[%s1 + $0x5ac] sm:$0xf]
      %v690 = vld [vmem:[%s1 + $0x5b0] sm:$0xf]
      %v691 = vld [vmem:[%s1 + $0x5b4] sm:$0xf]
      %v692 = vld [vmem:[%s1 + $0x5b8] sm:$0xf]
      %v693 = vld [vmem:[%s1 + $0x5bc] sm:$0xf]
      %v694 = vld [vmem:[%s1 + $0x5c0] sm:$0xf]
      %v695 = vld [vmem:[%s1 + $0x5c4] sm:$0xf]
      %v696 = vld [vmem:[%s1 + $0x5c8] sm:$0xf]
      %v697 = vld [vmem:[%s1 + $0x5cc] sm:$0xf]
      %v698 = vld [vmem:[%s1 + $0x5d0] sm:$0xf]
      %v699 = vld [vmem:[%s1 + $0x5d4] sm:$0xf]
      %v700 = vld [vmem:[%s1 + $0x5d8] sm:$0xf]
      %v701 = vld [vmem:[%s1 + $0x5dc] sm:$0xf]
      %v702 = vld [vmem:[%s1 + $0x5e0] sm:$0xf]
      %v703 = vld [vmem:[%s1 + $0x5e4] sm:$0xf]
      %v704 = vld [vmem:[%s1 + $0x5e8] sm:$0xf]
      %v705 = vld [vmem:[%s1 + $0x5ec] sm:$0xf]
      %v706 = vld [vmem:[%s1 + $0x5f0] sm:$0xf]
      %v707 = vld [vmem:[%s1 + $0x5f4] sm:$0xf]
      %v708 = vld [vmem:[%s1 + $0x5f8] sm:$0xf]
      %v709 = vld [vmem:[%s1 + $0x5fc] sm:$0xf]
      %v710 = vld [vmem:[%s1 + $0x600] sm:$0xf]
      %v711 = vld [vmem:[%s1 + $0x604] sm:$0xf]
      %v712 = vld [vmem:[%s1 + $0x608] sm:$0xf]
      %v713 = vld [vmem:[%s1 + $0x60c] sm:$0xf]
      %v714 = vld [vmem:[%s1 + $0x610] sm:$0xf]
      %v715 = vld [vmem:[%s1 + $0x614] sm:$0xf]
      %v716 = vld [vmem:[%s1 + $0x618] sm:$0xf]
      %v717 = vld [vmem:[%s1 + $0x61c] sm:$0xf]
      %v718 = vld [vmem:[%s1 + $0x620] sm:$0xf]
      %v719 = vld [vmem:[%s1 + $0x624] sm:$0xf]
      %v720 = vld [vmem:[%s1 + $0x628] sm:$0xf]
      %v721 = vld [vmem:[%s1 + $0x62c] sm:$0xf]
      %v722 = vld [vmem:[%s1 + $0x630] sm:$0xf]
      %v723 = vld [vmem:[%s1 + $0x634] sm:$0xf]
      %v724 = vld [vmem:[%s1 + $0x638] sm:$0xf]
      %v725 = vld [vmem:[%s1 + $0x63c] sm:$0xf]
      %v726 = vld [vmem:[%s1 + $0x640] sm:$0xf]
      %v727 = vld [vmem:[%s1 + $0x644] sm:$0xf]
      %v728 = vld [vmem:[%s1 + $0x648] sm:$0xf]
      %v729 = vld [vmem:[%s1 + $0x64c] sm:$0xf]
      %v730 = vld [vmem:[%s1 + $0x650] sm:$0xf]
      %v731 = vld [vmem:[%s1 + $0x654] sm:$0xf]
      %v732 = vld [vmem:[%s1 + $0x658] sm:$0xf]
      %v733 = vld [vmem:[%s1 + $0x65c] sm:$0xf]
      %v734 = vld [vmem:[%s1 + $0x660] sm:$0xf]
      %v735 = vld [vmem:[%s1 + $0x664] sm:$0xf]
      %v736 = vld [vmem:[%s1 + $0x668] sm:$0xf]
      %v737 = vld [vmem:[%s1 + $0x66c] sm:$0xf]
      %v738 = vld [vmem:[%s1 + $0x670] sm:$0xf]
      %v739 = vld [vmem:[%s1 + $0x674] sm:$0xf]
      %v740 = vld [vmem:[%s1 + $0x678] sm:$0xf]
      %v741 = vld [vmem:[%s1 + $0x67c] sm:$0xf]
      %v742 = vld [vmem:[%s1 + $0x680] sm:$0xf]
      %v743 = vld [vmem:[%s1 + $0x684] sm:$0xf]
      %v744 = vld [vmem:[%s1 + $0x688] sm:$0xf]
      %v745 = vld [vmem:[%s1 + $0x68c] sm:$0xf]
      %v746 = vld [vmem:[%s1 + $0x690] sm:$0xf]
      %v747 = vld [vmem:[%s1 + $0x694] sm:$0xf]
      %v748 = vld [vmem:[%s1 + $0x698] sm:$0xf]
      %v749 = vld [vmem:[%s1 + $0x69c] sm:$0xf]
      %v750 = vld [vmem:[%s1 + $0x6a0] sm:$0xf]
      %v751 = vld [vmem:[%s1 + $0x6a4] sm:$0xf]
      %v752 = vld [vmem:[%s1 + $0x6a8] sm:$0xf]
      %v753 = vld [vmem:[%s1 + $0x6ac] sm:$0xf]
      %v754 = vld [vmem:[%s1 + $0x6b0] sm:$0xf]
      %v755 = vld [vmem:[%s1 + $0x6b4] sm:$0xf]
      %v756 = vld [vmem:[%s1 + $0x6b8] sm:$0xf]
      %v757 = vld [vmem:[%s1 + $0x6bc] sm:$0xf]
      %v758 = vld [vmem:[%s2] sm:$0x1]
      %v760 = vlaneseq
      %v761 = vshrl.u32 %v760, 7
      %v762 = vsub.s32 0, %v761
      %v763 = vrot.slane %v758, %v762
      %v877 = vunpack.c.l.b16 %v214
      %v878 = vunpack.c.h.b16 %v214
      %v879 = vunpack.c.l.b16 %v215
      %v880 = vunpack.c.h.b16 %v215
      %v881 = vunpack.c.l.b16 %v216
      %v882 = vunpack.c.h.b16 %v216
      %v883 = vunpack.c.l.b16 %v217
      %v884 = vunpack.c.h.b16 %v217
      %v885 = vunpack.c.l.b16 %v218
      %v886 = vunpack.c.h.b16 %v218
      %v887 = vunpack.c.l.b16 %v219
      %v888 = vunpack.c.h.b16 %v219
      %v889 = vunpack.c.l.b16 %v220
      %v890 = vunpack.c.h.b16 %v220
      %v891 = vunpack.c.l.b16 %v221
      %v892 = vunpack.c.h.b16 %v221
      %v893 = vunpack.c.l.b16 %v222
      %v894 = vunpack.c.h.b16 %v222
      %v895 = vunpack.c.l.b16 %v223
      %v896 = vunpack.c.h.b16 %v223
      %v897 = vunpack.c.l.b16 %v224
      %v898 = vunpack.c.h.b16 %v224
      %v899 = vunpack.c.l.b16 %v225
      %v900 = vunpack.c.h.b16 %v225
      %v901 = vunpack.c.l.b16 %v226
      %v902 = vunpack.c.h.b16 %v226
      %v903 = vunpack.c.l.b16 %v227
      %v904 = vunpack.c.l.b16 %v228
      %v905 = vunpack.c.h.b16 %v228
      %v906 = vunpack.c.l.b16 %v229
      %v907 = vunpack.c.h.b16 %v229
      %v908 = vunpack.c.l.b16 %v230
      %v909 = vunpack.c.h.b16 %v230
      %v910 = vunpack.c.l.b16 %v231
      %v911 = vunpack.c.h.b16 %v231
      %v912 = vunpack.c.l.b16 %v232
      %v913 = vunpack.c.h.b16 %v232
      %v914 = vunpack.c.l.b16 %v233
      %v915 = vunpack.c.h.b16 %v233
      %v916 = vunpack.c.l.b16 %v234
      %v917 = vunpack.c.h.b16 %v234
      %v918 = vunpack.c.l.b16 %v235
      %v919 = vunpack.c.h.b16 %v235
      %v920 = vunpack.c.l.b16 %v236
      %v921 = vunpack.c.h.b16 %v236
      %v922 = vunpack.c.l.b16 %v237
      %v923 = vunpack.c.h.b16 %v237
      %v924 = vunpack.c.l.b16 %v238
      %v925 = vunpack.c.h.b16 %v238
      %v926 = vunpack.c.l.b16 %v239
      %v927 = vunpack.c.h.b16 %v239
      %v928 = vunpack.c.l.b16 %v240
      %v929 = vunpack.c.h.b16 %v240
      %v930 = vunpack.c.l.b16 %v241
      %v931 = vunpack.c.l.b16 %v242
      %v932 = vunpack.c.h.b16 %v242
      %v933 = vunpack.c.l.b16 %v243
      %v934 = vunpack.c.h.b16 %v243
      %v935 = vunpack.c.l.b16 %v244
      %v936 = vunpack.c.h.b16 %v244
      %v937 = vunpack.c.l.b16 %v245
      %v938 = vunpack.c.h.b16 %v245
      %v939 = vunpack.c.l.b16 %v246
      %v940 = vunpack.c.h.b16 %v246
      %v941 = vunpack.c.l.b16 %v247
      %v942 = vunpack.c.h.b16 %v247
      %v943 = vunpack.c.l.b16 %v248
      %v944 = vunpack.c.h.b16 %v248
      %v945 = vunpack.c.l.b16 %v249
      %v946 = vunpack.c.h.b16 %v249
      %v947 = vunpack.c.l.b16 %v250
      %v948 = vunpack.c.h.b16 %v250
      %v949 = vunpack.c.l.b16 %v251
      %v950 = vunpack.c.h.b16 %v251
      %v951 = vunpack.c.l.b16 %v252
      %v952 = vunpack.c.h.b16 %v252
      %v953 = vunpack.c.l.b16 %v253
      %v954 = vunpack.c.h.b16 %v253
      %v955 = vunpack.c.l.b16 %v254
      %v956 = vunpack.c.h.b16 %v254
      %v957 = vunpack.c.l.b16 %v255
      %v958 = vunpack.c.l.b16 %v256
      %v959 = vunpack.c.h.b16 %v256
      %v960 = vunpack.c.l.b16 %v257
      %v961 = vunpack.c.h.b16 %v257
      %v962 = vunpack.c.l.b16 %v258
      %v963 = vunpack.c.h.b16 %v258
      %v964 = vunpack.c.l.b16 %v259
      %v965 = vunpack.c.h.b16 %v259
      %v966 = vunpack.c.l.b16 %v260
      %v967 = vunpack.c.h.b16 %v260
      %v968 = vunpack.c.l.b16 %v261
      %v969 = vunpack.c.h.b16 %v261
      %v970 = vunpack.c.l.b16 %v262
      %v971 = vunpack.c.h.b16 %v262
      %v972 = vunpack.c.l.b16 %v263
      %v973 = vunpack.c.h.b16 %v263
      %v974 = vunpack.c.l.b16 %v264
      %v975 = vunpack.c.h.b16 %v264
      %v976 = vunpack.c.l.b16 %v265
      %v977 = vunpack.c.h.b16 %v265
      %v978 = vunpack.c.l.b16 %v266
      %v979 = vunpack.c.h.b16 %v266
      %v980 = vunpack.c.l.b16 %v267
      %v981 = vunpack.c.h.b16 %v267
      %v982 = vunpack.c.l.b16 %v268
      %v983 = vunpack.c.h.b16 %v268
      %v984 = vunpack.c.l.b16 %v269
      %v985 = vunpack.c.l.b16 %v270
      %v986 = vunpack.c.h.b16 %v270
      %v987 = vunpack.c.l.b16 %v271
      %v988 = vunpack.c.h.b16 %v271
      %v989 = vunpack.c.l.b16 %v272
      %v990 = vunpack.c.h.b16 %v272
      %v991 = vunpack.c.l.b16 %v273
      %v992 = vunpack.c.h.b16 %v273
      %v993 = vunpack.c.l.b16 %v274
      %v994 = vunpack.c.h.b16 %v274
      %v995 = vunpack.c.l.b16 %v275
      %v996 = vunpack.c.h.b16 %v275
      %v997 = vunpack.c.l.b16 %v276
      %v998 = vunpack.c.h.b16 %v276
      %v999 = vunpack.c.l.b16 %v277
      %v1000 = vunpack.c.h.b16 %v277
      %v1001 = vunpack.c.l.b16 %v278
      %v1002 = vunpack.c.h.b16 %v278
      %v1003 = vunpack.c.l.b16 %v279
      %v1004 = vunpack.c.h.b16 %v279
      %v1005 = vunpack.c.l.b16 %v280
      %v1006 = vunpack.c.h.b16 %v280
      %v1007 = vunpack.c.l.b16 %v281
      %v1008 = vunpack.c.h.b16 %v281
      %v1009 = vunpack.c.l.b16 %v282
      %v1010 = vunpack.c.h.b16 %v282
      %v1011 = vunpack.c.l.b16 %v283
      %v1012 = vunpack.c.l.b16 %v284
      %v1013 = vunpack.c.h.b16 %v284
      %v1014 = vunpack.c.l.b16 %v285
      %v1015 = vunpack.c.h.b16 %v285
      %v1016 = vunpack.c.l.b16 %v286
      %v1017 = vunpack.c.h.b16 %v286
      %v1018 = vunpack.c.l.b16 %v287
      %v1019 = vunpack.c.h.b16 %v287
      %v1020 = vunpack.c.l.b16 %v288
      %v1021 = vunpack.c.h.b16 %v288
      %v1022 = vunpack.c.l.b16 %v289
      %v1023 = vunpack.c.h.b16 %v289
      %v1024 = vunpack.c.l.b16 %v290
      %v1025 = vunpack.c.h.b16 %v290
      %v1026 = vunpack.c.l.b16 %v291
      %v1027 = vunpack.c.h.b16 %v291
      %v1028 = vunpack.c.l.b16 %v292
      %v1029 = vunpack.c.h.b16 %v292
      %v1030 = vunpack.c.l.b16 %v293
      %v1031 = vunpack.c.h.b16 %v293
      %v1032 = vunpack.c.l.b16 %v294
      %v1033 = vunpack.c.h.b16 %v294
      %v1034 = vunpack.c.l.b16 %v295
      %v1035 = vunpack.c.h.b16 %v295
      %v1036 = vunpack.c.l.b16 %v296
      %v1037 = vunpack.c.h.b16 %v296
      %v1038 = vunpack.c.l.b16 %v297
      %v1039 = vunpack.c.l.b16 %v298
      %v1040 = vunpack.c.h.b16 %v298
      %v1041 = vunpack.c.l.b16 %v299
      %v1042 = vunpack.c.h.b16 %v299
      %v1043 = vunpack.c.l.b16 %v300
      %v1044 = vunpack.c.h.b16 %v300
      %v1045 = vunpack.c.l.b16 %v301
      %v1046 = vunpack.c.h.b16 %v301
      %v1047 = vunpack.c.l.b16 %v302
      %v1048 = vunpack.c.h.b16 %v302
      %v1049 = vunpack.c.l.b16 %v303
      %v1050 = vunpack.c.h.b16 %v303
      %v1051 = vunpack.c.l.b16 %v304
      %v1052 = vunpack.c.h.b16 %v304
      %v1053 = vunpack.c.l.b16 %v305
      %v1054 = vunpack.c.h.b16 %v305
      %v1055 = vunpack.c.l.b16 %v306
      %v1056 = vunpack.c.h.b16 %v306
      %v1057 = vunpack.c.l.b16 %v307
      %v1058 = vunpack.c.h.b16 %v307
      %v1059 = vunpack.c.l.b16 %v308
      %v1060 = vunpack.c.h.b16 %v308
      %v1061 = vunpack.c.l.b16 %v309
      %v1062 = vunpack.c.h.b16 %v309
      %v1063 = vunpack.c.l.b16 %v310
      %v1064 = vunpack.c.h.b16 %v310
      %v1065 = vunpack.c.l.b16 %v311
      %v1066 = vunpack.c.l.b16 %v312
      %v1067 = vunpack.c.h.b16 %v312
      %v1068 = vunpack.c.l.b16 %v313
      %v1069 = vunpack.c.h.b16 %v313
      %v1070 = vunpack.c.l.b16 %v314
      %v1071 = vunpack.c.h.b16 %v314
      %v1072 = vunpack.c.l.b16 %v315
      %v1073 = vunpack.c.h.b16 %v315
      %v1074 = vunpack.c.l.b16 %v316
      %v1075 = vunpack.c.h.b16 %v316
      %v1076 = vunpack.c.l.b16 %v317
      %v1077 = vunpack.c.h.b16 %v317
      %v1078 = vunpack.c.l.b16 %v318
      %v1079 = vunpack.c.h.b16 %v318
      %v1080 = vunpack.c.l.b16 %v319
      %v1081 = vunpack.c.h.b16 %v319
      %v1082 = vunpack.c.l.b16 %v320
      %v1083 = vunpack.c.h.b16 %v320
      %v1084 = vunpack.c.l.b16 %v321
      %v1085 = vunpack.c.h.b16 %v321
      %v1086 = vunpack.c.l.b16 %v322
      %v1087 = vunpack.c.h.b16 %v322
      %v1088 = vunpack.c.l.b16 %v323
      %v1089 = vunpack.c.h.b16 %v323
      %v1090 = vunpack.c.l.b16 %v324
      %v1091 = vunpack.c.h.b16 %v324
      %v1092 = vunpack.c.l.b16 %v325
      %v1093 = vpack.c.b16 %v904, %v877
      %v1094 = vpack.c.b16 %v905, %v878
      %v1095 = vpack.c.b16 %v906, %v879
      %v1096 = vpack.c.b16 %v907, %v880
      %v1097 = vpack.c.b16 %v908, %v881
      %v1098 = vpack.c.b16 %v909, %v882
      %v1099 = vpack.c.b16 %v910, %v883
      %v1100 = vpack.c.b16 %v911, %v884
      %v1101 = vpack.c.b16 %v912, %v885
      %v1102 = vpack.c.b16 %v913, %v886
      %v1103 = vpack.c.b16 %v914, %v887
      %v1104 = vpack.c.b16 %v915, %v888
      %v1105 = vpack.c.b16 %v916, %v889
      %v1106 = vpack.c.b16 %v917, %v890
      %v1107 = vpack.c.b16 %v918, %v891
      %v1108 = vpack.c.b16 %v919, %v892
      %v1109 = vpack.c.b16 %v920, %v893
      %v1110 = vpack.c.b16 %v921, %v894
      %v1111 = vpack.c.b16 %v922, %v895
      %v1112 = vpack.c.b16 %v923, %v896
      %v1113 = vpack.c.b16 %v924, %v897
      %v1114 = vpack.c.b16 %v925, %v898
      %v1115 = vpack.c.b16 %v926, %v899
      %v1116 = vpack.c.b16 %v927, %v900
      %v1117 = vpack.c.b16 %v928, %v901
      %v1118 = vpack.c.b16 %v929, %v902
      %v1119 = vpack.c.b16 %v930, %v903
      %v1120 = vpack.c.b16 %v958, %v931
      %v1121 = vpack.c.b16 %v959, %v932
      %v1122 = vpack.c.b16 %v960, %v933
      %v1123 = vpack.c.b16 %v961, %v934
      %v1124 = vpack.c.b16 %v962, %v935
      %v1125 = vpack.c.b16 %v963, %v936
      %v1126 = vpack.c.b16 %v964, %v937
      %v1127 = vpack.c.b16 %v965, %v938
      %v1128 = vpack.c.b16 %v966, %v939
      %v1129 = vpack.c.b16 %v967, %v940
      %v1130 = vpack.c.b16 %v968, %v941
      %v1131 = vpack.c.b16 %v969, %v942
      %v1132 = vpack.c.b16 %v970, %v943
      %v1133 = vpack.c.b16 %v971, %v944
      %v1134 = vpack.c.b16 %v972, %v945
      %v1135 = vpack.c.b16 %v973, %v946
      %v1136 = vpack.c.b16 %v974, %v947
      %v1137 = vpack.c.b16 %v975, %v948
      %v1138 = vpack.c.b16 %v976, %v949
      %v1139 = vpack.c.b16 %v977, %v950
      %v1140 = vpack.c.b16 %v978, %v951
      %v1141 = vpack.c.b16 %v979, %v952
      %v1142 = vpack.c.b16 %v980, %v953
      %v1143 = vpack.c.b16 %v981, %v954
      %v1144 = vpack.c.b16 %v982, %v955
      %v1145 = vpack.c.b16 %v983, %v956
      %v1146 = vpack.c.b16 %v984, %v957
      %v1147 = vpack.c.b16 %v1012, %v985
      %v1148 = vpack.c.b16 %v1013, %v986
      %v1149 = vpack.c.b16 %v1014, %v987
      %v1150 = vpack.c.b16 %v1015, %v988
      %v1151 = vpack.c.b16 %v1016, %v989
      %v1152 = vpack.c.b16 %v1017, %v990
      %v1153 = vpack.c.b16 %v1018, %v991
      %v1154 = vpack.c.b16 %v1019, %v992
      %v1155 = vpack.c.b16 %v1020, %v993
      %v1156 = vpack.c.b16 %v1021, %v994
      %v1157 = vpack.c.b16 %v1022, %v995
      %v1158 = vpack.c.b16 %v1023, %v996
      %v1159 = vpack.c.b16 %v1024, %v997
      %v1160 = vpack.c.b16 %v1025, %v998
      %v1161 = vpack.c.b16 %v1026, %v999
      %v1162 = vpack.c.b16 %v1027, %v1000
      %v1163 = vpack.c.b16 %v1028, %v1001
      %v1164 = vpack.c.b16 %v1029, %v1002
      %v1165 = vpack.c.b16 %v1030, %v1003
      %v1166 = vpack.c.b16 %v1031, %v1004
      %v1167 = vpack.c.b16 %v1032, %v1005
      %v1168 = vpack.c.b16 %v1033, %v1006
      %v1169 = vpack.c.b16 %v1034, %v1007
      %v1170 = vpack.c.b16 %v1035, %v1008
      %v1171 = vpack.c.b16 %v1036, %v1009
      %v1172 = vpack.c.b16 %v1037, %v1010
      %v1173 = vpack.c.b16 %v1038, %v1011
      %v1174 = vpack.c.b16 %v1066, %v1039
      %v1175 = vpack.c.b16 %v1067, %v1040
      %v1176 = vpack.c.b16 %v1068, %v1041
      %v1177 = vpack.c.b16 %v1069, %v1042
      %v1178 = vpack.c.b16 %v1070, %v1043
      %v1179 = vpack.c.b16 %v1071, %v1044
      %v1180 = vpack.c.b16 %v1072, %v1045
      %v1181 = vpack.c.b16 %v1073, %v1046
      %v1182 = vpack.c.b16 %v1074, %v1047
      %v1183 = vpack.c.b16 %v1075, %v1048
      %v1184 = vpack.c.b16 %v1076, %v1049
      %v1185 = vpack.c.b16 %v1077, %v1050
      %v1186 = vpack.c.b16 %v1078, %v1051
      %v1187 = vpack.c.b16 %v1079, %v1052
      %v1188 = vpack.c.b16 %v1080, %v1053
      %v1189 = vpack.c.b16 %v1081, %v1054
      %v1190 = vpack.c.b16 %v1082, %v1055
      %v1191 = vpack.c.b16 %v1083, %v1056
      %v1192 = vpack.c.b16 %v1084, %v1057
      %v1193 = vpack.c.b16 %v1085, %v1058
      %v1194 = vpack.c.b16 %v1086, %v1059
      %v1195 = vpack.c.b16 %v1087, %v1060
      %v1196 = vpack.c.b16 %v1088, %v1061
      %v1197 = vpack.c.b16 %v1089, %v1062
      %v1198 = vpack.c.b16 %v1090, %v1063
      %v1199 = vpack.c.b16 %v1091, %v1064
      %v1200 = vpack.c.b16 %v1092, %v1065
      %v1741 = vunpack.c.l.b16 %v326
      %v1742 = vunpack.c.l.b16 %v327
      %v1743 = vunpack.c.l.b16 %v328
      %v1744 = vunpack.c.l.b16 %v329
      %v1745 = vunpack.c.l.b16 %v330
      %v1746 = vunpack.c.l.b16 %v331
      %v1747 = vunpack.c.l.b16 %v332
      %v1748 = vunpack.c.l.b16 %v333
      %v1749 = vunpack.c.l.b16 %v334
      %v1750 = vunpack.c.l.b16 %v335
      %v1751 = vunpack.c.l.b16 %v336
      %v1752 = vunpack.c.l.b16 %v337
      %v1753 = vunpack.c.l.b16 %v338
      %v1754 = vunpack.c.l.b16 %v339
      %v1755 = vunpack.c.l.b16 %v340
      %v1756 = vunpack.c.l.b16 %v341
      %v1757 = vunpack.c.l.b16 %v342
      %v1758 = vunpack.c.l.b16 %v343
      %v1759 = vunpack.c.l.b16 %v344
      %v1760 = vunpack.c.l.b16 %v345
      %v1761 = vunpack.c.l.b16 %v346
      %v1762 = vunpack.c.l.b16 %v347
      %v1763 = vunpack.c.l.b16 %v348
      %v1764 = vunpack.c.l.b16 %v349
      %v1765 = vunpack.c.l.b16 %v350
      %v1766 = vunpack.c.l.b16 %v351
      %v1767 = vunpack.c.l.b16 %v352
      %v1768 = vunpack.c.l.b16 %v353
      %v1769 = vunpack.c.l.b16 %v354
      %v1770 = vunpack.c.l.b16 %v355
      %v1771 = vunpack.c.l.b16 %v356
      %v1772 = vunpack.c.l.b16 %v357
      %v1773 = vunpack.c.l.b16 %v358
      %v1774 = vunpack.c.l.b16 %v359
      %v1775 = vunpack.c.l.b16 %v360
      %v1776 = vunpack.c.l.b16 %v361
      %v1777 = vunpack.c.l.b16 %v362
      %v1778 = vunpack.c.l.b16 %v363
      %v1779 = vunpack.c.l.b16 %v364
      %v1780 = vunpack.c.l.b16 %v365
      %v1781 = vunpack.c.l.b16 %v366
      %v1782 = vunpack.c.l.b16 %v367
      %v1783 = vunpack.c.l.b16 %v368
      %v1784 = vunpack.c.l.b16 %v369
      %v1785 = vunpack.c.l.b16 %v370
      %v1786 = vunpack.c.l.b16 %v371
      %v1787 = vunpack.c.l.b16 %v372
      %v1788 = vunpack.c.l.b16 %v373
      %v1789 = vunpack.c.l.b16 %v374
      %v1790 = vunpack.c.l.b16 %v375
      %v1791 = vunpack.c.l.b16 %v376
      %v1792 = vunpack.c.l.b16 %v377
      %v1793 = vunpack.c.l.b16 %v378
      %v1794 = vunpack.c.l.b16 %v379
      %v1795 = vunpack.c.l.b16 %v380
      %v1796 = vunpack.c.l.b16 %v381
      %v1797 = vunpack.c.l.b16 %v382
      %v1798 = vunpack.c.l.b16 %v383
      %v1799 = vunpack.c.l.b16 %v384
      %v1800 = vunpack.c.l.b16 %v385
      %v1801 = vunpack.c.l.b16 %v386
      %v1802 = vunpack.c.l.b16 %v387
      %v1803 = vunpack.c.l.b16 %v388
      %v1804 = vunpack.c.l.b16 %v389
      %v1805 = vunpack.c.l.b16 %v390
      %v1806 = vunpack.c.l.b16 %v391
      %v1807 = vunpack.c.l.b16 %v392
      %v1808 = vunpack.c.l.b16 %v393
      %v1809 = vunpack.c.l.b16 %v394
      %v1810 = vunpack.c.l.b16 %v395
      %v1811 = vunpack.c.l.b16 %v396
      %v1812 = vunpack.c.l.b16 %v397
      %v1813 = vunpack.c.l.b16 %v398
      %v1814 = vunpack.c.l.b16 %v399
      %v1815 = vunpack.c.l.b16 %v400
      %v1816 = vunpack.c.l.b16 %v401
      %v1817 = vunpack.c.l.b16 %v402
      %v1818 = vunpack.c.l.b16 %v403
      %v1819 = vunpack.c.l.b16 %v404
      %v1820 = vunpack.c.l.b16 %v405
      %v1821 = vunpack.c.l.b16 %v406
      %v1822 = vunpack.c.l.b16 %v407
      %v1823 = vunpack.c.l.b16 %v408
      %v1824 = vunpack.c.l.b16 %v409
      %v1825 = vunpack.c.l.b16 %v410
      %v1826 = vunpack.c.l.b16 %v411
      %v1827 = vunpack.c.l.b16 %v412
      %v1828 = vunpack.c.l.b16 %v413
      %v1829 = vunpack.c.l.b16 %v414
      %v1830 = vunpack.c.l.b16 %v415
      %v1831 = vunpack.c.l.b16 %v416
      %v1832 = vunpack.c.l.b16 %v417
      %v1833 = vunpack.c.l.b16 %v418
      %v1834 = vunpack.c.l.b16 %v419
      %v1835 = vunpack.c.l.b16 %v420
      %v1836 = vunpack.c.l.b16 %v421
      %v1837 = vunpack.c.l.b16 %v422
      %v1838 = vunpack.c.l.b16 %v423
      %v1839 = vunpack.c.l.b16 %v424
      %v1840 = vunpack.c.l.b16 %v425
      %v1841 = vunpack.c.l.b16 %v426
      %v1842 = vunpack.c.l.b16 %v427
      %v1843 = vunpack.c.l.b16 %v428
      %v1844 = vunpack.c.l.b16 %v429
      %v1845 = vunpack.c.l.b16 %v430
      %v1846 = vunpack.c.l.b16 %v431
      %v1847 = vunpack.c.l.b16 %v432
      %v1848 = vunpack.c.l.b16 %v433
      %v1849 = vunpack.c.l.b16 %v434
      %v1850 = vunpack.c.l.b16 %v435
      %v1851 = vunpack.c.l.b16 %v436
      %v1852 = vunpack.c.l.b16 %v437
      %v1853 = vunpack.c.l.b16 %v438
      %v1854 = vunpack.c.l.b16 %v439
      %v1855 = vunpack.c.l.b16 %v440
      %v1856 = vunpack.c.l.b16 %v441
      %v1857 = vunpack.c.l.b16 %v442
      %v1858 = vunpack.c.l.b16 %v443
      %v1859 = vunpack.c.l.b16 %v444
      %v1860 = vunpack.c.l.b16 %v445
      %v1861 = vunpack.c.l.b16 %v446
      %v1862 = vunpack.c.l.b16 %v447
      %v1863 = vunpack.c.l.b16 %v448
      %v1864 = vunpack.c.l.b16 %v449
      %v1865 = vunpack.c.l.b16 %v450
      %v1866 = vunpack.c.l.b16 %v451
      %v1867 = vunpack.c.l.b16 %v452
      %v1868 = vunpack.c.l.b16 %v453
      %v1869 = vunpack.c.l.b16 %v454
      %v1870 = vunpack.c.l.b16 %v455
      %v1871 = vunpack.c.l.b16 %v456
      %v1872 = vunpack.c.l.b16 %v457
      %v1873 = vunpack.c.l.b16 %v458
      %v1874 = vunpack.c.l.b16 %v459
      %v1875 = vunpack.c.l.b16 %v460
      %v1876 = vunpack.c.l.b16 %v461
      %v1877 = vunpack.c.l.b16 %v462
      %v1878 = vunpack.c.l.b16 %v463
      %v1879 = vunpack.c.l.b16 %v464
      %v1880 = vunpack.c.l.b16 %v465
      %v1881 = vunpack.c.l.b16 %v466
      %v1882 = vunpack.c.l.b16 %v467
      %v1883 = vunpack.c.l.b16 %v468
      %v1884 = vunpack.c.l.b16 %v469
      %v1885 = vunpack.c.l.b16 %v470
      %v1886 = vunpack.c.l.b16 %v471
      %v1887 = vunpack.c.l.b16 %v472
      %v1888 = vunpack.c.l.b16 %v473
      %v1889 = vunpack.c.l.b16 %v474
      %v1890 = vunpack.c.l.b16 %v475
      %v1891 = vunpack.c.l.b16 %v476
      %v1892 = vunpack.c.l.b16 %v477
      %v1893 = vunpack.c.l.b16 %v478
      %v1894 = vunpack.c.l.b16 %v479
      %v1895 = vunpack.c.l.b16 %v480
      %v1896 = vunpack.c.l.b16 %v481
      %v1897 = vunpack.c.l.b16 %v482
      %v1898 = vunpack.c.l.b16 %v483
      %v1899 = vunpack.c.l.b16 %v484
      %v1900 = vunpack.c.l.b16 %v485
      %v1901 = vunpack.c.l.b16 %v486
      %v1902 = vunpack.c.l.b16 %v487
      %v1903 = vunpack.c.l.b16 %v488
      %v1904 = vunpack.c.l.b16 %v489
      %v1905 = vunpack.c.l.b16 %v490
      %v1906 = vunpack.c.l.b16 %v491
      %v1907 = vunpack.c.l.b16 %v492
      %v1908 = vunpack.c.l.b16 %v493
      %v1909 = vunpack.c.l.b16 %v494
      %v1910 = vunpack.c.l.b16 %v495
      %v1911 = vunpack.c.l.b16 %v496
      %v1912 = vunpack.c.l.b16 %v497
      %v1913 = vunpack.c.l.b16 %v498
      %v1914 = vunpack.c.l.b16 %v499
      %v1915 = vunpack.c.l.b16 %v500
      %v1916 = vunpack.c.l.b16 %v501
      %v1917 = vunpack.c.l.b16 %v502
      %v1918 = vunpack.c.l.b16 %v503
      %v1919 = vunpack.c.l.b16 %v504
      %v1920 = vunpack.c.l.b16 %v505
      %v1921 = vunpack.c.l.b16 %v506
      %v1922 = vunpack.c.l.b16 %v507
      %v1923 = vunpack.c.l.b16 %v508
      %v1924 = vunpack.c.l.b16 %v509
      %v1925 = vunpack.c.l.b16 %v510
      %v1926 = vunpack.c.l.b16 %v511
      %v1927 = vunpack.c.l.b16 %v512
      %v1928 = vunpack.c.l.b16 %v513
      %v1929 = vunpack.c.l.b16 %v514
      %v1930 = vunpack.c.l.b16 %v515
      %v1931 = vunpack.c.l.b16 %v516
      %v1932 = vunpack.c.l.b16 %v517
      %v1933 = vunpack.c.l.b16 %v518
      %v1934 = vunpack.c.l.b16 %v519
      %v1935 = vunpack.c.l.b16 %v520
      %v1936 = vunpack.c.l.b16 %v521
      %v1937 = vunpack.c.l.b16 %v522
      %v1938 = vunpack.c.l.b16 %v523
      %v1939 = vunpack.c.l.b16 %v524
      %v1940 = vunpack.c.l.b16 %v525
      %v1941 = vunpack.c.l.b16 %v526
      %v1942 = vunpack.c.l.b16 %v527
      %v1943 = vunpack.c.l.b16 %v528
      %v1944 = vunpack.c.l.b16 %v529
      %v1945 = vunpack.c.l.b16 %v530
      %v1946 = vunpack.c.l.b16 %v531
      %v1947 = vunpack.c.l.b16 %v532
      %v1948 = vunpack.c.l.b16 %v533
      %v1949 = vunpack.c.l.b16 %v534
      %v1950 = vunpack.c.l.b16 %v535
      %v1951 = vunpack.c.l.b16 %v536
      %v1952 = vunpack.c.l.b16 %v537
      %v1953 = vunpack.c.l.b16 %v538
      %v1954 = vunpack.c.l.b16 %v539
      %v1955 = vunpack.c.l.b16 %v540
      %v1956 = vunpack.c.l.b16 %v541
      %v1957 = vunpack.c.l.b16 %v542
      %v1958 = vunpack.c.l.b16 %v543
      %v1959 = vunpack.c.l.b16 %v544
      %v1960 = vunpack.c.l.b16 %v545
      %v1961 = vunpack.c.l.b16 %v546
      %v1962 = vunpack.c.l.b16 %v547
      %v1963 = vunpack.c.l.b16 %v548
      %v1964 = vunpack.c.l.b16 %v549
      %v1965 = vunpack.c.l.b16 %v550
      %v1966 = vunpack.c.l.b16 %v551
      %v1967 = vunpack.c.l.b16 %v552
      %v1968 = vunpack.c.l.b16 %v553
      %v1969 = vunpack.c.l.b16 %v554
      %v1970 = vunpack.c.l.b16 %v555
      %v1971 = vunpack.c.l.b16 %v556
      %v1972 = vunpack.c.l.b16 %v557
      %v1973 = vunpack.c.l.b16 %v558
      %v1974 = vunpack.c.l.b16 %v559
      %v1975 = vunpack.c.l.b16 %v560
      %v1976 = vunpack.c.l.b16 %v561
      %v1977 = vunpack.c.l.b16 %v562
      %v1978 = vunpack.c.l.b16 %v563
      %v1979 = vunpack.c.l.b16 %v564
      %v1980 = vunpack.c.l.b16 %v565
      %v1981 = vunpack.c.l.b16 %v566
      %v1982 = vunpack.c.l.b16 %v567
      %v1983 = vunpack.c.l.b16 %v568
      %v1984 = vunpack.c.l.b16 %v569
      %v1985 = vunpack.c.l.b16 %v570
      %v1986 = vunpack.c.l.b16 %v571
      %v1987 = vunpack.c.l.b16 %v572
      %v1988 = vunpack.c.l.b16 %v573
      %v1989 = vunpack.c.l.b16 %v574
      %v1990 = vunpack.c.l.b16 %v575
      %v1991 = vunpack.c.l.b16 %v576
      %v1992 = vunpack.c.l.b16 %v577
      %v1993 = vunpack.c.l.b16 %v578
      %v1994 = vunpack.c.l.b16 %v579
      %v1995 = vunpack.c.l.b16 %v580
      %v1996 = vunpack.c.l.b16 %v581
      %v1997 = vunpack.c.l.b16 %v582
      %v1998 = vunpack.c.l.b16 %v583
      %v1999 = vunpack.c.l.b16 %v584
      %v2000 = vunpack.c.l.b16 %v585
      %v2001 = vunpack.c.l.b16 %v586
      %v2002 = vunpack.c.l.b16 %v587
      %v2003 = vunpack.c.l.b16 %v588
      %v2004 = vunpack.c.l.b16 %v589
      %v2005 = vunpack.c.l.b16 %v590
      %v2006 = vunpack.c.l.b16 %v591
      %v2007 = vunpack.c.l.b16 %v592
      %v2008 = vunpack.c.l.b16 %v593
      %v2009 = vunpack.c.l.b16 %v594
      %v2010 = vunpack.c.l.b16 %v595
      %v2011 = vunpack.c.l.b16 %v596
      %v2012 = vunpack.c.l.b16 %v597
      %v2013 = vunpack.c.l.b16 %v598
      %v2014 = vunpack.c.l.b16 %v599
      %v2015 = vunpack.c.l.b16 %v600
      %v2016 = vunpack.c.l.b16 %v601
      %v2017 = vunpack.c.l.b16 %v602
      %v2018 = vunpack.c.l.b16 %v603
      %v2019 = vunpack.c.l.b16 %v604
      %v2020 = vunpack.c.l.b16 %v605
      %v2021 = vunpack.c.l.b16 %v606
      %v2022 = vunpack.c.l.b16 %v607
      %v2023 = vunpack.c.l.b16 %v608
      %v2024 = vunpack.c.l.b16 %v609
      %v2025 = vunpack.c.l.b16 %v610
      %v2026 = vunpack.c.l.b16 %v611
      %v2027 = vunpack.c.l.b16 %v612
      %v2028 = vunpack.c.l.b16 %v613
      %v2029 = vunpack.c.l.b16 %v614
      %v2030 = vunpack.c.l.b16 %v615
      %v2031 = vunpack.c.l.b16 %v616
      %v2032 = vunpack.c.l.b16 %v617
      %v2033 = vunpack.c.l.b16 %v618
      %v2034 = vunpack.c.l.b16 %v619
      %v2035 = vunpack.c.l.b16 %v620
      %v2036 = vunpack.c.l.b16 %v621
      %v2037 = vunpack.c.l.b16 %v622
      %v2038 = vunpack.c.l.b16 %v623
      %v2039 = vunpack.c.l.b16 %v624
      %v2040 = vunpack.c.l.b16 %v625
      %v2041 = vunpack.c.l.b16 %v626
      %v2042 = vunpack.c.l.b16 %v627
      %v2043 = vunpack.c.l.b16 %v628
      %v2044 = vunpack.c.l.b16 %v629
      %v2045 = vunpack.c.l.b16 %v630
      %v2046 = vunpack.c.l.b16 %v631
      %v2047 = vunpack.c.l.b16 %v632
      %v2048 = vunpack.c.l.b16 %v633
      %v2049 = vunpack.c.l.b16 %v634
      %v2050 = vunpack.c.l.b16 %v635
      %v2051 = vunpack.c.l.b16 %v636
      %v2052 = vunpack.c.l.b16 %v637
      %v2053 = vunpack.c.l.b16 %v638
      %v2054 = vunpack.c.l.b16 %v639
      %v2055 = vunpack.c.l.b16 %v640
      %v2056 = vunpack.c.l.b16 %v641
      %v2057 = vunpack.c.l.b16 %v642
      %v2058 = vunpack.c.l.b16 %v643
      %v2059 = vunpack.c.l.b16 %v644
      %v2060 = vunpack.c.l.b16 %v645
      %v2061 = vunpack.c.l.b16 %v646
      %v2062 = vunpack.c.l.b16 %v647
      %v2063 = vunpack.c.l.b16 %v648
      %v2064 = vunpack.c.l.b16 %v649
      %v2065 = vunpack.c.l.b16 %v650
      %v2066 = vunpack.c.l.b16 %v651
      %v2067 = vunpack.c.l.b16 %v652
      %v2068 = vunpack.c.l.b16 %v653
      %v2069 = vunpack.c.l.b16 %v654
      %v2070 = vunpack.c.l.b16 %v655
      %v2071 = vunpack.c.l.b16 %v656
      %v2072 = vunpack.c.l.b16 %v657
      %v2073 = vunpack.c.l.b16 %v658
      %v2074 = vunpack.c.l.b16 %v659
      %v2075 = vunpack.c.l.b16 %v660
      %v2076 = vunpack.c.l.b16 %v661
      %v2077 = vunpack.c.l.b16 %v662
      %v2078 = vunpack.c.l.b16 %v663
      %v2079 = vunpack.c.l.b16 %v664
      %v2080 = vunpack.c.l.b16 %v665
      %v2081 = vunpack.c.l.b16 %v666
      %v2082 = vunpack.c.l.b16 %v667
      %v2083 = vunpack.c.l.b16 %v668
      %v2084 = vunpack.c.l.b16 %v669
      %v2085 = vunpack.c.l.b16 %v670
      %v2086 = vunpack.c.l.b16 %v671
      %v2087 = vunpack.c.l.b16 %v672
      %v2088 = vunpack.c.l.b16 %v673
      %v2089 = vunpack.c.l.b16 %v674
      %v2090 = vunpack.c.l.b16 %v675
      %v2091 = vunpack.c.l.b16 %v676
      %v2092 = vunpack.c.l.b16 %v677
      %v2093 = vunpack.c.l.b16 %v678
      %v2094 = vunpack.c.l.b16 %v679
      %v2095 = vunpack.c.l.b16 %v680
      %v2096 = vunpack.c.l.b16 %v681
      %v2097 = vunpack.c.l.b16 %v682
      %v2098 = vunpack.c.l.b16 %v683
      %v2099 = vunpack.c.l.b16 %v684
      %v2100 = vunpack.c.l.b16 %v685
      %v2101 = vunpack.c.l.b16 %v686
      %v2102 = vunpack.c.l.b16 %v687
      %v2103 = vunpack.c.l.b16 %v688
      %v2104 = vunpack.c.l.b16 %v689
      %v2105 = vunpack.c.l.b16 %v690
      %v2106 = vunpack.c.l.b16 %v691
      %v2107 = vunpack.c.l.b16 %v692
      %v2108 = vunpack.c.l.b16 %v693
      %v2109 = vunpack.c.l.b16 %v694
      %v2110 = vunpack.c.l.b16 %v695
      %v2111 = vunpack.c.l.b16 %v696
      %v2112 = vunpack.c.l.b16 %v697
      %v2113 = vunpack.c.l.b16 %v698
      %v2114 = vunpack.c.l.b16 %v699
      %v2115 = vunpack.c.l.b16 %v700
      %v2116 = vunpack.c.l.b16 %v701
      %v2117 = vunpack.c.l.b16 %v702
      %v2118 = vunpack.c.l.b16 %v703
      %v2119 = vunpack.c.l.b16 %v704
      %v2120 = vunpack.c.l.b16 %v705
      %v2121 = vunpack.c.l.b16 %v706
      %v2122 = vunpack.c.l.b16 %v707
      %v2123 = vunpack.c.l.b16 %v708
      %v2124 = vunpack.c.l.b16 %v709
      %v2125 = vunpack.c.l.b16 %v710
      %v2126 = vunpack.c.l.b16 %v711
      %v2127 = vunpack.c.l.b16 %v712
      %v2128 = vunpack.c.l.b16 %v713
      %v2129 = vunpack.c.l.b16 %v714
      %v2130 = vunpack.c.l.b16 %v715
      %v2131 = vunpack.c.l.b16 %v716
      %v2132 = vunpack.c.l.b16 %v717
      %v2133 = vunpack.c.l.b16 %v718
      %v2134 = vunpack.c.l.b16 %v719
      %v2135 = vunpack.c.l.b16 %v720
      %v2136 = vunpack.c.l.b16 %v721
      %v2137 = vunpack.c.l.b16 %v722
      %v2138 = vunpack.c.l.b16 %v723
      %v2139 = vunpack.c.l.b16 %v724
      %v2140 = vunpack.c.l.b16 %v725
      %v2141 = vunpack.c.l.b16 %v726
      %v2142 = vunpack.c.l.b16 %v727
      %v2143 = vunpack.c.l.b16 %v728
      %v2144 = vunpack.c.l.b16 %v729
      %v2145 = vunpack.c.l.b16 %v730
      %v2146 = vunpack.c.l.b16 %v731
      %v2147 = vunpack.c.l.b16 %v732
      %v2148 = vunpack.c.l.b16 %v733
      %v2149 = vunpack.c.l.b16 %v734
      %v2150 = vunpack.c.l.b16 %v735
      %v2151 = vunpack.c.l.b16 %v736
      %v2152 = vunpack.c.l.b16 %v737
      %v2153 = vunpack.c.l.b16 %v738
      %v2154 = vunpack.c.l.b16 %v739
      %v2155 = vunpack.c.l.b16 %v740
      %v2156 = vunpack.c.l.b16 %v741
      %v2157 = vunpack.c.l.b16 %v742
      %v2158 = vunpack.c.l.b16 %v743
      %v2159 = vunpack.c.l.b16 %v744
      %v2160 = vunpack.c.l.b16 %v745
      %v2161 = vunpack.c.l.b16 %v746
      %v2162 = vunpack.c.l.b16 %v747
      %v2163 = vunpack.c.l.b16 %v748
      %v2164 = vunpack.c.l.b16 %v749
      %v2165 = vunpack.c.l.b16 %v750
      %v2166 = vunpack.c.l.b16 %v751
      %v2167 = vunpack.c.l.b16 %v752
      %v2168 = vunpack.c.l.b16 %v753
      %v2169 = vunpack.c.l.b16 %v754
      %v2170 = vunpack.c.l.b16 %v755
      %v2171 = vunpack.c.l.b16 %v756
      %v2172 = vunpack.c.l.b16 %v757
      %v2173 = vpack.c.b16 %v1742, %v1741
      %v2174 = vpack.c.b16 %v1744, %v1743
      %v2175 = vpack.c.b16 %v1746, %v1745
      %v2176 = vpack.c.b16 %v1748, %v1747
      %v2177 = vpack.c.b16 %v1750, %v1749
      %v2178 = vpack.c.b16 %v1752, %v1751
      %v2179 = vpack.c.b16 %v1754, %v1753
      %v2180 = vpack.c.b16 %v1756, %v1755
      %v2181 = vpack.c.b16 %v1758, %v1757
      %v2182 = vpack.c.b16 %v1760, %v1759
      %v2183 = vpack.c.b16 %v1762, %v1761
      %v2184 = vpack.c.b16 %v1764, %v1763
      %v2185 = vpack.c.b16 %v1766, %v1765
      %v2186 = vpack.c.b16 %v1768, %v1767
      %v2187 = vpack.c.b16 %v1770, %v1769
      %v2188 = vpack.c.b16 %v1772, %v1771
      %v2189 = vpack.c.b16 %v1774, %v1773
      %v2190 = vpack.c.b16 %v1776, %v1775
      %v2191 = vpack.c.b16 %v1778, %v1777
      %v2192 = vpack.c.b16 %v1780, %v1779
      %v2193 = vpack.c.b16 %v1782, %v1781
      %v2194 = vpack.c.b16 %v1784, %v1783
      %v2195 = vpack.c.b16 %v1786, %v1785
      %v2196 = vpack.c.b16 %v1788, %v1787
      %v2197 = vpack.c.b16 %v1790, %v1789
      %v2198 = vpack.c.b16 %v1792, %v1791
      %v2199 = vpack.c.b16 %v1794, %v1793
      %v2200 = vpack.c.b16 %v1796, %v1795
      %v2201 = vpack.c.b16 %v1798, %v1797
      %v2202 = vpack.c.b16 %v1800, %v1799
      %v2203 = vpack.c.b16 %v1802, %v1801
      %v2204 = vpack.c.b16 %v1804, %v1803
      %v2205 = vpack.c.b16 %v1806, %v1805
      %v2206 = vpack.c.b16 %v1808, %v1807
      %v2207 = vpack.c.b16 %v1810, %v1809
      %v2208 = vpack.c.b16 %v1812, %v1811
      %v2209 = vpack.c.b16 %v1814, %v1813
      %v2210 = vpack.c.b16 %v1816, %v1815
      %v2211 = vpack.c.b16 %v1818, %v1817
      %v2212 = vpack.c.b16 %v1820, %v1819
      %v2213 = vpack.c.b16 %v1822, %v1821
      %v2214 = vpack.c.b16 %v1824, %v1823
      %v2215 = vpack.c.b16 %v1826, %v1825
      %v2216 = vpack.c.b16 %v1828, %v1827
      %v2217 = vpack.c.b16 %v1830, %v1829
      %v2218 = vpack.c.b16 %v1832, %v1831
      %v2219 = vpack.c.b16 %v1834, %v1833
      %v2220 = vpack.c.b16 %v1836, %v1835
      %v2221 = vpack.c.b16 %v1838, %v1837
      %v2222 = vpack.c.b16 %v1840, %v1839
      %v2223 = vpack.c.b16 %v1842, %v1841
      %v2224 = vpack.c.b16 %v1844, %v1843
      %v2225 = vpack.c.b16 %v1846, %v1845
      %v2226 = vpack.c.b16 %v1848, %v1847
      %v2227 = vpack.c.b16 %v1850, %v1849
      %v2228 = vpack.c.b16 %v1852, %v1851
      %v2229 = vpack.c.b16 %v1854, %v1853
      %v2230 = vpack.c.b16 %v1856, %v1855
      %v2231 = vpack.c.b16 %v1858, %v1857
      %v2232 = vpack.c.b16 %v1860, %v1859
      %v2233 = vpack.c.b16 %v1862, %v1861
      %v2234 = vpack.c.b16 %v1864, %v1863
      %v2235 = vpack.c.b16 %v1866, %v1865
      %v2236 = vpack.c.b16 %v1868, %v1867
      %v2237 = vpack.c.b16 %v1870, %v1869
      %v2238 = vpack.c.b16 %v1872, %v1871
      %v2239 = vpack.c.b16 %v1874, %v1873
      %v2240 = vpack.c.b16 %v1876, %v1875
      %v2241 = vpack.c.b16 %v1878, %v1877
      %v2242 = vpack.c.b16 %v1880, %v1879
      %v2243 = vpack.c.b16 %v1882, %v1881
      %v2244 = vpack.c.b16 %v1884, %v1883
      %v2245 = vpack.c.b16 %v1886, %v1885
      %v2246 = vpack.c.b16 %v1888, %v1887
      %v2247 = vpack.c.b16 %v1890, %v1889
      %v2248 = vpack.c.b16 %v1892, %v1891
      %v2249 = vpack.c.b16 %v1894, %v1893
      %v2250 = vpack.c.b16 %v1896, %v1895
      %v2251 = vpack.c.b16 %v1898, %v1897
      %v2252 = vpack.c.b16 %v1900, %v1899
      %v2253 = vpack.c.b16 %v1902, %v1901
      %v2254 = vpack.c.b16 %v1904, %v1903
      %v2255 = vpack.c.b16 %v1906, %v1905
      %v2256 = vpack.c.b16 %v1908, %v1907
      %v2257 = vpack.c.b16 %v1910, %v1909
      %v2258 = vpack.c.b16 %v1912, %v1911
      %v2259 = vpack.c.b16 %v1914, %v1913
      %v2260 = vpack.c.b16 %v1916, %v1915
      %v2261 = vpack.c.b16 %v1918, %v1917
      %v2262 = vpack.c.b16 %v1920, %v1919
      %v2263 = vpack.c.b16 %v1922, %v1921
      %v2264 = vpack.c.b16 %v1924, %v1923
      %v2265 = vpack.c.b16 %v1926, %v1925
      %v2266 = vpack.c.b16 %v1928, %v1927
      %v2267 = vpack.c.b16 %v1930, %v1929
      %v2268 = vpack.c.b16 %v1932, %v1931
      %v2269 = vpack.c.b16 %v1934, %v1933
      %v2270 = vpack.c.b16 %v1936, %v1935
      %v2271 = vpack.c.b16 %v1938, %v1937
      %v2272 = vpack.c.b16 %v1940, %v1939
      %v2273 = vpack.c.b16 %v1942, %v1941
      %v2274 = vpack.c.b16 %v1944, %v1943
      %v2275 = vpack.c.b16 %v1946, %v1945
      %v2276 = vpack.c.b16 %v1948, %v1947
      %v2277 = vpack.c.b16 %v1950, %v1949
      %v2278 = vpack.c.b16 %v1952, %v1951
      %v2279 = vpack.c.b16 %v1954, %v1953
      %v2280 = vpack.c.b16 %v1956, %v1955
      %v2281 = vpack.c.b16 %v1958, %v1957
      %v2282 = vpack.c.b16 %v1960, %v1959
      %v2283 = vpack.c.b16 %v1962, %v1961
      %v2284 = vpack.c.b16 %v1964, %v1963
      %v2285 = vpack.c.b16 %v1966, %v1965
      %v2286 = vpack.c.b16 %v1968, %v1967
      %v2287 = vpack.c.b16 %v1970, %v1969
      %v2288 = vpack.c.b16 %v1972, %v1971
      %v2289 = vpack.c.b16 %v1974, %v1973
      %v2290 = vpack.c.b16 %v1976, %v1975
      %v2291 = vpack.c.b16 %v1978, %v1977
      %v2292 = vpack.c.b16 %v1980, %v1979
      %v2293 = vpack.c.b16 %v1982, %v1981
      %v2294 = vpack.c.b16 %v1984, %v1983
      %v2295 = vpack.c.b16 %v1986, %v1985
      %v2296 = vpack.c.b16 %v1988, %v1987
      %v2297 = vpack.c.b16 %v1990, %v1989
      %v2298 = vpack.c.b16 %v1992, %v1991
      %v2299 = vpack.c.b16 %v1994, %v1993
      %v2300 = vpack.c.b16 %v1996, %v1995
      %v2301 = vpack.c.b16 %v1998, %v1997
      %v2302 = vpack.c.b16 %v2000, %v1999
      %v2303 = vpack.c.b16 %v2002, %v2001
      %v2304 = vpack.c.b16 %v2004, %v2003
      %v2305 = vpack.c.b16 %v2006, %v2005
      %v2306 = vpack.c.b16 %v2008, %v2007
      %v2307 = vpack.c.b16 %v2010, %v2009
      %v2308 = vpack.c.b16 %v2012, %v2011
      %v2309 = vpack.c.b16 %v2014, %v2013
      %v2310 = vpack.c.b16 %v2016, %v2015
      %v2311 = vpack.c.b16 %v2018, %v2017
      %v2312 = vpack.c.b16 %v2020, %v2019
      %v2313 = vpack.c.b16 %v2022, %v2021
      %v2314 = vpack.c.b16 %v2024, %v2023
      %v2315 = vpack.c.b16 %v2026, %v2025
      %v2316 = vpack.c.b16 %v2028, %v2027
      %v2317 = vpack.c.b16 %v2030, %v2029
      %v2318 = vpack.c.b16 %v2032, %v2031
      %v2319 = vpack.c.b16 %v2034, %v2033
      %v2320 = vpack.c.b16 %v2036, %v2035
      %v2321 = vpack.c.b16 %v2038, %v2037
      %v2322 = vpack.c.b16 %v2040, %v2039
      %v2323 = vpack.c.b16 %v2042, %v2041
      %v2324 = vpack.c.b16 %v2044, %v2043
      %v2325 = vpack.c.b16 %v2046, %v2045
      %v2326 = vpack.c.b16 %v2048, %v2047
      %v2327 = vpack.c.b16 %v2050, %v2049
      %v2328 = vpack.c.b16 %v2052, %v2051
      %v2329 = vpack.c.b16 %v2054, %v2053
      %v2330 = vpack.c.b16 %v2056, %v2055
      %v2331 = vpack.c.b16 %v2058, %v2057
      %v2332 = vpack.c.b16 %v2060, %v2059
      %v2333 = vpack.c.b16 %v2062, %v2061
      %v2334 = vpack.c.b16 %v2064, %v2063
      %v2335 = vpack.c.b16 %v2066, %v2065
      %v2336 = vpack.c.b16 %v2068, %v2067
      %v2337 = vpack.c.b16 %v2070, %v2069
      %v2338 = vpack.c.b16 %v2072, %v2071
      %v2339 = vpack.c.b16 %v2074, %v2073
      %v2340 = vpack.c.b16 %v2076, %v2075
      %v2341 = vpack.c.b16 %v2078, %v2077
      %v2342 = vpack.c.b16 %v2080, %v2079
      %v2343 = vpack.c.b16 %v2082, %v2081
      %v2344 = vpack.c.b16 %v2084, %v2083
      %v2345 = vpack.c.b16 %v2086, %v2085
      %v2346 = vpack.c.b16 %v2088, %v2087
      %v2347 = vpack.c.b16 %v2090, %v2089
      %v2348 = vpack.c.b16 %v2092, %v2091
      %v2349 = vpack.c.b16 %v2094, %v2093
      %v2350 = vpack.c.b16 %v2096, %v2095
      %v2351 = vpack.c.b16 %v2098, %v2097
      %v2352 = vpack.c.b16 %v2100, %v2099
      %v2353 = vpack.c.b16 %v2102, %v2101
      %v2354 = vpack.c.b16 %v2104, %v2103
      %v2355 = vpack.c.b16 %v2106, %v2105
      %v2356 = vpack.c.b16 %v2108, %v2107
      %v2357 = vpack.c.b16 %v2110, %v2109
      %v2358 = vpack.c.b16 %v2112, %v2111
      %v2359 = vpack.c.b16 %v2114, %v2113
      %v2360 = vpack.c.b16 %v2116, %v2115
      %v2361 = vpack.c.b16 %v2118, %v2117
      %v2362 = vpack.c.b16 %v2120, %v2119
      %v2363 = vpack.c.b16 %v2122, %v2121
      %v2364 = vpack.c.b16 %v2124, %v2123
      %v2365 = vpack.c.b16 %v2126, %v2125
      %v2366 = vpack.c.b16 %v2128, %v2127
      %v2367 = vpack.c.b16 %v2130, %v2129
      %v2368 = vpack.c.b16 %v2132, %v2131
      %v2369 = vpack.c.b16 %v2134, %v2133
      %v2370 = vpack.c.b16 %v2136, %v2135
      %v2371 = vpack.c.b16 %v2138, %v2137
      %v2372 = vpack.c.b16 %v2140, %v2139
      %v2373 = vpack.c.b16 %v2142, %v2141
      %v2374 = vpack.c.b16 %v2144, %v2143
      %v2375 = vpack.c.b16 %v2146, %v2145
      %v2376 = vpack.c.b16 %v2148, %v2147
      %v2377 = vpack.c.b16 %v2150, %v2149
      %v2378 = vpack.c.b16 %v2152, %v2151
      %v2379 = vpack.c.b16 %v2154, %v2153
      %v2380 = vpack.c.b16 %v2156, %v2155
      %v2381 = vpack.c.b16 %v2158, %v2157
      %v2382 = vpack.c.b16 %v2160, %v2159
      %v2383 = vpack.c.b16 %v2162, %v2161
      %v2384 = vpack.c.b16 %v2164, %v2163
      %v2385 = vpack.c.b16 %v2166, %v2165
      %v2386 = vpack.c.b16 %v2168, %v2167
      %v2387 = vpack.c.b16 %v2170, %v2169
      %v2388 = vpack.c.b16 %v2172, %v2171
      %2605 = vmatprep.subr.bf16.mxu0 0
      %2606 = vmatpush1.bf16.msra.mxu0 %v2173
      %2607 = vmatprep.subr.bf16.mxu0 0
      %2608 = vmatpush1.bf16.msra.mxu0 %v2174
      %2609 = vmatprep.subr.bf16.mxu0 0
      %2610 = vmatpush1.bf16.msra.mxu0 %v2175
      %2611 = vmatprep.subr.bf16.mxu0 0
      %2612 = vmatpush1.bf16.msra.mxu0 %v2176
      %2613 = vmatprep.subr.bf16.mxu0 0
      %2614 = vmatpush1.bf16.msra.mxu0 %v2177
      %2615 = vmatprep.subr.bf16.mxu0 0
      %2616 = vmatpush1.bf16.msra.mxu0 %v2178
      %2617 = vmatprep.subr.bf16.mxu0 0
      %2618 = vmatpush1.bf16.msra.mxu0 %v2179
      %2619 = vmatprep.subr.bf16.mxu0 0
      %2620 = vmatpush1.bf16.msra.mxu0 %v2180
      %2621 = vmatprep.subr.bf16.mxu0 0
      %2622 = vmatpush1.bf16.msra.mxu0 %v2181
      %2623 = vmatprep.subr.bf16.mxu0 0
      %2624 = vmatpush1.bf16.msra.mxu0 %v2182
      %2625 = vmatprep.subr.bf16.mxu0 0
      %2626 = vmatpush1.bf16.msra.mxu0 %v2183
      %2627 = vmatprep.subr.bf16.mxu0 0
      %2628 = vmatpush1.bf16.msra.mxu0 %v2184
      %2629 = vmatprep.subr.bf16.mxu0 0
      %2630 = vmatpush1.bf16.msra.mxu0 %v2185
      %2631 = vmatprep.subr.bf16.mxu0 0
      %2632 = vmatpush1.bf16.msra.mxu0 %v2186
      %2633 = vmatprep.subr.bf16.mxu0 0
      %2634 = vmatpush1.bf16.msra.mxu0 %v2187
      %2635 = vmatprep.subr.bf16.mxu0 0
      %2636 = vmatpush1.bf16.msra.mxu0 %v2188
      %2637 = vmatprep.mubr.bf16.mxu0 %v1094
      %2638 = vmatmul.mubr.bf16.gmra.mrb[0].mxu0 %v1093
      %v2639 = vpop.f32.mrb[0].mxu0
      %v2640 = vadd.f32 %v763, %v2639
      %v2641 = vpop.f32.mrb[0].mxu0
      %v2642 = vpop.f32.mrb[0].mxu0
      %v2643 = vadd.f32 %v763, %v2642
      %v2644 = vpop.f32.mrb[0].mxu0
      %2645 = vmatprep.mubr.bf16.mxu0 %v1121
      %2646 = vmatmul.mubr.bf16.gmra.mrb[0].mxu0 %v1120
      %v2647 = vpop.f32.mrb[0].mxu0
      %v2648 = vadd.f32 %v763, %v2647
      %v2649 = vpop.f32.mrb[0].mxu0
      %v2650 = vpop.f32.mrb[0].mxu0
      %v2651 = vadd.f32 %v763, %v2650
      %v2652 = vpop.f32.mrb[0].mxu0
      %2653 = vmatprep.mubr.bf16.mxu0 %v1148
      %2654 = vmatmul.mubr.bf16.gmra.mrb[0].mxu0 %v1147
      %v2655 = vpop.f32.mrb[0].mxu0
      %v2656 = vadd.f32 %v763, %v2655
      %v2657 = vpop.f32.mrb[0].mxu0
      %v2658 = vpop.f32.mrb[0].mxu0
      %v2659 = vadd.f32 %v763, %v2658
      %v2660 = vpop.f32.mrb[0].mxu0
      %2661 = vmatprep.mubr.bf16.mxu0 %v1175
      %2662 = vmatmul.mubr.bf16.gmra.mrb[0].mxu0 %v1174
      %v2663 = vpop.f32.mrb[0].mxu0
      %v2664 = vadd.f32 %v763, %v2663
      %v2665 = vpop.f32.mrb[0].mxu0
      %v2666 = vpop.f32.mrb[0].mxu0
      %v2667 = vadd.f32 %v763, %v2666
      %v2668 = vpop.f32.mrb[0].mxu0
      %2669 = vdwg.mxu0
      %2670 = vmatprep.subr.bf16.mxu0 0
      %2671 = vmatpush1.bf16.msra.mxu0 %v2189
      %2672 = vmatprep.subr.bf16.mxu0 0
      %2673 = vmatpush1.bf16.msra.mxu0 %v2190
      %2674 = vmatprep.subr.bf16.mxu0 0
      %2675 = vmatpush1.bf16.msra.mxu0 %v2191
      %2676 = vmatprep.subr.bf16.mxu0 0
      %2677 = vmatpush1.bf16.msra.mxu0 %v2192
      %2678 = vmatprep.subr.bf16.mxu0 0
      %2679 = vmatpush1.bf16.msra.mxu0 %v2193
      %2680 = vmatprep.subr.bf16.mxu0 0
      %2681 = vmatpush1.bf16.msra.mxu0 %v2194
      %2682 = vmatprep.subr.bf16.mxu0 0
      %2683 = vmatpush1.bf16.msra.mxu0 %v2195
      %2684 = vmatprep.subr.bf16.mxu0 0
      %2685 = vmatpush1.bf16.msra.mxu0 %v2196
      %2686 = vmatprep.subr.bf16.mxu0 0
      %2687 = vmatpush1.bf16.msra.mxu0 %v2197
      %2688 = vmatprep.subr.bf16.mxu0 0
      %2689 = vmatpush1.bf16.msra.mxu0 %v2198
      %2690 = vmatprep.subr.bf16.mxu0 0
      %2691 = vmatpush1.bf16.msra.mxu0 %v2199
      %2692 = vmatprep.subr.bf16.mxu0 0
      %2693 = vmatpush1.bf16.msra.mxu0 %v2200
      %2694 = vmatprep.subr.bf16.mxu0 0
      %2695 = vmatpush1.bf16.msra.mxu0 %v2201
      %2696 = vmatprep.subr.bf16.mxu0 0
      %2697 = vmatpush1.bf16.msra.mxu0 %v2202
      %2698 = vmatprep.subr.bf16.mxu0 0
      %2699 = vmatpush1.bf16.msra.mxu0 %v2203
      %2700 = vmatprep.subr.bf16.mxu0 0
      %2701 = vmatpush1.bf16.msra.mxu0 %v2204
      %2702 = vmatprep.mubr.bf16.mxu0 %v1096
      %2703 = vmatmul.mubr.bf16.gmra.mrb[0].mxu0 %v1095
      %v2704 = vpop.f32.mrb[0].mxu0
      %v2705 = vadd.f32 %v2640, %v2704
      %v2706 = vpop.f32.mrb[0].mxu0
      %v2707 = vpop.f32.mrb[0].mxu0
      %v2708 = vadd.f32 %v2643, %v2707
      %v2709 = vpop.f32.mrb[0].mxu0
      %2710 = vmatprep.mubr.bf16.mxu0 %v1123
      %2711 = vmatmul.mubr.bf16.gmra.mrb[0].mxu0 %v1122
      %v2712 = vpop.f32.mrb[0].mxu0
      %v2713 = vadd.f32 %v2648, %v2712
      %v2714 = vpop.f32.mrb[0].mxu0
      %v2715 = vpop.f32.mrb[0].mxu0
      %v2716 = vadd.f32 %v2651, %v2715
      %v2717 = vpop.f32.mrb[0].mxu0
      %2718 = vmatprep.mubr.bf16.mxu0 %v1150
      %2719 = vmatmul.mubr.bf16.gmra.mrb[0].mxu0 %v1149
      %v2720 = vpop.f32.mrb[0].mxu0
      %v2721 = vadd.f32 %v2656, %v2720
      %v2722 = vpop.f32.mrb[0].mxu0
      %v2723 = vpop.f32.mrb[0].mxu0
      %v2724 = vadd.f32 %v2659, %v2723
      %v2725 = vpop.f32.mrb[0].mxu0
      %2726 = vmatprep.mubr.bf16.mxu0 %v1177
      %2727 = vmatmul.mubr.bf16.gmra.mrb[0].mxu0 %v1176
      %v2728 = vpop.f32.mrb[0].mxu0
      %v2729 = vadd.f32 %v2664, %v2728
      %v2730 = vpop.f32.mrb[0].mxu0
      %v2731 = vpop.f32.mrb[0].mxu0
      %v2732 = vadd.f32 %v2667, %v2731
      %v2733 = vpop.f32.mrb[0].mxu0
      %2734 = vdwg.mxu0
      %2735 = vmatprep.subr.bf16.mxu0 0
      %2736 = vmatpush1.bf16.msra.mxu0 %v2205
      %2737 = vmatprep.subr.bf16.mxu0 0
      %2738 = vmatpush1.bf16.msra.mxu0 %v2206
      %2739 = vmatprep.subr.bf16.mxu0 0
      %2740 = vmatpush1.bf16.msra.mxu0 %v2207
      %2741 = vmatprep.subr.bf16.mxu0 0
      %2742 = vmatpush1.bf16.msra.mxu0 %v2208
      %2743 = vmatprep.subr.bf16.mxu0 0
      %2744 = vmatpush1.bf16.msra.mxu0 %v2209
      %2745 = vmatprep.subr.bf16.mxu0 0
      %2746 = vmatpush1.bf16.msra.mxu0 %v2210
      %2747 = vmatprep.subr.bf16.mxu0 0
      %2748 = vmatpush1.bf16.msra.mxu0 %v2211
      %2749 = vmatprep.subr.bf16.mxu0 0
      %2750 = vmatpush1.bf16.msra.mxu0 %v2212
      %2751 = vmatprep.subr.bf16.mxu0 0
      %2752 = vmatpush1.bf16.msra.mxu0 %v2213
      %2753 = vmatprep.subr.bf16.mxu0 0
      %2754 = vmatpush1.bf16.msra.mxu0 %v2214
      %2755 = vmatprep.subr.bf16.mxu0 0
      %2756 = vmatpush1.bf16.msra.mxu0 %v2215
      %2757 = vmatprep.subr.bf16.mxu0 0
      %2758 = vmatpush1.bf16.msra.mxu0 %v2216
      %2759 = vmatprep.subr.bf16.mxu0 0
      %2760 = vmatpush1.bf16.msra.mxu0 %v2217
      %2761 = vmatprep.subr.bf16.mxu0 0
      %2762 = vmatpush1.bf16.msra.mxu0 %v2218
      %2763 = vmatprep.subr.bf16.mxu0 0
      %2764 = vmatpush1.bf16.msra.mxu0 %v2219
      %2765 = vmatprep.subr.bf16.mxu0 0
      %2766 = vmatpush1.bf16.msra.mxu0 %v2220
      %2767 = vmatprep.mubr.bf16.mxu0 %v1098
      %2768 = vmatmul.mubr.bf16.gmra.mrb[0].mxu0 %v1097
      %v2769 = vpop.f32.mrb[0].mxu0
      %v2770 = vadd.f32 %v2705, %v2769
      %v2771 = vpop.f32.mrb[0].mxu0
      %v2772 = vpop.f32.mrb[0].mxu0
      %v2773 = vadd.f32 %v2708, %v2772
      %v2774 = vpop.f32.mrb[0].mxu0
      %2775 = vmatprep.mubr.bf16.mxu0 %v1125
      %2776 = vmatmul.mubr.bf16.gmra.mrb[0].mxu0 %v1124
      %v2777 = vpop.f32.mrb[0].mxu0
      %v2778 = vadd.f32 %v2713, %v2777
      %v2779 = vpop.f32.mrb[0].mxu0
      %v2780 = vpop.f32.mrb[0].mxu0
      %v2781 = vadd.f32 %v2716, %v2780
      %v2782 = vpop.f32.mrb[0].mxu0
      %2783 = vmatprep.mubr.bf16.mxu0 %v1152
      %2784 = vmatmul.mubr.bf16.gmra.mrb[0].mxu0 %v1151
      %v2785 = vpop.f32.mrb[0].mxu0
      %v2786 = vadd.f32 %v2721, %v2785
      %v2787 = vpop.f32.mrb[0].mxu0
      %v2788 = vpop.f32.mrb[0].mxu0
      %v2789 = vadd.f32 %v2724, %v2788
      %v2790 = vpop.f32.mrb[0].mxu0
      %2791 = vmatprep.mubr.bf16.mxu0 %v1179
      %2792 = vmatmul.mubr.bf16.gmra.mrb[0].mxu0 %v1178
      %v2793 = vpop.f32.mrb[0].mxu0
      %v2794 = vadd.f32 %v2729, %v2793
      %v2795 = vpop.f32.mrb[0].mxu0
      %v2796 = vpop.f32.mrb[0].mxu0
      %v2797 = vadd.f32 %v2732, %v2796
      %v2798 = vpop.f32.mrb[0].mxu0
      %2799 = vdwg.mxu0
      %2800 = vmatprep.subr.bf16.mxu0 0
      %2801 = vmatpush1.bf16.msra.mxu0 %v2221
      %2802 = vmatprep.subr.bf16.mxu0 0
      %2803 = vmatpush1.bf16.msra.mxu0 %v2222
      %2804 = vmatprep.subr.bf16.mxu0 0
      %2805 = vmatpush1.bf16.msra.mxu0 %v2223
      %2806 = vmatprep.subr.bf16.mxu0 0
      %2807 = vmatpush1.bf16.msra.mxu0 %v2224
      %2808 = vmatprep.subr.bf16.mxu0 0
      %2809 = vmatpush1.bf16.msra.mxu0 %v2225
      %2810 = vmatprep.subr.bf16.mxu0 0
      %2811 = vmatpush1.bf16.msra.mxu0 %v2226
      %2812 = vmatprep.subr.bf16.mxu0 0
      %2813 = vmatpush1.bf16.msra.mxu0 %v2227
      %2814 = vmatprep.subr.bf16.mxu0 0
      %2815 = vmatpush1.bf16.msra.mxu0 %v2228
      %2816 = vmatprep.subr.bf16.mxu0 0
      %2817 = vmatpush1.bf16.msra.mxu0 %v2229
      %2818 = vmatprep.subr.bf16.mxu0 0
      %2819 = vmatpush1.bf16.msra.mxu0 %v2230
      %2820 = vmatprep.subr.bf16.mxu0 0
      %2821 = vmatpush1.bf16.msra.mxu0 %v2231
      %2822 = vmatprep.subr.bf16.mxu0 0
      %2823 = vmatpush1.bf16.msra.mxu0 %v2232
      %2824 = vmatprep.subr.bf16.mxu0 0
      %2825 = vmatpush1.bf16.msra.mxu0 %v2233
      %2826 = vmatprep.subr.bf16.mxu0 0
      %2827 = vmatpush1.bf16.msra.mxu0 %v2234
      %2828 = vmatprep.subr.bf16.mxu0 0
      %2829 = vmatpush1.bf16.msra.mxu0 %v2235
      %2830 = vmatprep.subr.bf16.mxu0 0
      %2831 = vmatpush1.bf16.msra.mxu0 %v2236
      %2832 = vmatprep.mubr.bf16.mxu0 %v1100
      %2833 = vmatmul.mubr.bf16.gmra.mrb[0].mxu0 %v1099
      %v2834 = vpop.f32.mrb[0].mxu0
      %v2835 = vadd.f32 %v2770, %v2834
      %v2836 = vpop.f32.mrb[0].mxu0
      %v2837 = vpop.f32.mrb[0].mxu0
      %v2838 = vadd.f32 %v2773, %v2837
      %v2839 = vpop.f32.mrb[0].mxu0
      %2840 = vmatprep.mubr.bf16.mxu0 %v1127
      %2841 = vmatmul.mubr.bf16.gmra.mrb[0].mxu0 %v1126
      %v2842 = vpop.f32.mrb[0].mxu0
      %v2843 = vadd.f32 %v2778, %v2842
      %v2844 = vpop.f32.mrb[0].mxu0
      %v2845 = vpop.f32.mrb[0].mxu0
      %v2846 = vadd.f32 %v2781, %v2845
      %v2847 = vpop.f32.mrb[0].mxu0
      %2848 = vmatprep.mubr.bf16.mxu0 %v1154
      %2849 = vmatmul.mubr.bf16.gmra.mrb[0].mxu0 %v1153
      %v2850 = vpop.f32.mrb[0].mxu0
      %v2851 = vadd.f32 %v2786, %v2850
      %v2852 = vpop.f32.mrb[0].mxu0
      %v2853 = vpop.f32.mrb[0].mxu0
      %v2854 = vadd.f32 %v2789, %v2853
      %v2855 = vpop.f32.mrb[0].mxu0
      %2856 = vmatprep.mubr.bf16.mxu0 %v1181
      %2857 = vmatmul.mubr.bf16.gmra.mrb[0].mxu0 %v1180
      %v2858 = vpop.f32.mrb[0].mxu0
      %v2859 = vadd.f32 %v2794, %v2858
      %v2860 = vpop.f32.mrb[0].mxu0
      %v2861 = vpop.f32.mrb[0].mxu0
      %v2862 = vadd.f32 %v2797, %v2861
      %v2863 = vpop.f32.mrb[0].mxu0
      %2864 = vdwg.mxu0
      %2865 = vmatprep.subr.bf16.mxu0 0
      %2866 = vmatpush1.bf16.msra.mxu0 %v2237
      %2867 = vmatprep.subr.bf16.mxu0 0
      %2868 = vmatpush1.bf16.msra.mxu0 %v2238
      %2869 = vmatprep.subr.bf16.mxu0 0
      %2870 = vmatpush1.bf16.msra.mxu0 %v2239
      %2871 = vmatprep.subr.bf16.mxu0 0
      %2872 = vmatpush1.bf16.msra.mxu0 %v2240
      %2873 = vmatprep.subr.bf16.mxu0 0
      %2874 = vmatpush1.bf16.msra.mxu0 %v2241
      %2875 = vmatprep.subr.bf16.mxu0 0
      %2876 = vmatpush1.bf16.msra.mxu0 %v2242
      %2877 = vmatprep.subr.bf16.mxu0 0
      %2878 = vmatpush1.bf16.msra.mxu0 %v2243
      %2879 = vmatprep.subr.bf16.mxu0 0
      %2880 = vmatpush1.bf16.msra.mxu0 %v2244
      %2881 = vmatprep.subr.bf16.mxu0 0
      %2882 = vmatpush1.bf16.msra.mxu0 %v2245
      %2883 = vmatprep.subr.bf16.mxu0 0
      %2884 = vmatpush1.bf16.msra.mxu0 %v2246
      %2885 = vmatprep.subr.bf16.mxu0 0
      %2886 = vmatpush1.bf16.msra.mxu0 %v2247
      %2887 = vmatprep.subr.bf16.mxu0 0
      %2888 = vmatpush1.bf16.msra.mxu0 %v2248
      %2889 = vmatprep.subr.bf16.mxu0 0
      %2890 = vmatpush1.bf16.msra.mxu0 %v2249
      %2891 = vmatprep.subr.bf16.mxu0 0
      %2892 = vmatpush1.bf16.msra.mxu0 %v2250
      %2893 = vmatprep.subr.bf16.mxu0 0
      %2894 = vmatpush1.bf16.msra.mxu0 %v2251
      %2895 = vmatprep.subr.bf16.mxu0 0
      %2896 = vmatpush1.bf16.msra.mxu0 %v2252
      %2897 = vmatprep.mubr.bf16.mxu0 %v1102
      %2898 = vmatmul.mubr.bf16.gmra.mrb[0].mxu0 %v1101
      %v2899 = vpop.f32.mrb[0].mxu0
      %v2900 = vadd.f32 %v2835, %v2899
      %v2901 = vpop.f32.mrb[0].mxu0
      %v2902 = vpop.f32.mrb[0].mxu0
      %v2903 = vadd.f32 %v2838, %v2902
      %v2904 = vpop.f32.mrb[0].mxu0
      %2905 = vmatprep.mubr.bf16.mxu0 %v1129
      %2906 = vmatmul.mubr.bf16.gmra.mrb[0].mxu0 %v1128
      %v2907 = vpop.f32.mrb[0].mxu0
      %v2908 = vadd.f32 %v2843, %v2907
      %v2909 = vpop.f32.mrb[0].mxu0
      %v2910 = vpop.f32.mrb[0].mxu0
      %v2911 = vadd.f32 %v2846, %v2910
      %v2912 = vpop.f32.mrb[0].mxu0
      %2913 = vmatprep.mubr.bf16.mxu0 %v1156
      %2914 = vmatmul.mubr.bf16.gmra.mrb[0].mxu0 %v1155
      %v2915 = vpop.f32.mrb[0].mxu0
      %v2916 = vadd.f32 %v2851, %v2915
      %v2917 = vpop.f32.mrb[0].mxu0
      %v2918 = vpop.f32.mrb[0].mxu0
      %v2919 = vadd.f32 %v2854, %v2918
      %v2920 = vpop.f32.mrb[0].mxu0
      %2921 = vmatprep.mubr.bf16.mxu0 %v1183
      %2922 = vmatmul.mubr.bf16.gmra.mrb[0].mxu0 %v1182
      %v2923 = vpop.f32.mrb[0].mxu0
      %v2924 = vadd.f32 %v2859, %v2923
      %v2925 = vpop.f32.mrb[0].mxu0
      %v2926 = vpop.f32.mrb[0].mxu0
      %v2927 = vadd.f32 %v2862, %v2926
      %v2928 = vpop.f32.mrb[0].mxu0
      %2929 = vdwg.mxu0
      %2930 = vmatprep.subr.bf16.mxu0 0
      %2931 = vmatpush1.bf16.msra.mxu0 %v2253
      %2932 = vmatprep.subr.bf16.mxu0 0
      %2933 = vmatpush1.bf16.msra.mxu0 %v2254
      %2934 = vmatprep.subr.bf16.mxu0 0
      %2935 = vmatpush1.bf16.msra.mxu0 %v2255
      %2936 = vmatprep.subr.bf16.mxu0 0
      %2937 = vmatpush1.bf16.msra.mxu0 %v2256
      %2938 = vmatprep.subr.bf16.mxu0 0
      %2939 = vmatpush1.bf16.msra.mxu0 %v2257
      %2940 = vmatprep.subr.bf16.mxu0 0
      %2941 = vmatpush1.bf16.msra.mxu0 %v2258
      %2942 = vmatprep.subr.bf16.mxu0 0
      %2943 = vmatpush1.bf16.msra.mxu0 %v2259
      %2944 = vmatprep.subr.bf16.mxu0 0
      %2945 = vmatpush1.bf16.msra.mxu0 %v2260
      %2946 = vmatprep.subr.bf16.mxu0 0
      %2947 = vmatpush1.bf16.msra.mxu0 %v2261
      %2948 = vmatprep.subr.bf16.mxu0 0
      %2949 = vmatpush1.bf16.msra.mxu0 %v2262
      %2950 = vmatprep.subr.bf16.mxu0 0
      %2951 = vmatpush1.bf16.msra.mxu0 %v2263
      %2952 = vmatprep.subr.bf16.mxu0 0
      %2953 = vmatpush1.bf16.msra.mxu0 %v2264
      %2954 = vmatprep.subr.bf16.mxu0 0
      %2955 = vmatpush1.bf16.msra.mxu0 %v2265
      %2956 = vmatprep.subr.bf16.mxu0 0
      %2957 = vmatpush1.bf16.msra.mxu0 %v2266
      %2958 = vmatprep.subr.bf16.mxu0 0
      %2959 = vmatpush1.bf16.msra.mxu0 %v2267
      %2960 = vmatprep.subr.bf16.mxu0 0
      %2961 = vmatpush1.bf16.msra.mxu0 %v2268
      %2962 = vmatprep.mubr.bf16.mxu0 %v1104
      %2963 = vmatmul.mubr.bf16.gmra.mrb[0].mxu0 %v1103
      %v2964 = vpop.f32.mrb[0].mxu0
      %v2965 = vadd.f32 %v2900, %v2964
      %v2966 = vpop.f32.mrb[0].mxu0
      %v2967 = vpop.f32.mrb[0].mxu0
      %v2968 = vadd.f32 %v2903, %v2967
      %v2969 = vpop.f32.mrb[0].mxu0
      %2970 = vmatprep.mubr.bf16.mxu0 %v1131
      %2971 = vmatmul.mubr.bf16.gmra.mrb[0].mxu0 %v1130
      %v2972 = vpop.f32.mrb[0].mxu0
      %v2973 = vadd.f32 %v2908, %v2972
      %v2974 = vpop.f32.mrb[0].mxu0
      %v2975 = vpop.f32.mrb[0].mxu0
      %v2976 = vadd.f32 %v2911, %v2975
      %v2977 = vpop.f32.mrb[0].mxu0
      %2978 = vmatprep.mubr.bf16.mxu0 %v1158
      %2979 = vmatmul.mubr.bf16.gmra.mrb[0].mxu0 %v1157
      %v2980 = vpop.f32.mrb[0].mxu0
      %v2981 = vadd.f32 %v2916, %v2980
      %v2982 = vpop.f32.mrb[0].mxu0
      %v2983 = vpop.f32.mrb[0].mxu0
      %v2984 = vadd.f32 %v2919, %v2983
      %v2985 = vpop.f32.mrb[0].mxu0
      %2986 = vmatprep.mubr.bf16.mxu0 %v1185
      %2987 = vmatmul.mubr.bf16.gmra.mrb[0].mxu0 %v1184
      %v2988 = vpop.f32.mrb[0].mxu0
      %v2989 = vadd.f32 %v2924, %v2988
      %v2990 = vpop.f32.mrb[0].mxu0
      %v2991 = vpop.f32.mrb[0].mxu0
      %v2992 = vadd.f32 %v2927, %v2991
      %v2993 = vpop.f32.mrb[0].mxu0
      %2994 = vdwg.mxu0
      %2995 = vmatprep.subr.bf16.mxu0 0
      %2996 = vmatpush1.bf16.msra.mxu0 %v2269
      %2997 = vmatprep.subr.bf16.mxu0 0
      %2998 = vmatpush1.bf16.msra.mxu0 %v2270
      %2999 = vmatprep.subr.bf16.mxu0 0
      %3000 = vmatpush1.bf16.msra.mxu0 %v2271
      %3001 = vmatprep.subr.bf16.mxu0 0
      %3002 = vmatpush1.bf16.msra.mxu0 %v2272
      %3003 = vmatprep.subr.bf16.mxu0 0
      %3004 = vmatpush1.bf16.msra.mxu0 %v2273
      %3005 = vmatprep.subr.bf16.mxu0 0
      %3006 = vmatpush1.bf16.msra.mxu0 %v2274
      %3007 = vmatprep.subr.bf16.mxu0 0
      %3008 = vmatpush1.bf16.msra.mxu0 %v2275
      %3009 = vmatprep.subr.bf16.mxu0 0
      %3010 = vmatpush1.bf16.msra.mxu0 %v2276
      %3011 = vmatprep.subr.bf16.mxu0 0
      %3012 = vmatpush1.bf16.msra.mxu0 %v2277
      %3013 = vmatprep.subr.bf16.mxu0 0
      %3014 = vmatpush1.bf16.msra.mxu0 %v2278
      %3015 = vmatprep.subr.bf16.mxu0 0
      %3016 = vmatpush1.bf16.msra.mxu0 %v2279
      %3017 = vmatprep.subr.bf16.mxu0 0
      %3018 = vmatpush1.bf16.msra.mxu0 %v2280
      %3019 = vmatprep.subr.bf16.mxu0 0
      %3020 = vmatpush1.bf16.msra.mxu0 %v2281
      %3021 = vmatprep.subr.bf16.mxu0 0
      %3022 = vmatpush1.bf16.msra.mxu0 %v2282
      %3023 = vmatprep.subr.bf16.mxu0 0
      %3024 = vmatpush1.bf16.msra.mxu0 %v2283
      %3025 = vmatprep.subr.bf16.mxu0 0
      %3026 = vmatpush1.bf16.msra.mxu0 %v2284
      %3027 = vmatprep.mubr.bf16.mxu0 %v1106
      %3028 = vmatmul.mubr.bf16.gmra.mrb[0].mxu0 %v1105
      %v3029 = vpop.f32.mrb[0].mxu0
      %v3030 = vadd.f32 %v2965, %v3029
      %v3031 = vpop.f32.mrb[0].mxu0
      %v3032 = vpop.f32.mrb[0].mxu0
      %v3033 = vadd.f32 %v2968, %v3032
      %v3034 = vpop.f32.mrb[0].mxu0
      %3035 = vmatprep.mubr.bf16.mxu0 %v1133
      %3036 = vmatmul.mubr.bf16.gmra.mrb[0].mxu0 %v1132
      %v3037 = vpop.f32.mrb[0].mxu0
      %v3038 = vadd.f32 %v2973, %v3037
      %v3039 = vpop.f32.mrb[0].mxu0
      %v3040 = vpop.f32.mrb[0].mxu0
      %v3041 = vadd.f32 %v2976, %v3040
      %v3042 = vpop.f32.mrb[0].mxu0
      %3043 = vmatprep.mubr.bf16.mxu0 %v1160
      %3044 = vmatmul.mubr.bf16.gmra.mrb[0].mxu0 %v1159
      %v3045 = vpop.f32.mrb[0].mxu0
      %v3046 = vadd.f32 %v2981, %v3045
      %v3047 = vpop.f32.mrb[0].mxu0
      %v3048 = vpop.f32.mrb[0].mxu0
      %v3049 = vadd.f32 %v2984, %v3048
      %v3050 = vpop.f32.mrb[0].mxu0
      %3051 = vmatprep.mubr.bf16.mxu0 %v1187
      %3052 = vmatmul.mubr.bf16.gmra.mrb[0].mxu0 %v1186
      %v3053 = vpop.f32.mrb[0].mxu0
      %v3054 = vadd.f32 %v2989, %v3053
      %v3055 = vpop.f32.mrb[0].mxu0
      %v3056 = vpop.f32.mrb[0].mxu0
      %v3057 = vadd.f32 %v2992, %v3056
      %v3058 = vpop.f32.mrb[0].mxu0
      %3059 = vdwg.mxu0
      %3060 = vmatprep.subr.bf16.mxu0 0
      %3061 = vmatpush1.bf16.msra.mxu0 %v2285
      %3062 = vmatprep.subr.bf16.mxu0 0
      %3063 = vmatpush1.bf16.msra.mxu0 %v2286
      %3064 = vmatprep.subr.bf16.mxu0 0
      %3065 = vmatpush1.bf16.msra.mxu0 %v2287
      %3066 = vmatprep.subr.bf16.mxu0 0
      %3067 = vmatpush1.bf16.msra.mxu0 %v2288
      %3068 = vmatprep.subr.bf16.mxu0 0
      %3069 = vmatpush1.bf16.msra.mxu0 %v2289
      %3070 = vmatprep.subr.bf16.mxu0 0
      %3071 = vmatpush1.bf16.msra.mxu0 %v2290
      %3072 = vmatprep.subr.bf16.mxu0 0
      %3073 = vmatpush1.bf16.msra.mxu0 %v2291
      %3074 = vmatprep.subr.bf16.mxu0 0
      %3075 = vmatpush1.bf16.msra.mxu0 %v2292
      %3076 = vmatprep.subr.bf16.mxu0 0
      %3077 = vmatpush1.bf16.msra.mxu0 %v2293
      %3078 = vmatprep.subr.bf16.mxu0 0
      %3079 = vmatpush1.bf16.msra.mxu0 %v2294
      %3080 = vmatprep.subr.bf16.mxu0 0
      %3081 = vmatpush1.bf16.msra.mxu0 %v2295
      %3082 = vmatprep.subr.bf16.mxu0 0
      %3083 = vmatpush1.bf16.msra.mxu0 %v2296
      %3084 = vmatprep.subr.bf16.mxu0 0
      %3085 = vmatpush1.bf16.msra.mxu0 %v2297
      %3086 = vmatprep.subr.bf16.mxu0 0
      %3087 = vmatpush1.bf16.msra.mxu0 %v2298
      %3088 = vmatprep.subr.bf16.mxu0 0
      %3089 = vmatpush1.bf16.msra.mxu0 %v2299
      %3090 = vmatprep.subr.bf16.mxu0 0
      %3091 = vmatpush1.bf16.msra.mxu0 %v2300
      %3092 = vmatprep.mubr.bf16.mxu0 %v1108
      %3093 = vmatmul.mubr.bf16.gmra.mrb[0].mxu0 %v1107
      %v3094 = vpop.f32.mrb[0].mxu0
      %v3095 = vadd.f32 %v3030, %v3094
      %v3096 = vpop.f32.mrb[0].mxu0
      %v3097 = vpop.f32.mrb[0].mxu0
      %v3098 = vadd.f32 %v3033, %v3097
      %v3099 = vpop.f32.mrb[0].mxu0
      %3100 = vmatprep.mubr.bf16.mxu0 %v1135
      %3101 = vmatmul.mubr.bf16.gmra.mrb[0].mxu0 %v1134
      %v3102 = vpop.f32.mrb[0].mxu0
      %v3103 = vadd.f32 %v3038, %v3102
      %v3104 = vpop.f32.mrb[0].mxu0
      %v3105 = vpop.f32.mrb[0].mxu0
      %v3106 = vadd.f32 %v3041, %v3105
      %v3107 = vpop.f32.mrb[0].mxu0
      %3108 = vmatprep.mubr.bf16.mxu0 %v1162
      %3109 = vmatmul.mubr.bf16.gmra.mrb[0].mxu0 %v1161
      %v3110 = vpop.f32.mrb[0].mxu0
      %v3111 = vadd.f32 %v3046, %v3110
      %v3112 = vpop.f32.mrb[0].mxu0
      %v3113 = vpop.f32.mrb[0].mxu0
      %v3114 = vadd.f32 %v3049, %v3113
      %v3115 = vpop.f32.mrb[0].mxu0
      %3116 = vmatprep.mubr.bf16.mxu0 %v1189
      %3117 = vmatmul.mubr.bf16.gmra.mrb[0].mxu0 %v1188
      %v3118 = vpop.f32.mrb[0].mxu0
      %v3119 = vadd.f32 %v3054, %v3118
      %v3120 = vpop.f32.mrb[0].mxu0
      %v3121 = vpop.f32.mrb[0].mxu0
      %v3122 = vadd.f32 %v3057, %v3121
      %v3123 = vpop.f32.mrb[0].mxu0
      %3124 = vdwg.mxu0
      %3125 = vmatprep.subr.bf16.mxu0 0
      %3126 = vmatpush1.bf16.msra.mxu0 %v2301
      %3127 = vmatprep.subr.bf16.mxu0 0
      %3128 = vmatpush1.bf16.msra.mxu0 %v2302
      %3129 = vmatprep.subr.bf16.mxu0 0
      %3130 = vmatpush1.bf16.msra.mxu0 %v2303
      %3131 = vmatprep.subr.bf16.mxu0 0
      %3132 = vmatpush1.bf16.msra.mxu0 %v2304
      %3133 = vmatprep.subr.bf16.mxu0 0
      %3134 = vmatpush1.bf16.msra.mxu0 %v2305
      %3135 = vmatprep.subr.bf16.mxu0 0
      %3136 = vmatpush1.bf16.msra.mxu0 %v2306
      %3137 = vmatprep.subr.bf16.mxu0 0
      %3138 = vmatpush1.bf16.msra.mxu0 %v2307
      %3139 = vmatprep.subr.bf16.mxu0 0
      %3140 = vmatpush1.bf16.msra.mxu0 %v2308
      %3141 = vmatprep.subr.bf16.mxu0 0
      %3142 = vmatpush1.bf16.msra.mxu0 %v2309
      %3143 = vmatprep.subr.bf16.mxu0 0
      %3144 = vmatpush1.bf16.msra.mxu0 %v2310
      %3145 = vmatprep.subr.bf16.mxu0 0
      %3146 = vmatpush1.bf16.msra.mxu0 %v2311
      %3147 = vmatprep.subr.bf16.mxu0 0
      %3148 = vmatpush1.bf16.msra.mxu0 %v2312
      %3149 = vmatprep.subr.bf16.mxu0 0
      %3150 = vmatpush1.bf16.msra.mxu0 %v2313
      %3151 = vmatprep.subr.bf16.mxu0 0
      %3152 = vmatpush1.bf16.msra.mxu0 %v2314
      %3153 = vmatprep.subr.bf16.mxu0 0
      %3154 = vmatpush1.bf16.msra.mxu0 %v2315
      %3155 = vmatprep.subr.bf16.mxu0 0
      %3156 = vmatpush1.bf16.msra.mxu0 %v2316
      %3157 = vmatprep.mubr.bf16.mxu0 %v1110
      %3158 = vmatmul.mubr.bf16.gmra.mrb[0].mxu0 %v1109
      %v3159 = vpop.f32.mrb[0].mxu0
      %v3160 = vadd.f32 %v3095, %v3159
      %v3161 = vpop.f32.mrb[0].mxu0
      %v3162 = vpop.f32.mrb[0].mxu0
      %v3163 = vadd.f32 %v3098, %v3162
      %v3164 = vpop.f32.mrb[0].mxu0
      %3165 = vmatprep.mubr.bf16.mxu0 %v1137
      %3166 = vmatmul.mubr.bf16.gmra.mrb[0].mxu0 %v1136
      %v3167 = vpop.f32.mrb[0].mxu0
      %v3168 = vadd.f32 %v3103, %v3167
      %v3169 = vpop.f32.mrb[0].mxu0
      %v3170 = vpop.f32.mrb[0].mxu0
      %v3171 = vadd.f32 %v3106, %v3170
      %v3172 = vpop.f32.mrb[0].mxu0
      %3173 = vmatprep.mubr.bf16.mxu0 %v1164
      %3174 = vmatmul.mubr.bf16.gmra.mrb[0].mxu0 %v1163
      %v3175 = vpop.f32.mrb[0].mxu0
      %v3176 = vadd.f32 %v3111, %v3175
      %v3177 = vpop.f32.mrb[0].mxu0
      %v3178 = vpop.f32.mrb[0].mxu0
      %v3179 = vadd.f32 %v3114, %v3178
      %v3180 = vpop.f32.mrb[0].mxu0
      %3181 = vmatprep.mubr.bf16.mxu0 %v1191
      %3182 = vmatmul.mubr.bf16.gmra.mrb[0].mxu0 %v1190
      %v3183 = vpop.f32.mrb[0].mxu0
      %v3184 = vadd.f32 %v3119, %v3183
      %v3185 = vpop.f32.mrb[0].mxu0
      %v3186 = vpop.f32.mrb[0].mxu0
      %v3187 = vadd.f32 %v3122, %v3186
      %v3188 = vpop.f32.mrb[0].mxu0
      %3189 = vdwg.mxu0
      %3190 = vmatprep.subr.bf16.mxu0 0
      %3191 = vmatpush1.bf16.msra.mxu0 %v2317
      %3192 = vmatprep.subr.bf16.mxu0 0
      %3193 = vmatpush1.bf16.msra.mxu0 %v2318
      %3194 = vmatprep.subr.bf16.mxu0 0
      %3195 = vmatpush1.bf16.msra.mxu0 %v2319
      %3196 = vmatprep.subr.bf16.mxu0 0
      %3197 = vmatpush1.bf16.msra.mxu0 %v2320
      %3198 = vmatprep.subr.bf16.mxu0 0
      %3199 = vmatpush1.bf16.msra.mxu0 %v2321
      %3200 = vmatprep.subr.bf16.mxu0 0
      %3201 = vmatpush1.bf16.msra.mxu0 %v2322
      %3202 = vmatprep.subr.bf16.mxu0 0
      %3203 = vmatpush1.bf16.msra.mxu0 %v2323
      %3204 = vmatprep.subr.bf16.mxu0 0
      %3205 = vmatpush1.bf16.msra.mxu0 %v2324
      %3206 = vmatprep.subr.bf16.mxu0 0
      %3207 = vmatpush1.bf16.msra.mxu0 %v2325
      %3208 = vmatprep.subr.bf16.mxu0 0
      %3209 = vmatpush1.bf16.msra.mxu0 %v2326
      %3210 = vmatprep.subr.bf16.mxu0 0
      %3211 = vmatpush1.bf16.msra.mxu0 %v2327
      %3212 = vmatprep.subr.bf16.mxu0 0
      %3213 = vmatpush1.bf16.msra.mxu0 %v2328
      %3214 = vmatprep.subr.bf16.mxu0 0
      %3215 = vmatpush1.bf16.msra.mxu0 %v2329
      %3216 = vmatprep.subr.bf16.mxu0 0
      %3217 = vmatpush1.bf16.msra.mxu0 %v2330
      %3218 = vmatprep.subr.bf16.mxu0 0
      %3219 = vmatpush1.bf16.msra.mxu0 %v2331
      %3220 = vmatprep.subr.bf16.mxu0 0
      %3221 = vmatpush1.bf16.msra.mxu0 %v2332
      %3222 = vmatprep.mubr.bf16.mxu0 %v1112
      %3223 = vmatmul.mubr.bf16.gmra.mrb[0].mxu0 %v1111
      %v3224 = vpop.f32.mrb[0].mxu0
      %v3225 = vadd.f32 %v3160, %v3224
      %v3226 = vpop.f32.mrb[0].mxu0
      %v3227 = vpop.f32.mrb[0].mxu0
      %v3228 = vadd.f32 %v3163, %v3227
      %v3229 = vpop.f32.mrb[0].mxu0
      %3230 = vmatprep.mubr.bf16.mxu0 %v1139
      %3231 = vmatmul.mubr.bf16.gmra.mrb[0].mxu0 %v1138
      %v3232 = vpop.f32.mrb[0].mxu0
      %v3233 = vadd.f32 %v3168, %v3232
      %v3234 = vpop.f32.mrb[0].mxu0
      %v3235 = vpop.f32.mrb[0].mxu0
      %v3236 = vadd.f32 %v3171, %v3235
      %v3237 = vpop.f32.mrb[0].mxu0
      %3238 = vmatprep.mubr.bf16.mxu0 %v1166
      %3239 = vmatmul.mubr.bf16.gmra.mrb[0].mxu0 %v1165
      %v3240 = vpop.f32.mrb[0].mxu0
      %v3241 = vadd.f32 %v3176, %v3240
      %v3242 = vpop.f32.mrb[0].mxu0
      %v3243 = vpop.f32.mrb[0].mxu0
      %v3244 = vadd.f32 %v3179, %v3243
      %v3245 = vpop.f32.mrb[0].mxu0
      %3246 = vmatprep.mubr.bf16.mxu0 %v1193
      %3247 = vmatmul.mubr.bf16.gmra.mrb[0].mxu0 %v1192
      %v3248 = vpop.f32.mrb[0].mxu0
      %v3249 = vadd.f32 %v3184, %v3248
      %v3250 = vpop.f32.mrb[0].mxu0
      %v3251 = vpop.f32.mrb[0].mxu0
      %v3252 = vadd.f32 %v3187, %v3251
      %v3253 = vpop.f32.mrb[0].mxu0
      %3254 = vdwg.mxu0
      %3255 = vmatprep.subr.bf16.mxu0 0
      %3256 = vmatpush1.bf16.msra.mxu0 %v2333
      %3257 = vmatprep.subr.bf16.mxu0 0
      %3258 = vmatpush1.bf16.msra.mxu0 %v2334
      %3259 = vmatprep.subr.bf16.mxu0 0
      %3260 = vmatpush1.bf16.msra.mxu0 %v2335
      %3261 = vmatprep.subr.bf16.mxu0 0
      %3262 = vmatpush1.bf16.msra.mxu0 %v2336
      %3263 = vmatprep.subr.bf16.mxu0 0
      %3264 = vmatpush1.bf16.msra.mxu0 %v2337
      %3265 = vmatprep.subr.bf16.mxu0 0
      %3266 = vmatpush1.bf16.msra.mxu0 %v2338
      %3267 = vmatprep.subr.bf16.mxu0 0
      %3268 = vmatpush1.bf16.msra.mxu0 %v2339
      %3269 = vmatprep.subr.bf16.mxu0 0
      %3270 = vmatpush1.bf16.msra.mxu0 %v2340
      %3271 = vmatprep.subr.bf16.mxu0 0
      %3272 = vmatpush1.bf16.msra.mxu0 %v2341
      %3273 = vmatprep.subr.bf16.mxu0 0
      %3274 = vmatpush1.bf16.msra.mxu0 %v2342
      %3275 = vmatprep.subr.bf16.mxu0 0
      %3276 = vmatpush1.bf16.msra.mxu0 %v2343
      %3277 = vmatprep.subr.bf16.mxu0 0
      %3278 = vmatpush1.bf16.msra.mxu0 %v2344
      %3279 = vmatprep.subr.bf16.mxu0 0
      %3280 = vmatpush1.bf16.msra.mxu0 %v2345
      %3281 = vmatprep.subr.bf16.mxu0 0
      %3282 = vmatpush1.bf16.msra.mxu0 %v2346
      %3283 = vmatprep.subr.bf16.mxu0 0
      %3284 = vmatpush1.bf16.msra.mxu0 %v2347
      %3285 = vmatprep.subr.bf16.mxu0 0
      %3286 = vmatpush1.bf16.msra.mxu0 %v2348
      %3287 = vmatprep.mubr.bf16.mxu0 %v1114
      %3288 = vmatmul.mubr.bf16.gmra.mrb[0].mxu0 %v1113
      %v3289 = vpop.f32.mrb[0].mxu0
      %v3290 = vadd.f32 %v3225, %v3289
      %v3291 = vpop.f32.mrb[0].mxu0
      %v3292 = vpop.f32.mrb[0].mxu0
      %v3293 = vadd.f32 %v3228, %v3292
      %v3294 = vpop.f32.mrb[0].mxu0
      %3295 = vmatprep.mubr.bf16.mxu0 %v1141
      %3296 = vmatmul.mubr.bf16.gmra.mrb[0].mxu0 %v1140
      %v3297 = vpop.f32.mrb[0].mxu0
      %v3298 = vadd.f32 %v3233, %v3297
      %v3299 = vpop.f32.mrb[0].mxu0
      %v3300 = vpop.f32.mrb[0].mxu0
      %v3301 = vadd.f32 %v3236, %v3300
      %v3302 = vpop.f32.mrb[0].mxu0
      %3303 = vmatprep.mubr.bf16.mxu0 %v1168
      %3304 = vmatmul.mubr.bf16.gmra.mrb[0].mxu0 %v1167
      %v3305 = vpop.f32.mrb[0].mxu0
      %v3306 = vadd.f32 %v3241, %v3305
      %v3307 = vpop.f32.mrb[0].mxu0
      %v3308 = vpop.f32.mrb[0].mxu0
      %v3309 = vadd.f32 %v3244, %v3308
      %v3310 = vpop.f32.mrb[0].mxu0
      %3311 = vmatprep.mubr.bf16.mxu0 %v1195
      %3312 = vmatmul.mubr.bf16.gmra.mrb[0].mxu0 %v1194
      %v3313 = vpop.f32.mrb[0].mxu0
      %v3314 = vadd.f32 %v3249, %v3313
      %v3315 = vpop.f32.mrb[0].mxu0
      %v3316 = vpop.f32.mrb[0].mxu0
      %v3317 = vadd.f32 %v3252, %v3316
      %v3318 = vpop.f32.mrb[0].mxu0
      %3319 = vdwg.mxu0
      %3320 = vmatprep.subr.bf16.mxu0 0
      %3321 = vmatpush1.bf16.msra.mxu0 %v2349
      %3322 = vmatprep.subr.bf16.mxu0 0
      %3323 = vmatpush1.bf16.msra.mxu0 %v2350
      %3324 = vmatprep.subr.bf16.mxu0 0
      %3325 = vmatpush1.bf16.msra.mxu0 %v2351
      %3326 = vmatprep.subr.bf16.mxu0 0
      %3327 = vmatpush1.bf16.msra.mxu0 %v2352
      %3328 = vmatprep.subr.bf16.mxu0 0
      %3329 = vmatpush1.bf16.msra.mxu0 %v2353
      %3330 = vmatprep.subr.bf16.mxu0 0
      %3331 = vmatpush1.bf16.msra.mxu0 %v2354
      %3332 = vmatprep.subr.bf16.mxu0 0
      %3333 = vmatpush1.bf16.msra.mxu0 %v2355
      %3334 = vmatprep.subr.bf16.mxu0 0
      %3335 = vmatpush1.bf16.msra.mxu0 %v2356
      %3336 = vmatprep.subr.bf16.mxu0 0
      %3337 = vmatpush1.bf16.msra.mxu0 %v2357
      %3338 = vmatprep.subr.bf16.mxu0 0
      %3339 = vmatpush1.bf16.msra.mxu0 %v2358
      %3340 = vmatprep.subr.bf16.mxu0 0
      %3341 = vmatpush1.bf16.msra.mxu0 %v2359
      %3342 = vmatprep.subr.bf16.mxu0 0
      %3343 = vmatpush1.bf16.msra.mxu0 %v2360
      %3344 = vmatprep.subr.bf16.mxu0 0
      %3345 = vmatpush1.bf16.msra.mxu0 %v2361
      %3346 = vmatprep.subr.bf16.mxu0 0
      %3347 = vmatpush1.bf16.msra.mxu0 %v2362
      %3348 = vmatprep.subr.bf16.mxu0 0
      %3349 = vmatpush1.bf16.msra.mxu0 %v2363
      %3350 = vmatprep.subr.bf16.mxu0 0
      %3351 = vmatpush1.bf16.msra.mxu0 %v2364
      %3352 = vmatprep.mubr.bf16.mxu0 %v1116
      %3353 = vmatmul.mubr.bf16.gmra.mrb[0].mxu0 %v1115
      %v3354 = vpop.f32.mrb[0].mxu0
      %v3355 = vadd.f32 %v3290, %v3354
      %v3356 = vpop.f32.mrb[0].mxu0
      %v3357 = vpop.f32.mrb[0].mxu0
      %v3358 = vadd.f32 %v3293, %v3357
      %v3359 = vpop.f32.mrb[0].mxu0
      %3360 = vmatprep.mubr.bf16.mxu0 %v1143
      %3361 = vmatmul.mubr.bf16.gmra.mrb[0].mxu0 %v1142
      %v3362 = vpop.f32.mrb[0].mxu0
      %v3363 = vadd.f32 %v3298, %v3362
      %v3364 = vpop.f32.mrb[0].mxu0
      %v3365 = vpop.f32.mrb[0].mxu0
      %v3366 = vadd.f32 %v3301, %v3365
      %v3367 = vpop.f32.mrb[0].mxu0
      %3368 = vmatprep.mubr.bf16.mxu0 %v1170
      %3369 = vmatmul.mubr.bf16.gmra.mrb[0].mxu0 %v1169
      %v3370 = vpop.f32.mrb[0].mxu0
      %v3371 = vadd.f32 %v3306, %v3370
      %v3372 = vpop.f32.mrb[0].mxu0
      %v3373 = vpop.f32.mrb[0].mxu0
      %v3374 = vadd.f32 %v3309, %v3373
      %v3375 = vpop.f32.mrb[0].mxu0
      %3376 = vmatprep.mubr.bf16.mxu0 %v1197
      %3377 = vmatmul.mubr.bf16.gmra.mrb[0].mxu0 %v1196
      %v3378 = vpop.f32.mrb[0].mxu0
      %v3379 = vadd.f32 %v3314, %v3378
      %v3380 = vpop.f32.mrb[0].mxu0
      %v3381 = vpop.f32.mrb[0].mxu0
      %v3382 = vadd.f32 %v3317, %v3381
      %v3383 = vpop.f32.mrb[0].mxu0
      %3384 = vdwg.mxu0
      %3385 = vmatprep.subr.bf16.mxu0 0
      %3386 = vmatpush1.bf16.msra.mxu0 %v2365
      %3387 = vmatprep.subr.bf16.mxu0 0
      %3388 = vmatpush1.bf16.msra.mxu0 %v2366
      %3389 = vmatprep.subr.bf16.mxu0 0
      %3390 = vmatpush1.bf16.msra.mxu0 %v2367
      %3391 = vmatprep.subr.bf16.mxu0 0
      %3392 = vmatpush1.bf16.msra.mxu0 %v2368
      %3393 = vmatprep.subr.bf16.mxu0 0
      %3394 = vmatpush1.bf16.msra.mxu0 %v2369
      %3395 = vmatprep.subr.bf16.mxu0 0
      %3396 = vmatpush1.bf16.msra.mxu0 %v2370
      %3397 = vmatprep.subr.bf16.mxu0 0
      %3398 = vmatpush1.bf16.msra.mxu0 %v2371
      %3399 = vmatprep.subr.bf16.mxu0 0
      %3400 = vmatpush1.bf16.msra.mxu0 %v2372
      %3401 = vmatprep.subr.bf16.mxu0 0
      %3402 = vmatpush1.bf16.msra.mxu0 %v2373
      %3403 = vmatprep.subr.bf16.mxu0 0
      %3404 = vmatpush1.bf16.msra.mxu0 %v2374
      %3405 = vmatprep.subr.bf16.mxu0 0
      %3406 = vmatpush1.bf16.msra.mxu0 %v2375
      %3407 = vmatprep.subr.bf16.mxu0 0
      %3408 = vmatpush1.bf16.msra.mxu0 %v2376
      %3409 = vmatprep.subr.bf16.mxu0 0
      %3410 = vmatpush1.bf16.msra.mxu0 %v2377
      %3411 = vmatprep.subr.bf16.mxu0 0
      %3412 = vmatpush1.bf16.msra.mxu0 %v2378
      %3413 = vmatprep.subr.bf16.mxu0 0
      %3414 = vmatpush1.bf16.msra.mxu0 %v2379
      %3415 = vmatprep.subr.bf16.mxu0 0
      %3416 = vmatpush1.bf16.msra.mxu0 %v2380
      %3417 = vmatprep.mubr.bf16.mxu0 %v1118
      %3418 = vmatmul.mubr.bf16.gmra.mrb[0].mxu0 %v1117
      %v3419 = vpop.f32.mrb[0].mxu0
      %v3420 = vadd.f32 %v3355, %v3419
      %v3421 = vpop.f32.mrb[0].mxu0
      %v3422 = vpop.f32.mrb[0].mxu0
      %v3423 = vadd.f32 %v3358, %v3422
      %v3424 = vpop.f32.mrb[0].mxu0
      %3425 = vmatprep.mubr.bf16.mxu0 %v1145
      %3426 = vmatmul.mubr.bf16.gmra.mrb[0].mxu0 %v1144
      %v3427 = vpop.f32.mrb[0].mxu0
      %v3428 = vadd.f32 %v3363, %v3427
      %v3429 = vpop.f32.mrb[0].mxu0
      %v3430 = vpop.f32.mrb[0].mxu0
      %v3431 = vadd.f32 %v3366, %v3430
      %v3432 = vpop.f32.mrb[0].mxu0
      %3433 = vmatprep.mubr.bf16.mxu0 %v1172
      %3434 = vmatmul.mubr.bf16.gmra.mrb[0].mxu0 %v1171
      %v3435 = vpop.f32.mrb[0].mxu0
      %v3436 = vadd.f32 %v3371, %v3435
      %v3437 = vpop.f32.mrb[0].mxu0
      %v3438 = vpop.f32.mrb[0].mxu0
      %v3439 = vadd.f32 %v3374, %v3438
      %v3440 = vpop.f32.mrb[0].mxu0
      %3441 = vmatprep.mubr.bf16.mxu0 %v1199
      %3442 = vmatmul.mubr.bf16.gmra.mrb[0].mxu0 %v1198
      %v3443 = vpop.f32.mrb[0].mxu0
      %v3444 = vadd.f32 %v3379, %v3443
      %v3445 = vpop.f32.mrb[0].mxu0
      %v3446 = vpop.f32.mrb[0].mxu0
      %v3447 = vadd.f32 %v3382, %v3446
      %v3448 = vpop.f32.mrb[0].mxu0
      %3449 = vdwg.mxu0
      %3450 = vmatprep.subr.bf16.mxu0 0
      %3451 = vmatpush1.bf16.msra.mxu0 %v2381
      %3452 = vmatprep.subr.bf16.mxu0 0
      %3453 = vmatpush1.bf16.msra.mxu0 %v2382
      %3454 = vmatprep.subr.bf16.mxu0 0
      %3455 = vmatpush1.bf16.msra.mxu0 %v2383
      %3456 = vmatprep.subr.bf16.mxu0 0
      %3457 = vmatpush1.bf16.msra.mxu0 %v2384
      %3458 = vmatprep.subr.bf16.mxu0 0
      %3459 = vmatpush1.bf16.msra.mxu0 %v2385
      %3460 = vmatprep.subr.bf16.mxu0 0
      %3461 = vmatpush1.bf16.msra.mxu0 %v2386
      %3462 = vmatprep.subr.bf16.mxu0 0
      %3463 = vmatpush1.bf16.msra.mxu0 %v2387
      %3464 = vmatprep.subr.bf16.mxu0 0
      %3465 = vmatpush1.bf16.msra.mxu0 %v2388
      %3466 = vmatprep.subr.bf16.mxu0 0
      %3467 = vmatpush1.bf16.msra.mxu0 0
      %3468 = vmatprep.subr.bf16.mxu0 0
      %3469 = vmatpush1.bf16.msra.mxu0 0
      %3470 = vmatprep.subr.bf16.mxu0 0
      %3471 = vmatpush1.bf16.msra.mxu0 0
      %3472 = vmatprep.subr.bf16.mxu0 0
      %3473 = vmatpush1.bf16.msra.mxu0 0
      %3474 = vmatprep.subr.bf16.mxu0 0
      %3475 = vmatpush1.bf16.msra.mxu0 0
      %3476 = vmatprep.subr.bf16.mxu0 0
      %3477 = vmatpush1.bf16.msra.mxu0 0
      %3478 = vmatprep.subr.bf16.mxu0 0
      %3479 = vmatpush1.bf16.msra.mxu0 0
      %3480 = vmatprep.subr.bf16.mxu0 0
      %3481 = vmatpush1.bf16.msra.mxu0 0
      %3482 = vmatprep.mubr.bf16.mxu0 0
      %3483 = vmatmul.mubr.bf16.gmra.mrb[0].mxu0 %v1119
      %v3484 = vpop.f32.mrb[0].mxu0
      %v3485 = vadd.f32 %v3420, %v3484
      %v3486 = vpop.f32.mrb[0].mxu0
      %v3487 = vpop.f32.mrb[0].mxu0
      %v3488 = vadd.f32 %v3423, %v3487
      %v3489 = vpop.f32.mrb[0].mxu0
      %3490 = vmatprep.mubr.bf16.mxu0 0
      %3491 = vmatmul.mubr.bf16.gmra.mrb[0].mxu0 %v1146
      %v3492 = vpop.f32.mrb[0].mxu0
      %v3493 = vadd.f32 %v3428, %v3492
      %v3494 = vpop.f32.mrb[0].mxu0
      %v3495 = vpop.f32.mrb[0].mxu0
      %v3496 = vadd.f32 %v3431, %v3495
      %v3497 = vpop.f32.mrb[0].mxu0
      %3498 = vmatprep.mubr.bf16.mxu0 0
      %3499 = vmatmul.mubr.bf16.gmra.mrb[0].mxu0 %v1173
      %v3500 = vpop.f32.mrb[0].mxu0
      %v3501 = vadd.f32 %v3436, %v3500
      %v3502 = vpop.f32.mrb[0].mxu0
      %v3503 = vpop.f32.mrb[0].mxu0
      %v3504 = vadd.f32 %v3439, %v3503
      %v3505 = vpop.f32.mrb[0].mxu0
      %3506 = vmatprep.mubr.bf16.mxu0 0
      %3507 = vmatmul.mubr.bf16.gmra.mrb[0].mxu0 %v1200
      %v3508 = vpop.f32.mrb[0].mxu0
      %v3509 = vadd.f32 %v3444, %v3508
      %v3510 = vpop.f32.mrb[0].mxu0
      %v3511 = vpop.f32.mrb[0].mxu0
      %v3512 = vadd.f32 %v3447, %v3511
      %v3513 = vpop.f32.mrb[0].mxu0
      %3514 = vdwg.mxu0
      %v3515 = vpack.c.bf16 %v3488, %v3485
      %v3516 = vpack.c.bf16 %v3496, %v3493
      %v3517 = vpack.c.bf16 %v3504, %v3501
      %v3518 = vpack.c.bf16 %v3512, %v3509
      %v3523 = vunpack.c.l.b16 %v3515
      %v3524 = vunpack.c.h.b16 %v3515
      %v3525 = vunpack.c.l.b16 %v3516
      %v3526 = vunpack.c.h.b16 %v3516
      %v3527 = vunpack.c.l.b16 %v3517
      %v3528 = vunpack.c.h.b16 %v3517
      %v3529 = vunpack.c.l.b16 %v3518
      %v3530 = vunpack.c.h.b16 %v3518
      %v3531 = vpack.c.b16 %v3523, %v3523
      %v3532 = vpack.c.b16 %v3524, %v3524
      %v3533 = vpack.c.b16 %v3525, %v3525
      %v3534 = vpack.c.b16 %v3526, %v3526
      %v3535 = vpack.c.b16 %v3527, %v3527
      %v3536 = vpack.c.b16 %v3528, %v3528
      %v3537 = vpack.c.b16 %v3529, %v3529
      %v3538 = vpack.c.b16 %v3530, %v3530
      %3547 = vst [vmem:[%s211] sm:$0xf] %v3531
      %3548 = vst [vmem:[%s211 + $0x4] sm:$0xf] %v3532
      %3549 = vst [vmem:[%s211 + $0x8] sm:$0xf] %v3533
      %3550 = vst [vmem:[%s211 + $0xc] sm:$0xf] %v3534
      %3551 = vst [vmem:[%s211 + $0x10] sm:$0xf] %v3535
      %3552 = vst [vmem:[%s211 + $0x14] sm:$0xf] %v3536
      %3553 = vst [vmem:[%s211 + $0x18] sm:$0xf] %v3537
      %3554 = vst [vmem:[%s211 + $0x1c] sm:$0xf] %v3538
      %s3555 = smul.u32 8, %s19
      %p3556 = scmp.lt.s32.totalorder %s18, 1
      %s3557 = scalar_select %p3556, %s18, 1
      %p3558 = scmp.lt.s32.totalorder %s3555, 7
      %s3559 = scalar_select %p3558, %s3555, 7
      %s3560 = smul.addr %s3557, 8
      %s3561 = sadd.s32 %s3559, %s3560
      %s3562 = smul.addr %s3561, 4
      %s3563 = scalar_lea.vmem %s3, %s3562
      // Predicated region
      $region33: #{_lambda_.4} parent=31 // pred_check
        %p3564 = pneg %p116
      $region34: #{_lambda_.4} parent=31 // pred_check_branch
        %3566 = sbr.rel (%p3564) target = $region36
      $region35: #{_lambda_.4} parent=31 // pred_region
        %s3567 = smul.u32 8, %s19
      $region36: #{_lambda_.4} parent=31 // pred_fallthru
        _
    $region32: #{_lambda_.4} parent=5 // pred_fallthru
      _
    %p3568 = scmp.le.s32.totalorder 2, %s9
    // Predicated region
    $region37: #{_lambda_.4} parent=5 // pred_check
      %p3569 = pneg %p3568
    $region38: #{_lambda_.4} parent=5 // pred_check_branch
      %3571 = sbr.rel (%p3569) target = $region40
    $region39: #{_lambda_.4} parent=5 // pred_region
      %s3572 = ssub.s32 %s9, 2
      // Predicated region
      $region41: #{_lambda_.4} parent=39 // pred_check
        %p3573 = pneg %p122
      $region42: #{_lambda_.4} parent=39 // pred_check_branch
        %3575 = sbr.rel (%p3573) target = $region44
      $region43: #{_lambda_.4} parent=39 // pred_region
        %s3576 = smul.u32 8, %s21
        %p3577 = scmp.lt.s32.totalorder %s20, 1
        %s3578 = scalar_select %p3577, %s20, 1
        %p3579 = scmp.lt.s32.totalorder %s3576, 7
        %s3580 = scalar_select %p3579, %s3576, 7
        %s3581 = smul.addr %s3578, 8
        %s3582 = sadd.s32 %s3580, %s3581
        %s3583 = smul.addr %s3582, 4
        %s3584 = scalar_lea.vmem %s3, %s3583
      $region44: #{_lambda_.4} parent=39 // pred_fallthru
        _
    $region40: #{_lambda_.4} parent=5 // pred_fallthru
      _
  $region6: #{_lambda_.4} parent=0 // loop_footer
    %s13 = sadd.s32 1, %s9
  $region7: #{_lambda_.4} parent=0 // loop_footer_branch
    %8 = sbr.rel target = $region3
  $region8: #{_lambda_.4} parent=0 // loop_exit
    _

// kernel: _lambda_.5
$region0: #{_lambda_.5}
  #allocation0 [shape = 'u32[]', space=smem, size = 0x4, offset = 0x4, fixed_abs, tag = 'smem constant byte address 0x4 - core index']
  #allocation1 [shape = 'u32[144,128]{1,0:T(1,128)}', space=vmem, size = 0x12000, scoped, tag = 'internal scratch']
  %s0 = inlined_call_operand.vmem [shape: bf16[2,8,3456], index: 0, kind: input, shape index: {}]
  %s1 = inlined_call_operand.vmem [shape: bf16[3456,128], index: 1, kind: input, shape index: {}]
  %s2 = inlined_call_operand.vmem [shape: f32[1,128], index: 2, kind: input, shape index: {}]
  %s3 = inlined_call_operand.vmem [shape: f32[4,8], index: 3, kind: input, shape index: {}]
  %s4 = inlined_call_operand.hbm [shape: f32[2,4,128], index: 4, kind: output, shape index: {}]
  %s5 = sld [smem:[#allocation0]]
  $region49: #{_lambda_.5} parent=0
    _
  %s7 = ssub.s32 1, %s5
  %s8 = scalar_select 0, %s7, %s5
  $region1: #{_lambda_.5} parent=0
    #allocation2 [shape = 'u8[4096]{0}', space=vmem, size = 0x1000, scoped, tag = 'output window, operand 0']
    #allocation3 [shape = 's32[2]{0}', space=sflag, size = 0x8, scoped, tag = 'scoped memory for _lambda_.5']
    %9 = vsyncpa [#allocation3], 0
    %s10 = scalar_lea.sflag [#allocation3], 1
    %11 = vsyncpa %s10, 0
    loop: start=0, step=1, limit=4
    $region2: #{_lambda_.5} parent=1 // loop_pre_header
      _
    $region3: #{_lambda_.5} parent=1 // loop_header
      %s13 = sphi 0, %s17
      %p14 = scmp.ge.s32.totalorder %s13, 4
      %s23 = sphi 0, %s25
      %s26 = sphi 0, %s23
      %s27 = sphi 0, %s26
      %s43 = sphi 0, %s27
      %s47 = sphi 0, %s47
      %s49 = sphi 0, %s47
      %s50 = sphi 0, %s49
      %s64 = sphi 0, %s50
      %s68 = sphi 0, %s68
      %s70 = sphi 0, %s68
      %s71 = sphi 0, %s70
      %s85 = sphi 0, %s71
      %s89 = sphi 0, %s89
      %s91 = sphi 0, %s89
      %s92 = sphi 0, %s91
      %s106 = sphi 0, %s92
      %s112 = sphi 0, %s114
      %s115 = sphi 0, %s112
      %s116 = sphi 0, %s115
      %s132 = sphi 0, %s116
    $region4: #{_lambda_.5} parent=1 // loop_header_branch
      %16 = sbr.rel (%p14) target = $region8
    $region5: #{_lambda_.5} parent=1 // loop_body
      %s18 = ssub.s32 %s13, 1
      %s19 = ssub.s32 %s13, 2
      %s20 = sadd.s32 %s13, 1
      %s21 = ssub.s32 %s13, %s20
      %p22 = scmp.eq.s32.totalorder %s21, 0
      %s24 = sadd.s32 %s23, 1
      %s25 = scalar_select %p22, %s23, %s24
      %p28 = pneg %p22
      %p29 = scmp.eq.s32.totalorder %s13, 1
      %p30 = por %p28, %p29
      %p31 = scmp.ne.s32.totalorder %s23, %s26
      %p32 = scmp.eq.s32.totalorder %s13, 0
      %p33 = por %p31, %p32
      %p34 = scmp.ne.s32.totalorder %s23, %s26
      %p35 = scmp.eq.s32.totalorder %s18, 1
      %p36 = por %p34, %p35
      %p37 = scmp.ne.s32.totalorder %s26, %s27
      %p38 = scmp.eq.s32.totalorder %s18, 0
      %p39 = por %p37, %p38
      %p40 = scmp.ne.s32.totalorder %s26, %s27
      %p41 = scmp.eq.s32.totalorder %s19, 1
      %p42 = por %p40, %p41
      %p44 = scmp.ne.s32.totalorder %s27, %s43
      %p45 = scmp.eq.s32.totalorder %s19, 0
      %p46 = por %p44, %p45
      %s48 = sadd.s32 %s47, 1
      %p51 = scmp.eq.s32.totalorder %s13, 1
      %p52 = scmp.ne.s32.totalorder %s47, %s49
      %p53 = scmp.eq.s32.totalorder %s13, 0
      %p54 = por %p52, %p53
      %p55 = scmp.ne.s32.totalorder %s47, %s49
      %p56 = scmp.eq.s32.totalorder %s18, 1
      %p57 = por %p55, %p56
      %p58 = scmp.ne.s32.totalorder %s49, %s50
      %p59 = scmp.eq.s32.totalorder %s18, 0
      %p60 = por %p58, %p59
      %p61 = scmp.ne.s32.totalorder %s49, %s50
      %p62 = scmp.eq.s32.totalorder %s19, 1
      %p63 = por %p61, %p62
      %p65 = scmp.ne.s32.totalorder %s50, %s64
      %p66 = scmp.eq.s32.totalorder %s19, 0
      %p67 = por %p65, %p66
      %s69 = sadd.s32 %s68, 1
      %p72 = scmp.eq.s32.totalorder %s13, 1
      %p73 = scmp.ne.s32.totalorder %s68, %s70
      %p74 = scmp.eq.s32.totalorder %s13, 0
      %p75 = por %p73, %p74
      %p76 = scmp.ne.s32.totalorder %s68, %s70
      %p77 = scmp.eq.s32.totalorder %s18, 1
      %p78 = por %p76, %p77
      %p79 = scmp.ne.s32.totalorder %s70, %s71
      %p80 = scmp.eq.s32.totalorder %s18, 0
      %p81 = por %p79, %p80
      %p82 = scmp.ne.s32.totalorder %s70, %s71
      %p83 = scmp.eq.s32.totalorder %s19, 1
      %p84 = por %p82, %p83
      %p86 = scmp.ne.s32.totalorder %s71, %s85
      %p87 = scmp.eq.s32.totalorder %s19, 0
      %p88 = por %p86, %p87
      %s90 = sadd.s32 %s89, 1
      %p93 = scmp.eq.s32.totalorder %s13, 1
      %p94 = scmp.ne.s32.totalorder %s89, %s91
      %p95 = scmp.eq.s32.totalorder %s13, 0
      %p96 = por %p94, %p95
      %p97 = scmp.ne.s32.totalorder %s89, %s91
      %p98 = scmp.eq.s32.totalorder %s18, 1
      %p99 = por %p97, %p98
      %p100 = scmp.ne.s32.totalorder %s91, %s92
      %p101 = scmp.eq.s32.totalorder %s18, 0
      %p102 = por %p100, %p101
      %p103 = scmp.ne.s32.totalorder %s91, %s92
      %p104 = scmp.eq.s32.totalorder %s19, 1
      %p105 = por %p103, %p104
      %p107 = scmp.ne.s32.totalorder %s92, %s106
      %p108 = scmp.eq.s32.totalorder %s19, 0
      %p109 = por %p107, %p108
      %s110 = ssub.s32 %s13, %s20
      %p111 = scmp.eq.s32.totalorder %s110, 0
      %s113 = sadd.s32 %s112, 1
      %s114 = scalar_select %p111, %s112, %s113
      %p117 = pneg %p111
      %p118 = scmp.eq.s32.totalorder %s13, 1
      %p119 = por %p117, %p118
      %p120 = scmp.ne.s32.totalorder %s112, %s115
      %p121 = scmp.eq.s32.totalorder %s13, 0
      %p122 = por %p120, %p121
      %p123 = scmp.ne.s32.totalorder %s112, %s115
      %p124 = scmp.eq.s32.totalorder %s18, 1
      %p125 = por %p123, %p124
      %p126 = scmp.ne.s32.totalorder %s115, %s116
      %p127 = scmp.eq.s32.totalorder %s18, 0
      %p128 = por %p126, %p127
      %p129 = scmp.ne.s32.totalorder %s115, %s116
      %p130 = scmp.eq.s32.totalorder %s19, 1
      %p131 = por %p129, %p130
      %p133 = scmp.ne.s32.totalorder %s116, %s132
      %p134 = scmp.eq.s32.totalorder %s19, 0
      %p135 = por %p133, %p134
      %p136 = scmp.le.s32.totalorder 1, %s13
      %p137 = scmp.lt.s32.totalorder %s13, 3
      %p138 = pnand %p136, %p137
      %p139 = pneg %p138
      // Predicated region
      $region9: #{_lambda_.5} parent=5 // pred_check
        _
      $region10: #{_lambda_.5} parent=5 // pred_check_branch
        %141 = sbr.rel (%p138) target = $region12
      $region11: #{_lambda_.5} parent=5 // pred_region
        %s142 = ssub.s32 %s13, 1
        // Predicated region
        $region13: #{_lambda_.5} parent=11 // pred_check
          %p143 = pneg %p60
        $region14: #{_lambda_.5} parent=11 // pred_check_branch
          %145 = sbr.rel (%p143) target = $region16
        $region15: #{_lambda_.5} parent=11 // pred_region
          _
        $region16: #{_lambda_.5} parent=11 // pred_fallthru
          _
        // Predicated region
        $region17: #{_lambda_.5} parent=11 // pred_check
          %p146 = pneg %p81
        $region18: #{_lambda_.5} parent=11 // pred_check_branch
          %148 = sbr.rel (%p146) target = $region20
        $region19: #{_lambda_.5} parent=11 // pred_region
          _
        $region20: #{_lambda_.5} parent=11 // pred_fallthru
          _
        // Predicated region
        $region21: #{_lambda_.5} parent=11 // pred_check
          %p149 = pneg %p102
        $region22: #{_lambda_.5} parent=11 // pred_check_branch
          %151 = sbr.rel (%p149) target = $region24
        $region23: #{_lambda_.5} parent=11 // pred_region
          _
        $region24: #{_lambda_.5} parent=11 // pred_fallthru
          _
      $region12: #{_lambda_.5} parent=5 // pred_fallthru
        _
      %p152 = scmp.lt.s32.totalorder %s13, 2
      // Predicated region
      $region25: #{_lambda_.5} parent=5 // pred_check
        %p153 = pneg %p152
      $region26: #{_lambda_.5} parent=5 // pred_check_branch
        %155 = sbr.rel (%p153) target = $region28
      $region27: #{_lambda_.5} parent=5 // pred_region
        // Predicated region
        $region29: #{_lambda_.5} parent=27 // pred_check
          %p156 = pneg %p33
        $region30: #{_lambda_.5} parent=27 // pred_check_branch
          %158 = sbr.rel (%p156) target = $region32
        $region31: #{_lambda_.5} parent=27 // pred_region
          %p159 = scmp.lt.s32.totalorder %s13, 1
          %s160 = scalar_select %p159, %s13, 1
          %s161 = smul.addr %s160, 27
          %s162 = smul.addr %s161, 4
          %s163 = scalar_lea.vmem %s0, %s162
        $region32: #{_lambda_.5} parent=27 // pred_fallthru
          _
      $region28: #{_lambda_.5} parent=5 // pred_fallthru
        _
      %p164 = scmp.le.s32.totalorder 1, %s13
      %p165 = scmp.lt.s32.totalorder %s13, 3
      %p166 = pnand %p164, %p165
      %p167 = pneg %p166
      // Predicated region
      $region33: #{_lambda_.5} parent=5 // pred_check
        _
      $region34: #{_lambda_.5} parent=5 // pred_check_branch
        %169 = sbr.rel (%p166) target = $region36
      $region35: #{_lambda_.5} parent=5 // pred_region
        %s170 = ssub.s32 %s13, 1
        %p171 = scmp.lt.s32.totalorder %s18, 1
        %s172 = scalar_select %p171, %s18, 1
        %s173 = smul.addr %s172, 27
        %s174 = smul.addr %s173, 4
        %s175 = scalar_lea.vmem %s0, %s174
        %p176 = pneg %p39
        %p177 = pneg %p36
        %p178 = pneg %p60
        %p179 = pneg %p57
        %p180 = pneg %p81
        %p181 = pneg %p78
        %p182 = pneg %p102
        %p183 = pneg %p99
        %p184 = pneg %p128
        %p185 = pneg %p125
        %s186 = sand.u32 %s115, 1
        %s187 = scalar_lea.sflag [#allocation3], %s186
        %s188 = sand.u32 %s115, 1
        %s189 = smul.addr %s188, 4
        %s190 = scalar_lea.vmem [#allocation2], %s189
        %p191 = scmp.lt.s32.totalorder %s18, 1
        %s192 = scalar_select %p191, %s18, 1
        %s193 = smul.addr %s192, 27
        %s194 = smul.addr %s193, 4
        %s195 = scalar_lea.vmem %s0, %s194
        %v197 = vld [vmem:[%s195] sm:$0xff]
        %v198 = vld [vmem:[%s195 + $0x8] sm:$0xff]
        %v199 = vld [vmem:[%s195 + $0x10] sm:$0xff]
        %v200 = vld [vmem:[%s195 + $0x18] sm:$0xff]
        %v201 = vld [vmem:[%s195 + $0x20] sm:$0xff]
        %v202 = vld [vmem:[%s195 + $0x28] sm:$0xff]
        %v203 = vld [vmem:[%s195 + $0x30] sm:$0xff]
        %v204 = vld [vmem:[%s195 + $0x38] sm:$0xff]
        %v205 = vld [vmem:[%s195 + $0x40] sm:$0xff]
        %v206 = vld [vmem:[%s195 + $0x48] sm:$0xff]
        %v207 = vld [vmem:[%s195 + $0x50] sm:$0xff]
        %v208 = vld [vmem:[%s195 + $0x58] sm:$0xff]
        %v209 = vld [vmem:[%s195 + $0x60] sm:$0xff]
        %v210 = vld [vmem:[%s195 + $0x68] sm:$0xf]
        %v211 = vld [vmem:[%s1] sm:$0xf]
        %v212 = vld [vmem:[%s1 + $0x4] sm:$0xf]
        %v213 = vld [vmem:[%s1 + $0x8] sm:$0xf]
        %v214 = vld [vmem:[%s1 + $0xc] sm:$0xf]
        %v215 = vld [vmem:[%s1 + $0x10] sm:$0xf]
        %v216 = vld [vmem:[%s1 + $0x14] sm:$0xf]
        %v217 = vld [vmem:[%s1 + $0x18] sm:$0xf]
        %v218 = vld [vmem:[%s1 + $0x1c] sm:$0xf]
        %v219 = vld [vmem:[%s1 + $0x20] sm:$0xf]
        %v220 = vld [vmem:[%s1 + $0x24] sm:$0xf]
        %v221 = vld [vmem:[%s1 + $0x28] sm:$0xf]
        %v222 = vld [vmem:[%s1 + $0x2c] sm:$0xf]
        %v223 = vld [vmem:[%s1 + $0x30] sm:$0xf]
        %v224 = vld [vmem:[%s1 + $0x34] sm:$0xf]
        %v225 = vld [vmem:[%s1 + $0x38] sm:$0xf]
        %v226 = vld [vmem:[%s1 + $0x3c] sm:$0xf]
        %v227 = vld [vmem:[%s1 + $0x40] sm:$0xf]
        %v228 = vld [vmem:[%s1 + $0x44] sm:$0xf]
        %v229 = vld [vmem:[%s1 + $0x48] sm:$0xf]
        %v230 = vld [vmem:[%s1 + $0x4c] sm:$0xf]
        %v231 = vld [vmem:[%s1 + $0x50] sm:$0xf]
        %v232 = vld [vmem:[%s1 + $0x54] sm:$0xf]
        %v233 = vld [vmem:[%s1 + $0x58] sm:$0xf]
        %v234 = vld [vmem:[%s1 + $0x5c] sm:$0xf]
        %v235 = vld [vmem:[%s1 + $0x60] sm:$0xf]
        %v236 = vld [vmem:[%s1 + $0x64] sm:$0xf]
        %v237 = vld [vmem:[%s1 + $0x68] sm:$0xf]
        %v238 = vld [vmem:[%s1 + $0x6c] sm:$0xf]
        %v239 = vld [vmem:[%s1 + $0x70] sm:$0xf]
        %v240 = vld [vmem:[%s1 + $0x74] sm:$0xf]
        %v241 = vld [vmem:[%s1 + $0x78] sm:$0xf]
        %v242 = vld [vmem:[%s1 + $0x7c] sm:$0xf]
        %v243 = vld [vmem:[%s1 + $0x80] sm:$0xf]
        %v244 = vld [vmem:[%s1 + $0x84] sm:$0xf]
        %v245 = vld [vmem:[%s1 + $0x88] sm:$0xf]
        %v246 = vld [vmem:[%s1 + $0x8c] sm:$0xf]
        %v247 = vld [vmem:[%s1 + $0x90] sm:$0xf]
        %v248 = vld [vmem:[%s1 + $0x94] sm:$0xf]
        %v249 = vld [vmem:[%s1 + $0x98] sm:$0xf]
        %v250 = vld [vmem:[%s1 + $0x9c] sm:$0xf]
        %v251 = vld [vmem:[%s1 + $0xa0] sm:$0xf]
        %v252 = vld [vmem:[%s1 + $0xa4] sm:$0xf]
        %v253 = vld [vmem:[%s1 + $0xa8] sm:$0xf]
        %v254 = vld [vmem:[%s1 + $0xac] sm:$0xf]
        %v255 = vld [vmem:[%s1 + $0xb0] sm:$0xf]
        %v256 = vld [vmem:[%s1 + $0xb4] sm:$0xf]
        %v257 = vld [vmem:[%s1 + $0xb8] sm:$0xf]
        %v258 = vld [vmem:[%s1 + $0xbc] sm:$0xf]
        %v259 = vld [vmem:[%s1 + $0xc0] sm:$0xf]
        %v260 = vld [vmem:[%s1 + $0xc4] sm:$0xf]
        %v261 = vld [vmem:[%s1 + $0xc8] sm:$0xf]
        %v262 = vld [vmem:[%s1 + $0xcc] sm:$0xf]
        %v263 = vld [vmem:[%s1 + $0xd0] sm:$0xf]
        %v264 = vld [vmem:[%s1 + $0xd4] sm:$0xf]
        %v265 = vld [vmem:[%s1 + $0xd8] sm:$0xf]
        %v266 = vld [vmem:[%s1 + $0xdc] sm:$0xf]
        %v267 = vld [vmem:[%s1 + $0xe0] sm:$0xf]
        %v268 = vld [vmem:[%s1 + $0xe4] sm:$0xf]
        %v269 = vld [vmem:[%s1 + $0xe8] sm:$0xf]
        %v270 = vld [vmem:[%s1 + $0xec] sm:$0xf]
        %v271 = vld [vmem:[%s1 + $0xf0] sm:$0xf]
        %v272 = vld [vmem:[%s1 + $0xf4] sm:$0xf]
        %v273 = vld [vmem:[%s1 + $0xf8] sm:$0xf]
        %v274 = vld [vmem:[%s1 + $0xfc] sm:$0xf]
        %v275 = vld [vmem:[%s1 + $0x100] sm:$0xf]
        %v276 = vld [vmem:[%s1 + $0x104] sm:$0xf]
        %v277 = vld [vmem:[%s1 + $0x108] sm:$0xf]
        %v278 = vld [vmem:[%s1 + $0x10c] sm:$0xf]
        %v279 = vld [vmem:[%s1 + $0x110] sm:$0xf]
        %v280 = vld [vmem:[%s1 + $0x114] sm:$0xf]
        %v281 = vld [vmem:[%s1 + $0x118] sm:$0xf]
        %v282 = vld [vmem:[%s1 + $0x11c] sm:$0xf]
        %v283 = vld [vmem:[%s1 + $0x120] sm:$0xf]
        %v284 = vld [vmem:[%s1 + $0x124] sm:$0xf]
        %v285 = vld [vmem:[%s1 + $0x128] sm:$0xf]
        %v286 = vld [vmem:[%s1 + $0x12c] sm:$0xf]
        %v287 = vld [vmem:[%s1 + $0x130] sm:$0xf]
        %v288 = vld [vmem:[%s1 + $0x134] sm:$0xf]
        %v289 = vld [vmem:[%s1 + $0x138] sm:$0xf]
        %v290 = vld [vmem:[%s1 + $0x13c] sm:$0xf]
        %v291 = vld [vmem:[%s1 + $0x140] sm:$0xf]
        %v292 = vld [vmem:[%s1 + $0x144] sm:$0xf]
        %v293 = vld [vmem:[%s1 + $0x148] sm:$0xf]
        %v294 = vld [vmem:[%s1 + $0x14c] sm:$0xf]
        %v295 = vld [vmem:[%s1 + $0x150] sm:$0xf]
        %v296 = vld [vmem:[%s1 + $0x154] sm:$0xf]
        %v297 = vld [vmem:[%s1 + $0x158] sm:$0xf]
        %v298 = vld [vmem:[%s1 + $0x15c] sm:$0xf]
        %v299 = vld [vmem:[%s1 + $0x160] sm:$0xf]
        %v300 = vld [vmem:[%s1 + $0x164] sm:$0xf]
        %v301 = vld [vmem:[%s1 + $0x168] sm:$0xf]
        %v302 = vld [vmem:[%s1 + $0x16c] sm:$0xf]
        %v303 = vld [vmem:[%s1 + $0x170] sm:$0xf]
        %v304 = vld [vmem:[%s1 + $0x174] sm:$0xf]
        %v305 = vld [vmem:[%s1 + $0x178] sm:$0xf]
        %v306 = vld [vmem:[%s1 + $0x17c] sm:$0xf]
        %v307 = vld [vmem:[%s1 + $0x180] sm:$0xf]
        %v308 = vld [vmem:[%s1 + $0x184] sm:$0xf]
        %v309 = vld [vmem:[%s1 + $0x188] sm:$0xf]
        %v310 = vld [vmem:[%s1 + $0x18c] sm:$0xf]
        %v311 = vld [vmem:[%s1 + $0x190] sm:$0xf]
        %v312 = vld [vmem:[%s1 + $0x194] sm:$0xf]
        %v313 = vld [vmem:[%s1 + $0x198] sm:$0xf]
        %v314 = vld [vmem:[%s1 + $0x19c] sm:$0xf]
        %v315 = vld [vmem:[%s1 + $0x1a0] sm:$0xf]
        %v316 = vld [vmem:[%s1 + $0x1a4] sm:$0xf]
        %v317 = vld [vmem:[%s1 + $0x1a8] sm:$0xf]
        %v318 = vld [vmem:[%s1 + $0x1ac] sm:$0xf]
        %v319 = vld [vmem:[%s1 + $0x1b0] sm:$0xf]
        %v320 = vld [vmem:[%s1 + $0x1b4] sm:$0xf]
        %v321 = vld [vmem:[%s1 + $0x1b8] sm:$0xf]
        %v322 = vld [vmem:[%s1 + $0x1bc] sm:$0xf]
        %v323 = vld [vmem:[%s1 + $0x1c0] sm:$0xf]
        %v324 = vld [vmem:[%s1 + $0x1c4] sm:$0xf]
        %v325 = vld [vmem:[%s1 + $0x1c8] sm:$0xf]
        %v326 = vld [vmem:[%s1 + $0x1cc] sm:$0xf]
        %v327 = vld [vmem:[%s1 + $0x1d0] sm:$0xf]
        %v328 = vld [vmem:[%s1 + $0x1d4] sm:$0xf]
        %v329 = vld [vmem:[%s1 + $0x1d8] sm:$0xf]
        %v330 = vld [vmem:[%s1 + $0x1dc] sm:$0xf]
        %v331 = vld [vmem:[%s1 + $0x1e0] sm:$0xf]
        %v332 = vld [vmem:[%s1 + $0x1e4] sm:$0xf]
        %v333 = vld [vmem:[%s1 + $0x1e8] sm:$0xf]
        %v334 = vld [vmem:[%s1 + $0x1ec] sm:$0xf]
        %v335 = vld [vmem:[%s1 + $0x1f0] sm:$0xf]
        %v336 = vld [vmem:[%s1 + $0x1f4] sm:$0xf]
        %v337 = vld [vmem:[%s1 + $0x1f8] sm:$0xf]
        %v338 = vld [vmem:[%s1 + $0x1fc] sm:$0xf]
        %v339 = vld [vmem:[%s1 + $0x200] sm:$0xf]
        %v340 = vld [vmem:[%s1 + $0x204] sm:$0xf]
        %v341 = vld [vmem:[%s1 + $0x208] sm:$0xf]
        %v342 = vld [vmem:[%s1 + $0x20c] sm:$0xf]
        %v343 = vld [vmem:[%s1 + $0x210] sm:$0xf]
        %v344 = vld [vmem:[%s1 + $0x214] sm:$0xf]
        %v345 = vld [vmem:[%s1 + $0x218] sm:$0xf]
        %v346 = vld [vmem:[%s1 + $0x21c] sm:$0xf]
        %v347 = vld [vmem:[%s1 + $0x220] sm:$0xf]
        %v348 = vld [vmem:[%s1 + $0x224] sm:$0xf]
        %v349 = vld [vmem:[%s1 + $0x228] sm:$0xf]
        %v350 = vld [vmem:[%s1 + $0x22c] sm:$0xf]
        %v351 = vld [vmem:[%s1 + $0x230] sm:$0xf]
        %v352 = vld [vmem:[%s1 + $0x234] sm:$0xf]
        %v353 = vld [vmem:[%s1 + $0x238] sm:$0xf]
        %v354 = vld [vmem:[%s1 + $0x23c] sm:$0xf]
        %v355 = vld [vmem:[%s1 + $0x240] sm:$0xf]
        %v356 = vld [vmem:[%s1 + $0x244] sm:$0xf]
        %v357 = vld [vmem:[%s1 + $0x248] sm:$0xf]
        %v358 = vld [vmem:[%s1 + $0x24c] sm:$0xf]
        %v359 = vld [vmem:[%s1 + $0x250] sm:$0xf]
        %v360 = vld [vmem:[%s1 + $0x254] sm:$0xf]
        %v361 = vld [vmem:[%s1 + $0x258] sm:$0xf]
        %v362 = vld [vmem:[%s1 + $0x25c] sm:$0xf]
        %v363 = vld [vmem:[%s1 + $0x260] sm:$0xf]
        %v364 = vld [vmem:[%s1 + $0x264] sm:$0xf]
        %v365 = vld [vmem:[%s1 + $0x268] sm:$0xf]
        %v366 = vld [vmem:[%s1 + $0x26c] sm:$0xf]
        %v367 = vld [vmem:[%s1 + $0x270] sm:$0xf]
        %v368 = vld [vmem:[%s1 + $0x274] sm:$0xf]
        %v369 = vld [vmem:[%s1 + $0x278] sm:$0xf]
        %v370 = vld [vmem:[%s1 + $0x27c] sm:$0xf]
        %v371 = vld [vmem:[%s1 + $0x280] sm:$0xf]
        %v372 = vld [vmem:[%s1 + $0x284] sm:$0xf]
        %v373 = vld [vmem:[%s1 + $0x288] sm:$0xf]
        %v374 = vld [vmem:[%s1 + $0x28c] sm:$0xf]
        %v375 = vld [vmem:[%s1 + $0x290] sm:$0xf]
        %v376 = vld [vmem:[%s1 + $0x294] sm:$0xf]
        %v377 = vld [vmem:[%s1 + $0x298] sm:$0xf]
        %v378 = vld [vmem:[%s1 + $0x29c] sm:$0xf]
        %v379 = vld [vmem:[%s1 + $0x2a0] sm:$0xf]
        %v380 = vld [vmem:[%s1 + $0x2a4] sm:$0xf]
        %v381 = vld [vmem:[%s1 + $0x2a8] sm:$0xf]
        %v382 = vld [vmem:[%s1 + $0x2ac] sm:$0xf]
        %v383 = vld [vmem:[%s1 + $0x2b0] sm:$0xf]
        %v384 = vld [vmem:[%s1 + $0x2b4] sm:$0xf]
        %v385 = vld [vmem:[%s1 + $0x2b8] sm:$0xf]
        %v386 = vld [vmem:[%s1 + $0x2bc] sm:$0xf]
        %v387 = vld [vmem:[%s1 + $0x2c0] sm:$0xf]
        %v388 = vld [vmem:[%s1 + $0x2c4] sm:$0xf]
        %v389 = vld [vmem:[%s1 + $0x2c8] sm:$0xf]
        %v390 = vld [vmem:[%s1 + $0x2cc] sm:$0xf]
        %v391 = vld [vmem:[%s1 + $0x2d0] sm:$0xf]
        %v392 = vld [vmem:[%s1 + $0x2d4] sm:$0xf]
        %v393 = vld [vmem:[%s1 + $0x2d8] sm:$0xf]
        %v394 = vld [vmem:[%s1 + $0x2dc] sm:$0xf]
        %v395 = vld [vmem:[%s1 + $0x2e0] sm:$0xf]
        %v396 = vld [vmem:[%s1 + $0x2e4] sm:$0xf]
        %v397 = vld [vmem:[%s1 + $0x2e8] sm:$0xf]
        %v398 = vld [vmem:[%s1 + $0x2ec] sm:$0xf]
        %v399 = vld [vmem:[%s1 + $0x2f0] sm:$0xf]
        %v400 = vld [vmem:[%s1 + $0x2f4] sm:$0xf]
        %v401 = vld [vmem:[%s1 + $0x2f8] sm:$0xf]
        %v402 = vld [vmem:[%s1 + $0x2fc] sm:$0xf]
        %v403 = vld [vmem:[%s1 + $0x300] sm:$0xf]
        %v404 = vld [vmem:[%s1 + $0x304] sm:$0xf]
        %v405 = vld [vmem:[%s1 + $0x308] sm:$0xf]
        %v406 = vld [vmem:[%s1 + $0x30c] sm:$0xf]
        %v407 = vld [vmem:[%s1 + $0x310] sm:$0xf]
        %v408 = vld [vmem:[%s1 + $0x314] sm:$0xf]
        %v409 = vld [vmem:[%s1 + $0x318] sm:$0xf]
        %v410 = vld [vmem:[%s1 + $0x31c] sm:$0xf]
        %v411 = vld [vmem:[%s1 + $0x320] sm:$0xf]
        %v412 = vld [vmem:[%s1 + $0x324] sm:$0xf]
        %v413 = vld [vmem:[%s1 + $0x328] sm:$0xf]
        %v414 = vld [vmem:[%s1 + $0x32c] sm:$0xf]
        %v415 = vld [vmem:[%s1 + $0x330] sm:$0xf]
        %v416 = vld [vmem:[%s1 + $0x334] sm:$0xf]
        %v417 = vld [vmem:[%s1 + $0x338] sm:$0xf]
        %v418 = vld [vmem:[%s1 + $0x33c] sm:$0xf]
        %v419 = vld [vmem:[%s1 + $0x340] sm:$0xf]
        %v420 = vld [vmem:[%s1 + $0x344] sm:$0xf]
        %v421 = vld [vmem:[%s1 + $0x348] sm:$0xf]
        %v422 = vld [vmem:[%s1 + $0x34c] sm:$0xf]
        %v423 = vld [vmem:[%s1 + $0x350] sm:$0xf]
        %v424 = vld [vmem:[%s1 + $0x354] sm:$0xf]
        %v425 = vld [vmem:[%s1 + $0x358] sm:$0xf]
        %v426 = vld [vmem:[%s1 + $0x35c] sm:$0xf]
        %v427 = vld [vmem:[%s1 + $0x360] sm:$0xf]
        %v428 = vld [vmem:[%s1 + $0x364] sm:$0xf]
        %v429 = vld [vmem:[%s1 + $0x368] sm:$0xf]
        %v430 = vld [vmem:[%s1 + $0x36c] sm:$0xf]
        %v431 = vld [vmem:[%s1 + $0x370] sm:$0xf]
        %v432 = vld [vmem:[%s1 + $0x374] sm:$0xf]
        %v433 = vld [vmem:[%s1 + $0x378] sm:$0xf]
        %v434 = vld [vmem:[%s1 + $0x37c] sm:$0xf]
        %v435 = vld [vmem:[%s1 + $0x380] sm:$0xf]
        %v436 = vld [vmem:[%s1 + $0x384] sm:$0xf]
        %v437 = vld [vmem:[%s1 + $0x388] sm:$0xf]
        %v438 = vld [vmem:[%s1 + $0x38c] sm:$0xf]
        %v439 = vld [vmem:[%s1 + $0x390] sm:$0xf]
        %v440 = vld [vmem:[%s1 + $0x394] sm:$0xf]
        %v441 = vld [vmem:[%s1 + $0x398] sm:$0xf]
        %v442 = vld [vmem:[%s1 + $0x39c] sm:$0xf]
        %v443 = vld [vmem:[%s1 + $0x3a0] sm:$0xf]
        %v444 = vld [vmem:[%s1 + $0x3a4] sm:$0xf]
        %v445 = vld [vmem:[%s1 + $0x3a8] sm:$0xf]
        %v446 = vld [vmem:[%s1 + $0x3ac] sm:$0xf]
        %v447 = vld [vmem:[%s1 + $0x3b0] sm:$0xf]
        %v448 = vld [vmem:[%s1 + $0x3b4] sm:$0xf]
        %v449 = vld [vmem:[%s1 + $0x3b8] sm:$0xf]
        %v450 = vld [vmem:[%s1 + $0x3bc] sm:$0xf]
        %v451 = vld [vmem:[%s1 + $0x3c0] sm:$0xf]
        %v452 = vld [vmem:[%s1 + $0x3c4] sm:$0xf]
        %v453 = vld [vmem:[%s1 + $0x3c8] sm:$0xf]
        %v454 = vld [vmem:[%s1 + $0x3cc] sm:$0xf]
        %v455 = vld [vmem:[%s1 + $0x3d0] sm:$0xf]
        %v456 = vld [vmem:[%s1 + $0x3d4] sm:$0xf]
        %v457 = vld [vmem:[%s1 + $0x3d8] sm:$0xf]
        %v458 = vld [vmem:[%s1 + $0x3dc] sm:$0xf]
        %v459 = vld [vmem:[%s1 + $0x3e0] sm:$0xf]
        %v460 = vld [vmem:[%s1 + $0x3e4] sm:$0xf]
        %v461 = vld [vmem:[%s1 + $0x3e8] sm:$0xf]
        %v462 = vld [vmem:[%s1 + $0x3ec] sm:$0xf]
        %v463 = vld [vmem:[%s1 + $0x3f0] sm:$0xf]
        %v464 = vld [vmem:[%s1 + $0x3f4] sm:$0xf]
        %v465 = vld [vmem:[%s1 + $0x3f8] sm:$0xf]
        %v466 = vld [vmem:[%s1 + $0x3fc] sm:$0xf]
        %v467 = vld [vmem:[%s1 + $0x400] sm:$0xf]
        %v468 = vld [vmem:[%s1 + $0x404] sm:$0xf]
        %v469 = vld [vmem:[%s1 + $0x408] sm:$0xf]
        %v470 = vld [vmem:[%s1 + $0x40c] sm:$0xf]
        %v471 = vld [vmem:[%s1 + $0x410] sm:$0xf]
        %v472 = vld [vmem:[%s1 + $0x414] sm:$0xf]
        %v473 = vld [vmem:[%s1 + $0x418] sm:$0xf]
        %v474 = vld [vmem:[%s1 + $0x41c] sm:$0xf]
        %v475 = vld [vmem:[%s1 + $0x420] sm:$0xf]
        %v476 = vld [vmem:[%s1 + $0x424] sm:$0xf]
        %v477 = vld [vmem:[%s1 + $0x428] sm:$0xf]
        %v478 = vld [vmem:[%s1 + $0x42c] sm:$0xf]
        %v479 = vld [vmem:[%s1 + $0x430] sm:$0xf]
        %v480 = vld [vmem:[%s1 + $0x434] sm:$0xf]
        %v481 = vld [vmem:[%s1 + $0x438] sm:$0xf]
        %v482 = vld [vmem:[%s1 + $0x43c] sm:$0xf]
        %v483 = vld [vmem:[%s1 + $0x440] sm:$0xf]
        %v484 = vld [vmem:[%s1 + $0x444] sm:$0xf]
        %v485 = vld [vmem:[%s1 + $0x448] sm:$0xf]
        %v486 = vld [vmem:[%s1 + $0x44c] sm:$0xf]
        %v487 = vld [vmem:[%s1 + $0x450] sm:$0xf]
        %v488 = vld [vmem:[%s1 + $0x454] sm:$0xf]
        %v489 = vld [vmem:[%s1 + $0x458] sm:$0xf]
        %v490 = vld [vmem:[%s1 + $0x45c] sm:$0xf]
        %v491 = vld [vmem:[%s1 + $0x460] sm:$0xf]
        %v492 = vld [vmem:[%s1 + $0x464] sm:$0xf]
        %v493 = vld [vmem:[%s1 + $0x468] sm:$0xf]
        %v494 = vld [vmem:[%s1 + $0x46c] sm:$0xf]
        %v495 = vld [vmem:[%s1 + $0x470] sm:$0xf]
        %v496 = vld [vmem:[%s1 + $0x474] sm:$0xf]
        %v497 = vld [vmem:[%s1 + $0x478] sm:$0xf]
        %v498 = vld [vmem:[%s1 + $0x47c] sm:$0xf]
        %v499 = vld [vmem:[%s1 + $0x480] sm:$0xf]
        %v500 = vld [vmem:[%s1 + $0x484] sm:$0xf]
        %v501 = vld [vmem:[%s1 + $0x488] sm:$0xf]
        %v502 = vld [vmem:[%s1 + $0x48c] sm:$0xf]
        %v503 = vld [vmem:[%s1 + $0x490] sm:$0xf]
        %v504 = vld [vmem:[%s1 + $0x494] sm:$0xf]
        %v505 = vld [vmem:[%s1 + $0x498] sm:$0xf]
        %v506 = vld [vmem:[%s1 + $0x49c] sm:$0xf]
        %v507 = vld [vmem:[%s1 + $0x4a0] sm:$0xf]
        %v508 = vld [vmem:[%s1 + $0x4a4] sm:$0xf]
        %v509 = vld [vmem:[%s1 + $0x4a8] sm:$0xf]
        %v510 = vld [vmem:[%s1 + $0x4ac] sm:$0xf]
        %v511 = vld [vmem:[%s1 + $0x4b0] sm:$0xf]
        %v512 = vld [vmem:[%s1 + $0x4b4] sm:$0xf]
        %v513 = vld [vmem:[%s1 + $0x4b8] sm:$0xf]
        %v514 = vld [vmem:[%s1 + $0x4bc] sm:$0xf]
        %v515 = vld [vmem:[%s1 + $0x4c0] sm:$0xf]
        %v516 = vld [vmem:[%s1 + $0x4c4] sm:$0xf]
        %v517 = vld [vmem:[%s1 + $0x4c8] sm:$0xf]
        %v518 = vld [vmem:[%s1 + $0x4cc] sm:$0xf]
        %v519 = vld [vmem:[%s1 + $0x4d0] sm:$0xf]
        %v520 = vld [vmem:[%s1 + $0x4d4] sm:$0xf]
        %v521 = vld [vmem:[%s1 + $0x4d8] sm:$0xf]
        %v522 = vld [vmem:[%s1 + $0x4dc] sm:$0xf]
        %v523 = vld [vmem:[%s1 + $0x4e0] sm:$0xf]
        %v524 = vld [vmem:[%s1 + $0x4e4] sm:$0xf]
        %v525 = vld [vmem:[%s1 + $0x4e8] sm:$0xf]
        %v526 = vld [vmem:[%s1 + $0x4ec] sm:$0xf]
        %v527 = vld [vmem:[%s1 + $0x4f0] sm:$0xf]
        %v528 = vld [vmem:[%s1 + $0x4f4] sm:$0xf]
        %v529 = vld [vmem:[%s1 + $0x4f8] sm:$0xf]
        %v530 = vld [vmem:[%s1 + $0x4fc] sm:$0xf]
        %v531 = vld [vmem:[%s1 + $0x500] sm:$0xf]
        %v532 = vld [vmem:[%s1 + $0x504] sm:$0xf]
        %v533 = vld [vmem:[%s1 + $0x508] sm:$0xf]
        %v534 = vld [vmem:[%s1 + $0x50c] sm:$0xf]
        %v535 = vld [vmem:[%s1 + $0x510] sm:$0xf]
        %v536 = vld [vmem:[%s1 + $0x514] sm:$0xf]
        %v537 = vld [vmem:[%s1 + $0x518] sm:$0xf]
        %v538 = vld [vmem:[%s1 + $0x51c] sm:$0xf]
        %v539 = vld [vmem:[%s1 + $0x520] sm:$0xf]
        %v540 = vld [vmem:[%s1 + $0x524] sm:$0xf]
        %v541 = vld [vmem:[%s1 + $0x528] sm:$0xf]
        %v542 = vld [vmem:[%s1 + $0x52c] sm:$0xf]
        %v543 = vld [vmem:[%s1 + $0x530] sm:$0xf]
        %v544 = vld [vmem:[%s1 + $0x534] sm:$0xf]
        %v545 = vld [vmem:[%s1 + $0x538] sm:$0xf]
        %v546 = vld [vmem:[%s1 + $0x53c] sm:$0xf]
        %v547 = vld [vmem:[%s1 + $0x540] sm:$0xf]
        %v548 = vld [vmem:[%s1 + $0x544] sm:$0xf]
        %v549 = vld [vmem:[%s1 + $0x548] sm:$0xf]
        %v550 = vld [vmem:[%s1 + $0x54c] sm:$0xf]
        %v551 = vld [vmem:[%s1 + $0x550] sm:$0xf]
        %v552 = vld [vmem:[%s1 + $0x554] sm:$0xf]
        %v553 = vld [vmem:[%s1 + $0x558] sm:$0xf]
        %v554 = vld [vmem:[%s1 + $0x55c] sm:$0xf]
        %v555 = vld [vmem:[%s1 + $0x560] sm:$0xf]
        %v556 = vld [vmem:[%s1 + $0x564] sm:$0xf]
        %v557 = vld [vmem:[%s1 + $0x568] sm:$0xf]
        %v558 = vld [vmem:[%s1 + $0x56c] sm:$0xf]
        %v559 = vld [vmem:[%s1 + $0x570] sm:$0xf]
        %v560 = vld [vmem:[%s1 + $0x574] sm:$0xf]
        %v561 = vld [vmem:[%s1 + $0x578] sm:$0xf]
        %v562 = vld [vmem:[%s1 + $0x57c] sm:$0xf]
        %v563 = vld [vmem:[%s1 + $0x580] sm:$0xf]
        %v564 = vld [vmem:[%s1 + $0x584] sm:$0xf]
        %v565 = vld [vmem:[%s1 + $0x588] sm:$0xf]
        %v566 = vld [vmem:[%s1 + $0x58c] sm:$0xf]
        %v567 = vld [vmem:[%s1 + $0x590] sm:$0xf]
        %v568 = vld [vmem:[%s1 + $0x594] sm:$0xf]
        %v569 = vld [vmem:[%s1 + $0x598] sm:$0xf]
        %v570 = vld [vmem:[%s1 + $0x59c] sm:$0xf]
        %v571 = vld [vmem:[%s1 + $0x5a0] sm:$0xf]
        %v572 = vld [vmem:[%s1 + $0x5a4] sm:$0xf]
        %v573 = vld [vmem:[%s1 + $0x5a8] sm:$0xf]
        %v574 = vld [vmem:[%s1 + $0x5ac] sm:$0xf]
        %v575 = vld [vmem:[%s1 + $0x5b0] sm:$0xf]
        %v576 = vld [vmem:[%s1 + $0x5b4] sm:$0xf]
        %v577 = vld [vmem:[%s1 + $0x5b8] sm:$0xf]
        %v578 = vld [vmem:[%s1 + $0x5bc] sm:$0xf]
        %v579 = vld [vmem:[%s1 + $0x5c0] sm:$0xf]
        %v580 = vld [vmem:[%s1 + $0x5c4] sm:$0xf]
        %v581 = vld [vmem:[%s1 + $0x5c8] sm:$0xf]
        %v582 = vld [vmem:[%s1 + $0x5cc] sm:$0xf]
        %v583 = vld [vmem:[%s1 + $0x5d0] sm:$0xf]
        %v584 = vld [vmem:[%s1 + $0x5d4] sm:$0xf]
        %v585 = vld [vmem:[%s1 + $0x5d8] sm:$0xf]
        %v586 = vld [vmem:[%s1 + $0x5dc] sm:$0xf]
        %v587 = vld [vmem:[%s1 + $0x5e0] sm:$0xf]
        %v588 = vld [vmem:[%s1 + $0x5e4] sm:$0xf]
        %v589 = vld [vmem:[%s1 + $0x5e8] sm:$0xf]
        %v590 = vld [vmem:[%s1 + $0x5ec] sm:$0xf]
        %v591 = vld [vmem:[%s1 + $0x5f0] sm:$0xf]
        %v592 = vld [vmem:[%s1 + $0x5f4] sm:$0xf]
        %v593 = vld [vmem:[%s1 + $0x5f8] sm:$0xf]
        %v594 = vld [vmem:[%s1 + $0x5fc] sm:$0xf]
        %v595 = vld [vmem:[%s1 + $0x600] sm:$0xf]
        %v596 = vld [vmem:[%s1 + $0x604] sm:$0xf]
        %v597 = vld [vmem:[%s1 + $0x608] sm:$0xf]
        %v598 = vld [vmem:[%s1 + $0x60c] sm:$0xf]
        %v599 = vld [vmem:[%s1 + $0x610] sm:$0xf]
        %v600 = vld [vmem:[%s1 + $0x614] sm:$0xf]
        %v601 = vld [vmem:[%s1 + $0x618] sm:$0xf]
        %v602 = vld [vmem:[%s1 + $0x61c] sm:$0xf]
        %v603 = vld [vmem:[%s1 + $0x620] sm:$0xf]
        %v604 = vld [vmem:[%s1 + $0x624] sm:$0xf]
        %v605 = vld [vmem:[%s1 + $0x628] sm:$0xf]
        %v606 = vld [vmem:[%s1 + $0x62c] sm:$0xf]
        %v607 = vld [vmem:[%s1 + $0x630] sm:$0xf]
        %v608 = vld [vmem:[%s1 + $0x634] sm:$0xf]
        %v609 = vld [vmem:[%s1 + $0x638] sm:$0xf]
        %v610 = vld [vmem:[%s1 + $0x63c] sm:$0xf]
        %v611 = vld [vmem:[%s1 + $0x640] sm:$0xf]
        %v612 = vld [vmem:[%s1 + $0x644] sm:$0xf]
        %v613 = vld [vmem:[%s1 + $0x648] sm:$0xf]
        %v614 = vld [vmem:[%s1 + $0x64c] sm:$0xf]
        %v615 = vld [vmem:[%s1 + $0x650] sm:$0xf]
        %v616 = vld [vmem:[%s1 + $0x654] sm:$0xf]
        %v617 = vld [vmem:[%s1 + $0x658] sm:$0xf]
        %v618 = vld [vmem:[%s1 + $0x65c] sm:$0xf]
        %v619 = vld [vmem:[%s1 + $0x660] sm:$0xf]
        %v620 = vld [vmem:[%s1 + $0x664] sm:$0xf]
        %v621 = vld [vmem:[%s1 + $0x668] sm:$0xf]
        %v622 = vld [vmem:[%s1 + $0x66c] sm:$0xf]
        %v623 = vld [vmem:[%s1 + $0x670] sm:$0xf]
        %v624 = vld [vmem:[%s1 + $0x674] sm:$0xf]
        %v625 = vld [vmem:[%s1 + $0x678] sm:$0xf]
        %v626 = vld [vmem:[%s1 + $0x67c] sm:$0xf]
        %v627 = vld [vmem:[%s1 + $0x680] sm:$0xf]
        %v628 = vld [vmem:[%s1 + $0x684] sm:$0xf]
        %v629 = vld [vmem:[%s1 + $0x688] sm:$0xf]
        %v630 = vld [vmem:[%s1 + $0x68c] sm:$0xf]
        %v631 = vld [vmem:[%s1 + $0x690] sm:$0xf]
        %v632 = vld [vmem:[%s1 + $0x694] sm:$0xf]
        %v633 = vld [vmem:[%s1 + $0x698] sm:$0xf]
        %v634 = vld [vmem:[%s1 + $0x69c] sm:$0xf]
        %v635 = vld [vmem:[%s1 + $0x6a0] sm:$0xf]
        %v636 = vld [vmem:[%s1 + $0x6a4] sm:$0xf]
        %v637 = vld [vmem:[%s1 + $0x6a8] sm:$0xf]
        %v638 = vld [vmem:[%s1 + $0x6ac] sm:$0xf]
        %v639 = vld [vmem:[%s1 + $0x6b0] sm:$0xf]
        %v640 = vld [vmem:[%s1 + $0x6b4] sm:$0xf]
        %v641 = vld [vmem:[%s1 + $0x6b8] sm:$0xf]
        %v642 = vld [vmem:[%s1 + $0x6bc] sm:$0xf]
        %v643 = vld [vmem:[%s2] sm:$0x1]
        %v645 = vlaneseq
        %v646 = vshrl.u32 %v645, 7
        %v647 = vsub.s32 0, %v646
        %v648 = vrot.slane %v643, %v647
        %v664 = vunpack.c.l.b16 %v197
        %v665 = vunpack.c.h.b16 %v197
        %v666 = vunpack.c.l.b16 %v198
        %v667 = vunpack.c.h.b16 %v198
        %v668 = vunpack.c.l.b16 %v199
        %v669 = vunpack.c.h.b16 %v199
        %v670 = vunpack.c.l.b16 %v200
        %v671 = vunpack.c.h.b16 %v200
        %v672 = vunpack.c.l.b16 %v201
        %v673 = vunpack.c.h.b16 %v201
        %v674 = vunpack.c.l.b16 %v202
        %v675 = vunpack.c.h.b16 %v202
        %v676 = vunpack.c.l.b16 %v203
        %v677 = vunpack.c.h.b16 %v203
        %v678 = vunpack.c.l.b16 %v204
        %v679 = vunpack.c.h.b16 %v204
        %v680 = vunpack.c.l.b16 %v205
        %v681 = vunpack.c.h.b16 %v205
        %v682 = vunpack.c.l.b16 %v206
        %v683 = vunpack.c.h.b16 %v206
        %v684 = vunpack.c.l.b16 %v207
        %v685 = vunpack.c.h.b16 %v207
        %v686 = vunpack.c.l.b16 %v208
        %v687 = vunpack.c.h.b16 %v208
        %v688 = vunpack.c.l.b16 %v209
        %v689 = vunpack.c.h.b16 %v209
        %v690 = vunpack.c.l.b16 %v210
        %v691 = vpack.c.b16 %v664, %v664
        %v692 = vpack.c.b16 %v665, %v665
        %v693 = vpack.c.b16 %v666, %v666
        %v694 = vpack.c.b16 %v667, %v667
        %v695 = vpack.c.b16 %v668, %v668
        %v696 = vpack.c.b16 %v669, %v669
        %v697 = vpack.c.b16 %v670, %v670
        %v698 = vpack.c.b16 %v671, %v671
        %v699 = vpack.c.b16 %v672, %v672
        %v700 = vpack.c.b16 %v673, %v673
        %v701 = vpack.c.b16 %v674, %v674
        %v702 = vpack.c.b16 %v675, %v675
        %v703 = vpack.c.b16 %v676, %v676
        %v704 = vpack.c.b16 %v677, %v677
        %v705 = vpack.c.b16 %v678, %v678
        %v706 = vpack.c.b16 %v679, %v679
        %v707 = vpack.c.b16 %v680, %v680
        %v708 = vpack.c.b16 %v681, %v681
        %v709 = vpack.c.b16 %v682, %v682
        %v710 = vpack.c.b16 %v683, %v683
        %v711 = vpack.c.b16 %v684, %v684
        %v712 = vpack.c.b16 %v685, %v685
        %v713 = vpack.c.b16 %v686, %v686
        %v714 = vpack.c.b16 %v687, %v687
        %v715 = vpack.c.b16 %v688, %v688
        %v716 = vpack.c.b16 %v689, %v689
        %v717 = vpack.c.b16 %v690, %v690
        %v1177 = vunpack.c.l.b16 %v211
        %v1178 = vunpack.c.l.b16 %v212
        %v1179 = vunpack.c.l.b16 %v213
        %v1180 = vunpack.c.l.b16 %v214
        %v1181 = vunpack.c.l.b16 %v215
        %v1182 = vunpack.c.l.b16 %v216
        %v1183 = vunpack.c.l.b16 %v217
        %v1184 = vunpack.c.l.b16 %v218
        %v1185 = vunpack.c.l.b16 %v219
        %v1186 = vunpack.c.l.b16 %v220
        %v1187 = vunpack.c.l.b16 %v221
        %v1188 = vunpack.c.l.b16 %v222
        %v1189 = vunpack.c.l.b16 %v223
        %v1190 = vunpack.c.l.b16 %v224
        %v1191 = vunpack.c.l.b16 %v225
        %v1192 = vunpack.c.l.b16 %v226
        %v1193 = vunpack.c.l.b16 %v227
        %v1194 = vunpack.c.l.b16 %v228
        %v1195 = vunpack.c.l.b16 %v229
        %v1196 = vunpack.c.l.b16 %v230
        %v1197 = vunpack.c.l.b16 %v231
        %v1198 = vunpack.c.l.b16 %v232
        %v1199 = vunpack.c.l.b16 %v233
        %v1200 = vunpack.c.l.b16 %v234
        %v1201 = vunpack.c.l.b16 %v235
        %v1202 = vunpack.c.l.b16 %v236
        %v1203 = vunpack.c.l.b16 %v237
        %v1204 = vunpack.c.l.b16 %v238
        %v1205 = vunpack.c.l.b16 %v239
        %v1206 = vunpack.c.l.b16 %v240
        %v1207 = vunpack.c.l.b16 %v241
        %v1208 = vunpack.c.l.b16 %v242
        %v1209 = vunpack.c.l.b16 %v243
        %v1210 = vunpack.c.l.b16 %v244
        %v1211 = vunpack.c.l.b16 %v245
        %v1212 = vunpack.c.l.b16 %v246
        %v1213 = vunpack.c.l.b16 %v247
        %v1214 = vunpack.c.l.b16 %v248
        %v1215 = vunpack.c.l.b16 %v249
        %v1216 = vunpack.c.l.b16 %v250
        %v1217 = vunpack.c.l.b16 %v251
        %v1218 = vunpack.c.l.b16 %v252
        %v1219 = vunpack.c.l.b16 %v253
        %v1220 = vunpack.c.l.b16 %v254
        %v1221 = vunpack.c.l.b16 %v255
        %v1222 = vunpack.c.l.b16 %v256
        %v1223 = vunpack.c.l.b16 %v257
        %v1224 = vunpack.c.l.b16 %v258
        %v1225 = vunpack.c.l.b16 %v259
        %v1226 = vunpack.c.l.b16 %v260
        %v1227 = vunpack.c.l.b16 %v261
        %v1228 = vunpack.c.l.b16 %v262
        %v1229 = vunpack.c.l.b16 %v263
        %v1230 = vunpack.c.l.b16 %v264
        %v1231 = vunpack.c.l.b16 %v265
        %v1232 = vunpack.c.l.b16 %v266
        %v1233 = vunpack.c.l.b16 %v267
        %v1234 = vunpack.c.l.b16 %v268
        %v1235 = vunpack.c.l.b16 %v269
        %v1236 = vunpack.c.l.b16 %v270
        %v1237 = vunpack.c.l.b16 %v271
        %v1238 = vunpack.c.l.b16 %v272
        %v1239 = vunpack.c.l.b16 %v273
        %v1240 = vunpack.c.l.b16 %v274
        %v1241 = vunpack.c.l.b16 %v275
        %v1242 = vunpack.c.l.b16 %v276
        %v1243 = vunpack.c.l.b16 %v277
        %v1244 = vunpack.c.l.b16 %v278
        %v1245 = vunpack.c.l.b16 %v279
        %v1246 = vunpack.c.l.b16 %v280
        %v1247 = vunpack.c.l.b16 %v281
        %v1248 = vunpack.c.l.b16 %v282
        %v1249 = vunpack.c.l.b16 %v283
        %v1250 = vunpack.c.l.b16 %v284
        %v1251 = vunpack.c.l.b16 %v285
        %v1252 = vunpack.c.l.b16 %v286
        %v1253 = vunpack.c.l.b16 %v287
        %v1254 = vunpack.c.l.b16 %v288
        %v1255 = vunpack.c.l.b16 %v289
        %v1256 = vunpack.c.l.b16 %v290
        %v1257 = vunpack.c.l.b16 %v291
        %v1258 = vunpack.c.l.b16 %v292
        %v1259 = vunpack.c.l.b16 %v293
        %v1260 = vunpack.c.l.b16 %v294
        %v1261 = vunpack.c.l.b16 %v295
        %v1262 = vunpack.c.l.b16 %v296
        %v1263 = vunpack.c.l.b16 %v297
        %v1264 = vunpack.c.l.b16 %v298
        %v1265 = vunpack.c.l.b16 %v299
        %v1266 = vunpack.c.l.b16 %v300
        %v1267 = vunpack.c.l.b16 %v301
        %v1268 = vunpack.c.l.b16 %v302
        %v1269 = vunpack.c.l.b16 %v303
        %v1270 = vunpack.c.l.b16 %v304
        %v1271 = vunpack.c.l.b16 %v305
        %v1272 = vunpack.c.l.b16 %v306
        %v1273 = vunpack.c.l.b16 %v307
        %v1274 = vunpack.c.l.b16 %v308
        %v1275 = vunpack.c.l.b16 %v309
        %v1276 = vunpack.c.l.b16 %v310
        %v1277 = vunpack.c.l.b16 %v311
        %v1278 = vunpack.c.l.b16 %v312
        %v1279 = vunpack.c.l.b16 %v313
        %v1280 = vunpack.c.l.b16 %v314
        %v1281 = vunpack.c.l.b16 %v315
        %v1282 = vunpack.c.l.b16 %v316
        %v1283 = vunpack.c.l.b16 %v317
        %v1284 = vunpack.c.l.b16 %v318
        %v1285 = vunpack.c.l.b16 %v319
        %v1286 = vunpack.c.l.b16 %v320
        %v1287 = vunpack.c.l.b16 %v321
        %v1288 = vunpack.c.l.b16 %v322
        %v1289 = vunpack.c.l.b16 %v323
        %v1290 = vunpack.c.l.b16 %v324
        %v1291 = vunpack.c.l.b16 %v325
        %v1292 = vunpack.c.l.b16 %v326
        %v1293 = vunpack.c.l.b16 %v327
        %v1294 = vunpack.c.l.b16 %v328
        %v1295 = vunpack.c.l.b16 %v329
        %v1296 = vunpack.c.l.b16 %v330
        %v1297 = vunpack.c.l.b16 %v331
        %v1298 = vunpack.c.l.b16 %v332
        %v1299 = vunpack.c.l.b16 %v333
        %v1300 = vunpack.c.l.b16 %v334
        %v1301 = vunpack.c.l.b16 %v335
        %v1302 = vunpack.c.l.b16 %v336
        %v1303 = vunpack.c.l.b16 %v337
        %v1304 = vunpack.c.l.b16 %v338
        %v1305 = vunpack.c.l.b16 %v339
        %v1306 = vunpack.c.l.b16 %v340
        %v1307 = vunpack.c.l.b16 %v341
        %v1308 = vunpack.c.l.b16 %v342
        %v1309 = vunpack.c.l.b16 %v343
        %v1310 = vunpack.c.l.b16 %v344
        %v1311 = vunpack.c.l.b16 %v345
        %v1312 = vunpack.c.l.b16 %v346
        %v1313 = vunpack.c.l.b16 %v347
        %v1314 = vunpack.c.l.b16 %v348
        %v1315 = vunpack.c.l.b16 %v349
        %v1316 = vunpack.c.l.b16 %v350
        %v1317 = vunpack.c.l.b16 %v351
        %v1318 = vunpack.c.l.b16 %v352
        %v1319 = vunpack.c.l.b16 %v353
        %v1320 = vunpack.c.l.b16 %v354
        %v1321 = vunpack.c.l.b16 %v355
        %v1322 = vunpack.c.l.b16 %v356
        %v1323 = vunpack.c.l.b16 %v357
        %v1324 = vunpack.c.l.b16 %v358
        %v1325 = vunpack.c.l.b16 %v359
        %v1326 = vunpack.c.l.b16 %v360
        %v1327 = vunpack.c.l.b16 %v361
        %v1328 = vunpack.c.l.b16 %v362
        %v1329 = vunpack.c.l.b16 %v363
        %v1330 = vunpack.c.l.b16 %v364
        %v1331 = vunpack.c.l.b16 %v365
        %v1332 = vunpack.c.l.b16 %v366
        %v1333 = vunpack.c.l.b16 %v367
        %v1334 = vunpack.c.l.b16 %v368
        %v1335 = vunpack.c.l.b16 %v369
        %v1336 = vunpack.c.l.b16 %v370
        %v1337 = vunpack.c.l.b16 %v371
        %v1338 = vunpack.c.l.b16 %v372
        %v1339 = vunpack.c.l.b16 %v373
        %v1340 = vunpack.c.l.b16 %v374
        %v1341 = vunpack.c.l.b16 %v375
        %v1342 = vunpack.c.l.b16 %v376
        %v1343 = vunpack.c.l.b16 %v377
        %v1344 = vunpack.c.l.b16 %v378
        %v1345 = vunpack.c.l.b16 %v379
        %v1346 = vunpack.c.l.b16 %v380
        %v1347 = vunpack.c.l.b16 %v381
        %v1348 = vunpack.c.l.b16 %v382
        %v1349 = vunpack.c.l.b16 %v383
        %v1350 = vunpack.c.l.b16 %v384
        %v1351 = vunpack.c.l.b16 %v385
        %v1352 = vunpack.c.l.b16 %v386
        %v1353 = vunpack.c.l.b16 %v387
        %v1354 = vunpack.c.l.b16 %v388
        %v1355 = vunpack.c.l.b16 %v389
        %v1356 = vunpack.c.l.b16 %v390
        %v1357 = vunpack.c.l.b16 %v391
        %v1358 = vunpack.c.l.b16 %v392
        %v1359 = vunpack.c.l.b16 %v393
        %v1360 = vunpack.c.l.b16 %v394
        %v1361 = vunpack.c.l.b16 %v395
        %v1362 = vunpack.c.l.b16 %v396
        %v1363 = vunpack.c.l.b16 %v397
        %v1364 = vunpack.c.l.b16 %v398
        %v1365 = vunpack.c.l.b16 %v399
        %v1366 = vunpack.c.l.b16 %v400
        %v1367 = vunpack.c.l.b16 %v401
        %v1368 = vunpack.c.l.b16 %v402
        %v1369 = vunpack.c.l.b16 %v403
        %v1370 = vunpack.c.l.b16 %v404
        %v1371 = vunpack.c.l.b16 %v405
        %v1372 = vunpack.c.l.b16 %v406
        %v1373 = vunpack.c.l.b16 %v407
        %v1374 = vunpack.c.l.b16 %v408
        %v1375 = vunpack.c.l.b16 %v409
        %v1376 = vunpack.c.l.b16 %v410
        %v1377 = vunpack.c.l.b16 %v411
        %v1378 = vunpack.c.l.b16 %v412
        %v1379 = vunpack.c.l.b16 %v413
        %v1380 = vunpack.c.l.b16 %v414
        %v1381 = vunpack.c.l.b16 %v415
        %v1382 = vunpack.c.l.b16 %v416
        %v1383 = vunpack.c.l.b16 %v417
        %v1384 = vunpack.c.l.b16 %v418
        %v1385 = vunpack.c.l.b16 %v419
        %v1386 = vunpack.c.l.b16 %v420
        %v1387 = vunpack.c.l.b16 %v421
        %v1388 = vunpack.c.l.b16 %v422
        %v1389 = vunpack.c.l.b16 %v423
        %v1390 = vunpack.c.l.b16 %v424
        %v1391 = vunpack.c.l.b16 %v425
        %v1392 = vunpack.c.l.b16 %v426
        %v1393 = vunpack.c.l.b16 %v427
        %v1394 = vunpack.c.l.b16 %v428
        %v1395 = vunpack.c.l.b16 %v429
        %v1396 = vunpack.c.l.b16 %v430
        %v1397 = vunpack.c.l.b16 %v431
        %v1398 = vunpack.c.l.b16 %v432
        %v1399 = vunpack.c.l.b16 %v433
        %v1400 = vunpack.c.l.b16 %v434
        %v1401 = vunpack.c.l.b16 %v435
        %v1402 = vunpack.c.l.b16 %v436
        %v1403 = vunpack.c.l.b16 %v437
        %v1404 = vunpack.c.l.b16 %v438
        %v1405 = vunpack.c.l.b16 %v439
        %v1406 = vunpack.c.l.b16 %v440
        %v1407 = vunpack.c.l.b16 %v441
        %v1408 = vunpack.c.l.b16 %v442
        %v1409 = vunpack.c.l.b16 %v443
        %v1410 = vunpack.c.l.b16 %v444
        %v1411 = vunpack.c.l.b16 %v445
        %v1412 = vunpack.c.l.b16 %v446
        %v1413 = vunpack.c.l.b16 %v447
        %v1414 = vunpack.c.l.b16 %v448
        %v1415 = vunpack.c.l.b16 %v449
        %v1416 = vunpack.c.l.b16 %v450
        %v1417 = vunpack.c.l.b16 %v451
        %v1418 = vunpack.c.l.b16 %v452
        %v1419 = vunpack.c.l.b16 %v453
        %v1420 = vunpack.c.l.b16 %v454
        %v1421 = vunpack.c.l.b16 %v455
        %v1422 = vunpack.c.l.b16 %v456
        %v1423 = vunpack.c.l.b16 %v457
        %v1424 = vunpack.c.l.b16 %v458
        %v1425 = vunpack.c.l.b16 %v459
        %v1426 = vunpack.c.l.b16 %v460
        %v1427 = vunpack.c.l.b16 %v461
        %v1428 = vunpack.c.l.b16 %v462
        %v1429 = vunpack.c.l.b16 %v463
        %v1430 = vunpack.c.l.b16 %v464
        %v1431 = vunpack.c.l.b16 %v465
        %v1432 = vunpack.c.l.b16 %v466
        %v1433 = vunpack.c.l.b16 %v467
        %v1434 = vunpack.c.l.b16 %v468
        %v1435 = vunpack.c.l.b16 %v469
        %v1436 = vunpack.c.l.b16 %v470
        %v1437 = vunpack.c.l.b16 %v471
        %v1438 = vunpack.c.l.b16 %v472
        %v1439 = vunpack.c.l.b16 %v473
        %v1440 = vunpack.c.l.b16 %v474
        %v1441 = vunpack.c.l.b16 %v475
        %v1442 = vunpack.c.l.b16 %v476
        %v1443 = vunpack.c.l.b16 %v477
        %v1444 = vunpack.c.l.b16 %v478
        %v1445 = vunpack.c.l.b16 %v479
        %v1446 = vunpack.c.l.b16 %v480
        %v1447 = vunpack.c.l.b16 %v481
        %v1448 = vunpack.c.l.b16 %v482
        %v1449 = vunpack.c.l.b16 %v483
        %v1450 = vunpack.c.l.b16 %v484
        %v1451 = vunpack.c.l.b16 %v485
        %v1452 = vunpack.c.l.b16 %v486
        %v1453 = vunpack.c.l.b16 %v487
        %v1454 = vunpack.c.l.b16 %v488
        %v1455 = vunpack.c.l.b16 %v489
        %v1456 = vunpack.c.l.b16 %v490
        %v1457 = vunpack.c.l.b16 %v491
        %v1458 = vunpack.c.l.b16 %v492
        %v1459 = vunpack.c.l.b16 %v493
        %v1460 = vunpack.c.l.b16 %v494
        %v1461 = vunpack.c.l.b16 %v495
        %v1462 = vunpack.c.l.b16 %v496
        %v1463 = vunpack.c.l.b16 %v497
        %v1464 = vunpack.c.l.b16 %v498
        %v1465 = vunpack.c.l.b16 %v499
        %v1466 = vunpack.c.l.b16 %v500
        %v1467 = vunpack.c.l.b16 %v501
        %v1468 = vunpack.c.l.b16 %v502
        %v1469 = vunpack.c.l.b16 %v503
        %v1470 = vunpack.c.l.b16 %v504
        %v1471 = vunpack.c.l.b16 %v505
        %v1472 = vunpack.c.l.b16 %v506
        %v1473 = vunpack.c.l.b16 %v507
        %v1474 = vunpack.c.l.b16 %v508
        %v1475 = vunpack.c.l.b16 %v509
        %v1476 = vunpack.c.l.b16 %v510
        %v1477 = vunpack.c.l.b16 %v511
        %v1478 = vunpack.c.l.b16 %v512
        %v1479 = vunpack.c.l.b16 %v513
        %v1480 = vunpack.c.l.b16 %v514
        %v1481 = vunpack.c.l.b16 %v515
        %v1482 = vunpack.c.l.b16 %v516
        %v1483 = vunpack.c.l.b16 %v517
        %v1484 = vunpack.c.l.b16 %v518
        %v1485 = vunpack.c.l.b16 %v519
        %v1486 = vunpack.c.l.b16 %v520
        %v1487 = vunpack.c.l.b16 %v521
        %v1488 = vunpack.c.l.b16 %v522
        %v1489 = vunpack.c.l.b16 %v523
        %v1490 = vunpack.c.l.b16 %v524
        %v1491 = vunpack.c.l.b16 %v525
        %v1492 = vunpack.c.l.b16 %v526
        %v1493 = vunpack.c.l.b16 %v527
        %v1494 = vunpack.c.l.b16 %v528
        %v1495 = vunpack.c.l.b16 %v529
        %v1496 = vunpack.c.l.b16 %v530
        %v1497 = vunpack.c.l.b16 %v531
        %v1498 = vunpack.c.l.b16 %v532
        %v1499 = vunpack.c.l.b16 %v533
        %v1500 = vunpack.c.l.b16 %v534
        %v1501 = vunpack.c.l.b16 %v535
        %v1502 = vunpack.c.l.b16 %v536
        %v1503 = vunpack.c.l.b16 %v537
        %v1504 = vunpack.c.l.b16 %v538
        %v1505 = vunpack.c.l.b16 %v539
        %v1506 = vunpack.c.l.b16 %v540
        %v1507 = vunpack.c.l.b16 %v541
        %v1508 = vunpack.c.l.b16 %v542
        %v1509 = vunpack.c.l.b16 %v543
        %v1510 = vunpack.c.l.b16 %v544
        %v1511 = vunpack.c.l.b16 %v545
        %v1512 = vunpack.c.l.b16 %v546
        %v1513 = vunpack.c.l.b16 %v547
        %v1514 = vunpack.c.l.b16 %v548
        %v1515 = vunpack.c.l.b16 %v549
        %v1516 = vunpack.c.l.b16 %v550
        %v1517 = vunpack.c.l.b16 %v551
        %v1518 = vunpack.c.l.b16 %v552
        %v1519 = vunpack.c.l.b16 %v553
        %v1520 = vunpack.c.l.b16 %v554
        %v1521 = vunpack.c.l.b16 %v555
        %v1522 = vunpack.c.l.b16 %v556
        %v1523 = vunpack.c.l.b16 %v557
        %v1524 = vunpack.c.l.b16 %v558
        %v1525 = vunpack.c.l.b16 %v559
        %v1526 = vunpack.c.l.b16 %v560
        %v1527 = vunpack.c.l.b16 %v561
        %v1528 = vunpack.c.l.b16 %v562
        %v1529 = vunpack.c.l.b16 %v563
        %v1530 = vunpack.c.l.b16 %v564
        %v1531 = vunpack.c.l.b16 %v565
        %v1532 = vunpack.c.l.b16 %v566
        %v1533 = vunpack.c.l.b16 %v567
        %v1534 = vunpack.c.l.b16 %v568
        %v1535 = vunpack.c.l.b16 %v569
        %v1536 = vunpack.c.l.b16 %v570
        %v1537 = vunpack.c.l.b16 %v571
        %v1538 = vunpack.c.l.b16 %v572
        %v1539 = vunpack.c.l.b16 %v573
        %v1540 = vunpack.c.l.b16 %v574
        %v1541 = vunpack.c.l.b16 %v575
        %v1542 = vunpack.c.l.b16 %v576
        %v1543 = vunpack.c.l.b16 %v577
        %v1544 = vunpack.c.l.b16 %v578
        %v1545 = vunpack.c.l.b16 %v579
        %v1546 = vunpack.c.l.b16 %v580
        %v1547 = vunpack.c.l.b16 %v581
        %v1548 = vunpack.c.l.b16 %v582
        %v1549 = vunpack.c.l.b16 %v583
        %v1550 = vunpack.c.l.b16 %v584
        %v1551 = vunpack.c.l.b16 %v585
        %v1552 = vunpack.c.l.b16 %v586
        %v1553 = vunpack.c.l.b16 %v587
        %v1554 = vunpack.c.l.b16 %v588
        %v1555 = vunpack.c.l.b16 %v589
        %v1556 = vunpack.c.l.b16 %v590
        %v1557 = vunpack.c.l.b16 %v591
        %v1558 = vunpack.c.l.b16 %v592
        %v1559 = vunpack.c.l.b16 %v593
        %v1560 = vunpack.c.l.b16 %v594
        %v1561 = vunpack.c.l.b16 %v595
        %v1562 = vunpack.c.l.b16 %v596
        %v1563 = vunpack.c.l.b16 %v597
        %v1564 = vunpack.c.l.b16 %v598
        %v1565 = vunpack.c.l.b16 %v599
        %v1566 = vunpack.c.l.b16 %v600
        %v1567 = vunpack.c.l.b16 %v601
        %v1568 = vunpack.c.l.b16 %v602
        %v1569 = vunpack.c.l.b16 %v603
        %v1570 = vunpack.c.l.b16 %v604
        %v1571 = vunpack.c.l.b16 %v605
        %v1572 = vunpack.c.l.b16 %v606
        %v1573 = vunpack.c.l.b16 %v607
        %v1574 = vunpack.c.l.b16 %v608
        %v1575 = vunpack.c.l.b16 %v609
        %v1576 = vunpack.c.l.b16 %v610
        %v1577 = vunpack.c.l.b16 %v611
        %v1578 = vunpack.c.l.b16 %v612
        %v1579 = vunpack.c.l.b16 %v613
        %v1580 = vunpack.c.l.b16 %v614
        %v1581 = vunpack.c.l.b16 %v615
        %v1582 = vunpack.c.l.b16 %v616
        %v1583 = vunpack.c.l.b16 %v617
        %v1584 = vunpack.c.l.b16 %v618
        %v1585 = vunpack.c.l.b16 %v619
        %v1586 = vunpack.c.l.b16 %v620
        %v1587 = vunpack.c.l.b16 %v621
        %v1588 = vunpack.c.l.b16 %v622
        %v1589 = vunpack.c.l.b16 %v623
        %v1590 = vunpack.c.l.b16 %v624
        %v1591 = vunpack.c.l.b16 %v625
        %v1592 = vunpack.c.l.b16 %v626
        %v1593 = vunpack.c.l.b16 %v627
        %v1594 = vunpack.c.l.b16 %v628
        %v1595 = vunpack.c.l.b16 %v629
        %v1596 = vunpack.c.l.b16 %v630
        %v1597 = vunpack.c.l.b16 %v631
        %v1598 = vunpack.c.l.b16 %v632
        %v1599 = vunpack.c.l.b16 %v633
        %v1600 = vunpack.c.l.b16 %v634
        %v1601 = vunpack.c.l.b16 %v635
        %v1602 = vunpack.c.l.b16 %v636
        %v1603 = vunpack.c.l.b16 %v637
        %v1604 = vunpack.c.l.b16 %v638
        %v1605 = vunpack.c.l.b16 %v639
        %v1606 = vunpack.c.l.b16 %v640
        %v1607 = vunpack.c.l.b16 %v641
        %v1608 = vunpack.c.l.b16 %v642
        %v1609 = vpack.c.b16 %v1178, %v1177
        %v1610 = vpack.c.b16 %v1180, %v1179
        %v1611 = vpack.c.b16 %v1182, %v1181
        %v1612 = vpack.c.b16 %v1184, %v1183
        %v1613 = vpack.c.b16 %v1186, %v1185
        %v1614 = vpack.c.b16 %v1188, %v1187
        %v1615 = vpack.c.b16 %v1190, %v1189
        %v1616 = vpack.c.b16 %v1192, %v1191
        %v1617 = vpack.c.b16 %v1194, %v1193
        %v1618 = vpack.c.b16 %v1196, %v1195
        %v1619 = vpack.c.b16 %v1198, %v1197
        %v1620 = vpack.c.b16 %v1200, %v1199
        %v1621 = vpack.c.b16 %v1202, %v1201
        %v1622 = vpack.c.b16 %v1204, %v1203
        %v1623 = vpack.c.b16 %v1206, %v1205
        %v1624 = vpack.c.b16 %v1208, %v1207
        %v1625 = vpack.c.b16 %v1210, %v1209
        %v1626 = vpack.c.b16 %v1212, %v1211
        %v1627 = vpack.c.b16 %v1214, %v1213
        %v1628 = vpack.c.b16 %v1216, %v1215
        %v1629 = vpack.c.b16 %v1218, %v1217
        %v1630 = vpack.c.b16 %v1220, %v1219
        %v1631 = vpack.c.b16 %v1222, %v1221
        %v1632 = vpack.c.b16 %v1224, %v1223
        %v1633 = vpack.c.b16 %v1226, %v1225
        %v1634 = vpack.c.b16 %v1228, %v1227
        %v1635 = vpack.c.b16 %v1230, %v1229
        %v1636 = vpack.c.b16 %v1232, %v1231
        %v1637 = vpack.c.b16 %v1234, %v1233
        %v1638 = vpack.c.b16 %v1236, %v1235
        %v1639 = vpack.c.b16 %v1238, %v1237
        %v1640 = vpack.c.b16 %v1240, %v1239
        %v1641 = vpack.c.b16 %v1242, %v1241
        %v1642 = vpack.c.b16 %v1244, %v1243
        %v1643 = vpack.c.b16 %v1246, %v1245
        %v1644 = vpack.c.b16 %v1248, %v1247
        %v1645 = vpack.c.b16 %v1250, %v1249
        %v1646 = vpack.c.b16 %v1252, %v1251
        %v1647 = vpack.c.b16 %v1254, %v1253
        %v1648 = vpack.c.b16 %v1256, %v1255
        %v1649 = vpack.c.b16 %v1258, %v1257
        %v1650 = vpack.c.b16 %v1260, %v1259
        %v1651 = vpack.c.b16 %v1262, %v1261
        %v1652 = vpack.c.b16 %v1264, %v1263
        %v1653 = vpack.c.b16 %v1266, %v1265
        %v1654 = vpack.c.b16 %v1268, %v1267
        %v1655 = vpack.c.b16 %v1270, %v1269
        %v1656 = vpack.c.b16 %v1272, %v1271
        %v1657 = vpack.c.b16 %v1274, %v1273
        %v1658 = vpack.c.b16 %v1276, %v1275
        %v1659 = vpack.c.b16 %v1278, %v1277
        %v1660 = vpack.c.b16 %v1280, %v1279
        %v1661 = vpack.c.b16 %v1282, %v1281
        %v1662 = vpack.c.b16 %v1284, %v1283
        %v1663 = vpack.c.b16 %v1286, %v1285
        %v1664 = vpack.c.b16 %v1288, %v1287
        %v1665 = vpack.c.b16 %v1290, %v1289
        %v1666 = vpack.c.b16 %v1292, %v1291
        %v1667 = vpack.c.b16 %v1294, %v1293
        %v1668 = vpack.c.b16 %v1296, %v1295
        %v1669 = vpack.c.b16 %v1298, %v1297
        %v1670 = vpack.c.b16 %v1300, %v1299
        %v1671 = vpack.c.b16 %v1302, %v1301
        %v1672 = vpack.c.b16 %v1304, %v1303
        %v1673 = vpack.c.b16 %v1306, %v1305
        %v1674 = vpack.c.b16 %v1308, %v1307
        %v1675 = vpack.c.b16 %v1310, %v1309
        %v1676 = vpack.c.b16 %v1312, %v1311
        %v1677 = vpack.c.b16 %v1314, %v1313
        %v1678 = vpack.c.b16 %v1316, %v1315
        %v1679 = vpack.c.b16 %v1318, %v1317
        %v1680 = vpack.c.b16 %v1320, %v1319
        %v1681 = vpack.c.b16 %v1322, %v1321
        %v1682 = vpack.c.b16 %v1324, %v1323
        %v1683 = vpack.c.b16 %v1326, %v1325
        %v1684 = vpack.c.b16 %v1328, %v1327
        %v1685 = vpack.c.b16 %v1330, %v1329
        %v1686 = vpack.c.b16 %v1332, %v1331
        %v1687 = vpack.c.b16 %v1334, %v1333
        %v1688 = vpack.c.b16 %v1336, %v1335
        %v1689 = vpack.c.b16 %v1338, %v1337
        %v1690 = vpack.c.b16 %v1340, %v1339
        %v1691 = vpack.c.b16 %v1342, %v1341
        %v1692 = vpack.c.b16 %v1344, %v1343
        %v1693 = vpack.c.b16 %v1346, %v1345
        %v1694 = vpack.c.b16 %v1348, %v1347
        %v1695 = vpack.c.b16 %v1350, %v1349
        %v1696 = vpack.c.b16 %v1352, %v1351
        %v1697 = vpack.c.b16 %v1354, %v1353
        %v1698 = vpack.c.b16 %v1356, %v1355
        %v1699 = vpack.c.b16 %v1358, %v1357
        %v1700 = vpack.c.b16 %v1360, %v1359
        %v1701 = vpack.c.b16 %v1362, %v1361
        %v1702 = vpack.c.b16 %v1364, %v1363
        %v1703 = vpack.c.b16 %v1366, %v1365
        %v1704 = vpack.c.b16 %v1368, %v1367
        %v1705 = vpack.c.b16 %v1370, %v1369
        %v1706 = vpack.c.b16 %v1372, %v1371
        %v1707 = vpack.c.b16 %v1374, %v1373
        %v1708 = vpack.c.b16 %v1376, %v1375
        %v1709 = vpack.c.b16 %v1378, %v1377
        %v1710 = vpack.c.b16 %v1380, %v1379
        %v1711 = vpack.c.b16 %v1382, %v1381
        %v1712 = vpack.c.b16 %v1384, %v1383
        %v1713 = vpack.c.b16 %v1386, %v1385
        %v1714 = vpack.c.b16 %v1388, %v1387
        %v1715 = vpack.c.b16 %v1390, %v1389
        %v1716 = vpack.c.b16 %v1392, %v1391
        %v1717 = vpack.c.b16 %v1394, %v1393
        %v1718 = vpack.c.b16 %v1396, %v1395
        %v1719 = vpack.c.b16 %v1398, %v1397
        %v1720 = vpack.c.b16 %v1400, %v1399
        %v1721 = vpack.c.b16 %v1402, %v1401
        %v1722 = vpack.c.b16 %v1404, %v1403
        %v1723 = vpack.c.b16 %v1406, %v1405
        %v1724 = vpack.c.b16 %v1408, %v1407
        %v1725 = vpack.c.b16 %v1410, %v1409
        %v1726 = vpack.c.b16 %v1412, %v1411
        %v1727 = vpack.c.b16 %v1414, %v1413
        %v1728 = vpack.c.b16 %v1416, %v1415
        %v1729 = vpack.c.b16 %v1418, %v1417
        %v1730 = vpack.c.b16 %v1420, %v1419
        %v1731 = vpack.c.b16 %v1422, %v1421
        %v1732 = vpack.c.b16 %v1424, %v1423
        %v1733 = vpack.c.b16 %v1426, %v1425
        %v1734 = vpack.c.b16 %v1428, %v1427
        %v1735 = vpack.c.b16 %v1430, %v1429
        %v1736 = vpack.c.b16 %v1432, %v1431
        %v1737 = vpack.c.b16 %v1434, %v1433
        %v1738 = vpack.c.b16 %v1436, %v1435
        %v1739 = vpack.c.b16 %v1438, %v1437
        %v1740 = vpack.c.b16 %v1440, %v1439
        %v1741 = vpack.c.b16 %v1442, %v1441
        %v1742 = vpack.c.b16 %v1444, %v1443
        %v1743 = vpack.c.b16 %v1446, %v1445
        %v1744 = vpack.c.b16 %v1448, %v1447
        %v1745 = vpack.c.b16 %v1450, %v1449
        %v1746 = vpack.c.b16 %v1452, %v1451
        %v1747 = vpack.c.b16 %v1454, %v1453
        %v1748 = vpack.c.b16 %v1456, %v1455
        %v1749 = vpack.c.b16 %v1458, %v1457
        %v1750 = vpack.c.b16 %v1460, %v1459
        %v1751 = vpack.c.b16 %v1462, %v1461
        %v1752 = vpack.c.b16 %v1464, %v1463
        %v1753 = vpack.c.b16 %v1466, %v1465
        %v1754 = vpack.c.b16 %v1468, %v1467
        %v1755 = vpack.c.b16 %v1470, %v1469
        %v1756 = vpack.c.b16 %v1472, %v1471
        %v1757 = vpack.c.b16 %v1474, %v1473
        %v1758 = vpack.c.b16 %v1476, %v1475
        %v1759 = vpack.c.b16 %v1478, %v1477
        %v1760 = vpack.c.b16 %v1480, %v1479
        %v1761 = vpack.c.b16 %v1482, %v1481
        %v1762 = vpack.c.b16 %v1484, %v1483
        %v1763 = vpack.c.b16 %v1486, %v1485
        %v1764 = vpack.c.b16 %v1488, %v1487
        %v1765 = vpack.c.b16 %v1490, %v1489
        %v1766 = vpack.c.b16 %v1492, %v1491
        %v1767 = vpack.c.b16 %v1494, %v1493
        %v1768 = vpack.c.b16 %v1496, %v1495
        %v1769 = vpack.c.b16 %v1498, %v1497
        %v1770 = vpack.c.b16 %v1500, %v1499
        %v1771 = vpack.c.b16 %v1502, %v1501
        %v1772 = vpack.c.b16 %v1504, %v1503
        %v1773 = vpack.c.b16 %v1506, %v1505
        %v1774 = vpack.c.b16 %v1508, %v1507
        %v1775 = vpack.c.b16 %v1510, %v1509
        %v1776 = vpack.c.b16 %v1512, %v1511
        %v1777 = vpack.c.b16 %v1514, %v1513
        %v1778 = vpack.c.b16 %v1516, %v1515
        %v1779 = vpack.c.b16 %v1518, %v1517
        %v1780 = vpack.c.b16 %v1520, %v1519
        %v1781 = vpack.c.b16 %v1522, %v1521
        %v1782 = vpack.c.b16 %v1524, %v1523
        %v1783 = vpack.c.b16 %v1526, %v1525
        %v1784 = vpack.c.b16 %v1528, %v1527
        %v1785 = vpack.c.b16 %v1530, %v1529
        %v1786 = vpack.c.b16 %v1532, %v1531
        %v1787 = vpack.c.b16 %v1534, %v1533
        %v1788 = vpack.c.b16 %v1536, %v1535
        %v1789 = vpack.c.b16 %v1538, %v1537
        %v1790 = vpack.c.b16 %v1540, %v1539
        %v1791 = vpack.c.b16 %v1542, %v1541
        %v1792 = vpack.c.b16 %v1544, %v1543
        %v1793 = vpack.c.b16 %v1546, %v1545
        %v1794 = vpack.c.b16 %v1548, %v1547
        %v1795 = vpack.c.b16 %v1550, %v1549
        %v1796 = vpack.c.b16 %v1552, %v1551
        %v1797 = vpack.c.b16 %v1554, %v1553
        %v1798 = vpack.c.b16 %v1556, %v1555
        %v1799 = vpack.c.b16 %v1558, %v1557
        %v1800 = vpack.c.b16 %v1560, %v1559
        %v1801 = vpack.c.b16 %v1562, %v1561
        %v1802 = vpack.c.b16 %v1564, %v1563
        %v1803 = vpack.c.b16 %v1566, %v1565
        %v1804 = vpack.c.b16 %v1568, %v1567
        %v1805 = vpack.c.b16 %v1570, %v1569
        %v1806 = vpack.c.b16 %v1572, %v1571
        %v1807 = vpack.c.b16 %v1574, %v1573
        %v1808 = vpack.c.b16 %v1576, %v1575
        %v1809 = vpack.c.b16 %v1578, %v1577
        %v1810 = vpack.c.b16 %v1580, %v1579
        %v1811 = vpack.c.b16 %v1582, %v1581
        %v1812 = vpack.c.b16 %v1584, %v1583
        %v1813 = vpack.c.b16 %v1586, %v1585
        %v1814 = vpack.c.b16 %v1588, %v1587
        %v1815 = vpack.c.b16 %v1590, %v1589
        %v1816 = vpack.c.b16 %v1592, %v1591
        %v1817 = vpack.c.b16 %v1594, %v1593
        %v1818 = vpack.c.b16 %v1596, %v1595
        %v1819 = vpack.c.b16 %v1598, %v1597
        %v1820 = vpack.c.b16 %v1600, %v1599
        %v1821 = vpack.c.b16 %v1602, %v1601
        %v1822 = vpack.c.b16 %v1604, %v1603
        %v1823 = vpack.c.b16 %v1606, %v1605
        %v1824 = vpack.c.b16 %v1608, %v1607
        %2041 = vmatprep.subr.bf16.mxu0 0
        %2042 = vmatpush1.bf16.msra.mxu0 %v1609
        %2043 = vmatprep.subr.bf16.mxu0 0
        %2044 = vmatpush1.bf16.msra.mxu0 %v1610
        %2045 = vmatprep.subr.bf16.mxu0 0
        %2046 = vmatpush1.bf16.msra.mxu0 %v1611
        %2047 = vmatprep.subr.bf16.mxu0 0
        %2048 = vmatpush1.bf16.msra.mxu0 %v1612
        %2049 = vmatprep.subr.bf16.mxu0 0
        %2050 = vmatpush1.bf16.msra.mxu0 %v1613
        %2051 = vmatprep.subr.bf16.mxu0 0
        %2052 = vmatpush1.bf16.msra.mxu0 %v1614
        %2053 = vmatprep.subr.bf16.mxu0 0
        %2054 = vmatpush1.bf16.msra.mxu0 %v1615
        %2055 = vmatprep.subr.bf16.mxu0 0
        %2056 = vmatpush1.bf16.msra.mxu0 %v1616
        %2057 = vmatprep.subr.bf16.mxu0 0
        %2058 = vmatpush1.bf16.msra.mxu0 %v1617
        %2059 = vmatprep.subr.bf16.mxu0 0
        %2060 = vmatpush1.bf16.msra.mxu0 %v1618
        %2061 = vmatprep.subr.bf16.mxu0 0
        %2062 = vmatpush1.bf16.msra.mxu0 %v1619
        %2063 = vmatprep.subr.bf16.mxu0 0
        %2064 = vmatpush1.bf16.msra.mxu0 %v1620
        %2065 = vmatprep.subr.bf16.mxu0 0
        %2066 = vmatpush1.bf16.msra.mxu0 %v1621
        %2067 = vmatprep.subr.bf16.mxu0 0
        %2068 = vmatpush1.bf16.msra.mxu0 %v1622
        %2069 = vmatprep.subr.bf16.mxu0 0
        %2070 = vmatpush1.bf16.msra.mxu0 %v1623
        %2071 = vmatprep.subr.bf16.mxu0 0
        %2072 = vmatpush1.bf16.msra.mxu0 %v1624
        %2073 = vmatprep.mubr.bf16.mxu0 %v692
        %2074 = vmatmul.mubr.bf16.gmra.mrb[0].mxu0 %v691
        %v2075 = vpop.f32.mrb[0].mxu0
        %v2076 = vadd.f32 %v648, %v2075
        %v2077 = vpop.f32.mrb[0].mxu0
        %v2078 = vpop.f32.mrb[0].mxu0
        %v2079 = vpop.f32.mrb[0].mxu0
        %2080 = vdwg.mxu0
        %2081 = vmatprep.subr.bf16.mxu0 0
        %2082 = vmatpush1.bf16.msra.mxu0 %v1625
        %2083 = vmatprep.subr.bf16.mxu0 0
        %2084 = vmatpush1.bf16.msra.mxu0 %v1626
        %2085 = vmatprep.subr.bf16.mxu0 0
        %2086 = vmatpush1.bf16.msra.mxu0 %v1627
        %2087 = vmatprep.subr.bf16.mxu0 0
        %2088 = vmatpush1.bf16.msra.mxu0 %v1628
        %2089 = vmatprep.subr.bf16.mxu0 0
        %2090 = vmatpush1.bf16.msra.mxu0 %v1629
        %2091 = vmatprep.subr.bf16.mxu0 0
        %2092 = vmatpush1.bf16.msra.mxu0 %v1630
        %2093 = vmatprep.subr.bf16.mxu0 0
        %2094 = vmatpush1.bf16.msra.mxu0 %v1631
        %2095 = vmatprep.subr.bf16.mxu0 0
        %2096 = vmatpush1.bf16.msra.mxu0 %v1632
        %2097 = vmatprep.subr.bf16.mxu0 0
        %2098 = vmatpush1.bf16.msra.mxu0 %v1633
        %2099 = vmatprep.subr.bf16.mxu0 0
        %2100 = vmatpush1.bf16.msra.mxu0 %v1634
        %2101 = vmatprep.subr.bf16.mxu0 0
        %2102 = vmatpush1.bf16.msra.mxu0 %v1635
        %2103 = vmatprep.subr.bf16.mxu0 0
        %2104 = vmatpush1.bf16.msra.mxu0 %v1636
        %2105 = vmatprep.subr.bf16.mxu0 0
        %2106 = vmatpush1.bf16.msra.mxu0 %v1637
        %2107 = vmatprep.subr.bf16.mxu0 0
        %2108 = vmatpush1.bf16.msra.mxu0 %v1638
        %2109 = vmatprep.subr.bf16.mxu0 0
        %2110 = vmatpush1.bf16.msra.mxu0 %v1639
        %2111 = vmatprep.subr.bf16.mxu0 0
        %2112 = vmatpush1.bf16.msra.mxu0 %v1640
        %2113 = vmatprep.mubr.bf16.mxu0 %v694
        %2114 = vmatmul.mubr.bf16.gmra.mrb[0].mxu0 %v693
        %v2115 = vpop.f32.mrb[0].mxu0
        %v2116 = vadd.f32 %v2076, %v2115
        %v2117 = vpop.f32.mrb[0].mxu0
        %v2118 = vpop.f32.mrb[0].mxu0
        %v2119 = vpop.f32.mrb[0].mxu0
        %2120 = vdwg.mxu0
        %2121 = vmatprep.subr.bf16.mxu0 0
        %2122 = vmatpush1.bf16.msra.mxu0 %v1641
        %2123 = vmatprep.subr.bf16.mxu0 0
        %2124 = vmatpush1.bf16.msra.mxu0 %v1642
        %2125 = vmatprep.subr.bf16.mxu0 0
        %2126 = vmatpush1.bf16.msra.mxu0 %v1643
        %2127 = vmatprep.subr.bf16.mxu0 0
        %2128 = vmatpush1.bf16.msra.mxu0 %v1644
        %2129 = vmatprep.subr.bf16.mxu0 0
        %2130 = vmatpush1.bf16.msra.mxu0 %v1645
        %2131 = vmatprep.subr.bf16.mxu0 0
        %2132 = vmatpush1.bf16.msra.mxu0 %v1646
        %2133 = vmatprep.subr.bf16.mxu0 0
        %2134 = vmatpush1.bf16.msra.mxu0 %v1647
        %2135 = vmatprep.subr.bf16.mxu0 0
        %2136 = vmatpush1.bf16.msra.mxu0 %v1648
        %2137 = vmatprep.subr.bf16.mxu0 0
        %2138 = vmatpush1.bf16.msra.mxu0 %v1649
        %2139 = vmatprep.subr.bf16.mxu0 0
        %2140 = vmatpush1.bf16.msra.mxu0 %v1650
        %2141 = vmatprep.subr.bf16.mxu0 0
        %2142 = vmatpush1.bf16.msra.mxu0 %v1651
        %2143 = vmatprep.subr.bf16.mxu0 0
        %2144 = vmatpush1.bf16.msra.mxu0 %v1652
        %2145 = vmatprep.subr.bf16.mxu0 0
        %2146 = vmatpush1.bf16.msra.mxu0 %v1653
        %2147 = vmatprep.subr.bf16.mxu0 0
        %2148 = vmatpush1.bf16.msra.mxu0 %v1654
        %2149 = vmatprep.subr.bf16.mxu0 0
        %2150 = vmatpush1.bf16.msra.mxu0 %v1655
        %2151 = vmatprep.subr.bf16.mxu0 0
        %2152 = vmatpush1.bf16.msra.mxu0 %v1656
        %2153 = vmatprep.mubr.bf16.mxu0 %v696
        %2154 = vmatmul.mubr.bf16.gmra.mrb[0].mxu0 %v695
        %v2155 = vpop.f32.mrb[0].mxu0
        %v2156 = vadd.f32 %v2116, %v2155
        %v2157 = vpop.f32.mrb[0].mxu0
        %v2158 = vpop.f32.mrb[0].mxu0
        %v2159 = vpop.f32.mrb[0].mxu0
        %2160 = vdwg.mxu0
        %2161 = vmatprep.subr.bf16.mxu0 0
        %2162 = vmatpush1.bf16.msra.mxu0 %v1657
        %2163 = vmatprep.subr.bf16.mxu0 0
        %2164 = vmatpush1.bf16.msra.mxu0 %v1658
        %2165 = vmatprep.subr.bf16.mxu0 0
        %2166 = vmatpush1.bf16.msra.mxu0 %v1659
        %2167 = vmatprep.subr.bf16.mxu0 0
        %2168 = vmatpush1.bf16.msra.mxu0 %v1660
        %2169 = vmatprep.subr.bf16.mxu0 0
        %2170 = vmatpush1.bf16.msra.mxu0 %v1661
        %2171 = vmatprep.subr.bf16.mxu0 0
        %2172 = vmatpush1.bf16.msra.mxu0 %v1662
        %2173 = vmatprep.subr.bf16.mxu0 0
        %2174 = vmatpush1.bf16.msra.mxu0 %v1663
        %2175 = vmatprep.subr.bf16.mxu0 0
        %2176 = vmatpush1.bf16.msra.mxu0 %v1664
        %2177 = vmatprep.subr.bf16.mxu0 0
        %2178 = vmatpush1.bf16.msra.mxu0 %v1665
        %2179 = vmatprep.subr.bf16.mxu0 0
        %2180 = vmatpush1.bf16.msra.mxu0 %v1666
        %2181 = vmatprep.subr.bf16.mxu0 0
        %2182 = vmatpush1.bf16.msra.mxu0 %v1667
        %2183 = vmatprep.subr.bf16.mxu0 0
        %2184 = vmatpush1.bf16.msra.mxu0 %v1668
        %2185 = vmatprep.subr.bf16.mxu0 0
        %2186 = vmatpush1.bf16.msra.mxu0 %v1669
        %2187 = vmatprep.subr.bf16.mxu0 0
        %2188 = vmatpush1.bf16.msra.mxu0 %v1670
        %2189 = vmatprep.subr.bf16.mxu0 0
        %2190 = vmatpush1.bf16.msra.mxu0 %v1671
        %2191 = vmatprep.subr.bf16.mxu0 0
        %2192 = vmatpush1.bf16.msra.mxu0 %v1672
        %2193 = vmatprep.mubr.bf16.mxu0 %v698
        %2194 = vmatmul.mubr.bf16.gmra.mrb[0].mxu0 %v697
        %v2195 = vpop.f32.mrb[0].mxu0
        %v2196 = vadd.f32 %v2156, %v2195
        %v2197 = vpop.f32.mrb[0].mxu0
        %v2198 = vpop.f32.mrb[0].mxu0
        %v2199 = vpop.f32.mrb[0].mxu0
        %2200 = vdwg.mxu0
        %2201 = vmatprep.subr.bf16.mxu0 0
        %2202 = vmatpush1.bf16.msra.mxu0 %v1673
        %2203 = vmatprep.subr.bf16.mxu0 0
        %2204 = vmatpush1.bf16.msra.mxu0 %v1674
        %2205 = vmatprep.subr.bf16.mxu0 0
        %2206 = vmatpush1.bf16.msra.mxu0 %v1675
        %2207 = vmatprep.subr.bf16.mxu0 0
        %2208 = vmatpush1.bf16.msra.mxu0 %v1676
        %2209 = vmatprep.subr.bf16.mxu0 0
        %2210 = vmatpush1.bf16.msra.mxu0 %v1677
        %2211 = vmatprep.subr.bf16.mxu0 0
        %2212 = vmatpush1.bf16.msra.mxu0 %v1678
        %2213 = vmatprep.subr.bf16.mxu0 0
        %2214 = vmatpush1.bf16.msra.mxu0 %v1679
        %2215 = vmatprep.subr.bf16.mxu0 0
        %2216 = vmatpush1.bf16.msra.mxu0 %v1680
        %2217 = vmatprep.subr.bf16.mxu0 0
        %2218 = vmatpush1.bf16.msra.mxu0 %v1681
        %2219 = vmatprep.subr.bf16.mxu0 0
        %2220 = vmatpush1.bf16.msra.mxu0 %v1682
        %2221 = vmatprep.subr.bf16.mxu0 0
        %2222 = vmatpush1.bf16.msra.mxu0 %v1683
        %2223 = vmatprep.subr.bf16.mxu0 0
        %2224 = vmatpush1.bf16.msra.mxu0 %v1684
        %2225 = vmatprep.subr.bf16.mxu0 0
        %2226 = vmatpush1.bf16.msra.mxu0 %v1685
        %2227 = vmatprep.subr.bf16.mxu0 0
        %2228 = vmatpush1.bf16.msra.mxu0 %v1686
        %2229 = vmatprep.subr.bf16.mxu0 0
        %2230 = vmatpush1.bf16.msra.mxu0 %v1687
        %2231 = vmatprep.subr.bf16.mxu0 0
        %2232 = vmatpush1.bf16.msra.mxu0 %v1688
        %2233 = vmatprep.mubr.bf16.mxu0 %v700
        %2234 = vmatmul.mubr.bf16.gmra.mrb[0].mxu0 %v699
        %v2235 = vpop.f32.mrb[0].mxu0
        %v2236 = vadd.f32 %v2196, %v2235
        %v2237 = vpop.f32.mrb[0].mxu0
        %v2238 = vpop.f32.mrb[0].mxu0
        %v2239 = vpop.f32.mrb[0].mxu0
        %2240 = vdwg.mxu0
        %2241 = vmatprep.subr.bf16.mxu0 0
        %2242 = vmatpush1.bf16.msra.mxu0 %v1689
        %2243 = vmatprep.subr.bf16.mxu0 0
        %2244 = vmatpush1.bf16.msra.mxu0 %v1690
        %2245 = vmatprep.subr.bf16.mxu0 0
        %2246 = vmatpush1.bf16.msra.mxu0 %v1691
        %2247 = vmatprep.subr.bf16.mxu0 0
        %2248 = vmatpush1.bf16.msra.mxu0 %v1692
        %2249 = vmatprep.subr.bf16.mxu0 0
        %2250 = vmatpush1.bf16.msra.mxu0 %v1693
        %2251 = vmatprep.subr.bf16.mxu0 0
        %2252 = vmatpush1.bf16.msra.mxu0 %v1694
        %2253 = vmatprep.subr.bf16.mxu0 0
        %2254 = vmatpush1.bf16.msra.mxu0 %v1695
        %2255 = vmatprep.subr.bf16.mxu0 0
        %2256 = vmatpush1.bf16.msra.mxu0 %v1696
        %2257 = vmatprep.subr.bf16.mxu0 0
        %2258 = vmatpush1.bf16.msra.mxu0 %v1697
        %2259 = vmatprep.subr.bf16.mxu0 0
        %2260 = vmatpush1.bf16.msra.mxu0 %v1698
        %2261 = vmatprep.subr.bf16.mxu0 0
        %2262 = vmatpush1.bf16.msra.mxu0 %v1699
        %2263 = vmatprep.subr.bf16.mxu0 0
        %2264 = vmatpush1.bf16.msra.mxu0 %v1700
        %2265 = vmatprep.subr.bf16.mxu0 0
        %2266 = vmatpush1.bf16.msra.mxu0 %v1701
        %2267 = vmatprep.subr.bf16.mxu0 0
        %2268 = vmatpush1.bf16.msra.mxu0 %v1702
        %2269 = vmatprep.subr.bf16.mxu0 0
        %2270 = vmatpush1.bf16.msra.mxu0 %v1703
        %2271 = vmatprep.subr.bf16.mxu0 0
        %2272 = vmatpush1.bf16.msra.mxu0 %v1704
        %2273 = vmatprep.mubr.bf16.mxu0 %v702
        %2274 = vmatmul.mubr.bf16.gmra.mrb[0].mxu0 %v701
        %v2275 = vpop.f32.mrb[0].mxu0
        %v2276 = vadd.f32 %v2236, %v2275
        %v2277 = vpop.f32.mrb[0].mxu0
        %v2278 = vpop.f32.mrb[0].mxu0
        %v2279 = vpop.f32.mrb[0].mxu0
        %2280 = vdwg.mxu0
        %2281 = vmatprep.subr.bf16.mxu0 0
        %2282 = vmatpush1.bf16.msra.mxu0 %v1705
        %2283 = vmatprep.subr.bf16.mxu0 0
        %2284 = vmatpush1.bf16.msra.mxu0 %v1706
        %2285 = vmatprep.subr.bf16.mxu0 0
        %2286 = vmatpush1.bf16.msra.mxu0 %v1707
        %2287 = vmatprep.subr.bf16.mxu0 0
        %2288 = vmatpush1.bf16.msra.mxu0 %v1708
        %2289 = vmatprep.subr.bf16.mxu0 0
        %2290 = vmatpush1.bf16.msra.mxu0 %v1709
        %2291 = vmatprep.subr.bf16.mxu0 0
        %2292 = vmatpush1.bf16.msra.mxu0 %v1710
        %2293 = vmatprep.subr.bf16.mxu0 0
        %2294 = vmatpush1.bf16.msra.mxu0 %v1711
        %2295 = vmatprep.subr.bf16.mxu0 0
        %2296 = vmatpush1.bf16.msra.mxu0 %v1712
        %2297 = vmatprep.subr.bf16.mxu0 0
        %2298 = vmatpush1.bf16.msra.mxu0 %v1713
        %2299 = vmatprep.subr.bf16.mxu0 0
        %2300 = vmatpush1.bf16.msra.mxu0 %v1714
        %2301 = vmatprep.subr.bf16.mxu0 0
        %2302 = vmatpush1.bf16.msra.mxu0 %v1715
        %2303 = vmatprep.subr.bf16.mxu0 0
        %2304 = vmatpush1.bf16.msra.mxu0 %v1716
        %2305 = vmatprep.subr.bf16.mxu0 0
        %2306 = vmatpush1.bf16.msra.mxu0 %v1717
        %2307 = vmatprep.subr.bf16.mxu0 0
        %2308 = vmatpush1.bf16.msra.mxu0 %v1718
        %2309 = vmatprep.subr.bf16.mxu0 0
        %2310 = vmatpush1.bf16.msra.mxu0 %v1719
        %2311 = vmatprep.subr.bf16.mxu0 0
        %2312 = vmatpush1.bf16.msra.mxu0 %v1720
        %2313 = vmatprep.mubr.bf16.mxu0 %v704
        %2314 = vmatmul.mubr.bf16.gmra.mrb[0].mxu0 %v703
        %v2315 = vpop.f32.mrb[0].mxu0
        %v2316 = vadd.f32 %v2276, %v2315
        %v2317 = vpop.f32.mrb[0].mxu0
        %v2318 = vpop.f32.mrb[0].mxu0
        %v2319 = vpop.f32.mrb[0].mxu0
        %2320 = vdwg.mxu0
        %2321 = vmatprep.subr.bf16.mxu0 0
        %2322 = vmatpush1.bf16.msra.mxu0 %v1721
        %2323 = vmatprep.subr.bf16.mxu0 0
        %2324 = vmatpush1.bf16.msra.mxu0 %v1722
        %2325 = vmatprep.subr.bf16.mxu0 0
        %2326 = vmatpush1.bf16.msra.mxu0 %v1723
        %2327 = vmatprep.subr.bf16.mxu0 0
        %2328 = vmatpush1.bf16.msra.mxu0 %v1724
        %2329 = vmatprep.subr.bf16.mxu0 0
        %2330 = vmatpush1.bf16.msra.mxu0 %v1725
        %2331 = vmatprep.subr.bf16.mxu0 0
        %2332 = vmatpush1.bf16.msra.mxu0 %v1726
        %2333 = vmatprep.subr.bf16.mxu0 0
        %2334 = vmatpush1.bf16.msra.mxu0 %v1727
        %2335 = vmatprep.subr.bf16.mxu0 0
        %2336 = vmatpush1.bf16.msra.mxu0 %v1728
        %2337 = vmatprep.subr.bf16.mxu0 0
        %2338 = vmatpush1.bf16.msra.mxu0 %v1729
        %2339 = vmatprep.subr.bf16.mxu0 0
        %2340 = vmatpush1.bf16.msra.mxu0 %v1730
        %2341 = vmatprep.subr.bf16.mxu0 0
        %2342 = vmatpush1.bf16.msra.mxu0 %v1731
        %2343 = vmatprep.subr.bf16.mxu0 0
        %2344 = vmatpush1.bf16.msra.mxu0 %v1732
        %2345 = vmatprep.subr.bf16.mxu0 0
        %2346 = vmatpush1.bf16.msra.mxu0 %v1733
        %2347 = vmatprep.subr.bf16.mxu0 0
        %2348 = vmatpush1.bf16.msra.mxu0 %v1734
        %2349 = vmatprep.subr.bf16.mxu0 0
        %2350 = vmatpush1.bf16.msra.mxu0 %v1735
        %2351 = vmatprep.subr.bf16.mxu0 0
        %2352 = vmatpush1.bf16.msra.mxu0 %v1736
        %2353 = vmatprep.mubr.bf16.mxu0 %v706
        %2354 = vmatmul.mubr.bf16.gmra.mrb[0].mxu0 %v705
        %v2355 = vpop.f32.mrb[0].mxu0
        %v2356 = vadd.f32 %v2316, %v2355
        %v2357 = vpop.f32.mrb[0].mxu0
        %v2358 = vpop.f32.mrb[0].mxu0
        %v2359 = vpop.f32.mrb[0].mxu0
        %2360 = vdwg.mxu0
        %2361 = vmatprep.subr.bf16.mxu0 0
        %2362 = vmatpush1.bf16.msra.mxu0 %v1737
        %2363 = vmatprep.subr.bf16.mxu0 0
        %2364 = vmatpush1.bf16.msra.mxu0 %v1738
        %2365 = vmatprep.subr.bf16.mxu0 0
        %2366 = vmatpush1.bf16.msra.mxu0 %v1739
        %2367 = vmatprep.subr.bf16.mxu0 0
        %2368 = vmatpush1.bf16.msra.mxu0 %v1740
        %2369 = vmatprep.subr.bf16.mxu0 0
        %2370 = vmatpush1.bf16.msra.mxu0 %v1741
        %2371 = vmatprep.subr.bf16.mxu0 0
        %2372 = vmatpush1.bf16.msra.mxu0 %v1742
        %2373 = vmatprep.subr.bf16.mxu0 0
        %2374 = vmatpush1.bf16.msra.mxu0 %v1743
        %2375 = vmatprep.subr.bf16.mxu0 0
        %2376 = vmatpush1.bf16.msra.mxu0 %v1744
        %2377 = vmatprep.subr.bf16.mxu0 0
        %2378 = vmatpush1.bf16.msra.mxu0 %v1745
        %2379 = vmatprep.subr.bf16.mxu0 0
        %2380 = vmatpush1.bf16.msra.mxu0 %v1746
        %2381 = vmatprep.subr.bf16.mxu0 0
        %2382 = vmatpush1.bf16.msra.mxu0 %v1747
        %2383 = vmatprep.subr.bf16.mxu0 0
        %2384 = vmatpush1.bf16.msra.mxu0 %v1748
        %2385 = vmatprep.subr.bf16.mxu0 0
        %2386 = vmatpush1.bf16.msra.mxu0 %v1749
        %2387 = vmatprep.subr.bf16.mxu0 0
        %2388 = vmatpush1.bf16.msra.mxu0 %v1750
        %2389 = vmatprep.subr.bf16.mxu0 0
        %2390 = vmatpush1.bf16.msra.mxu0 %v1751
        %2391 = vmatprep.subr.bf16.mxu0 0
        %2392 = vmatpush1.bf16.msra.mxu0 %v1752
        %2393 = vmatprep.mubr.bf16.mxu0 %v708
        %2394 = vmatmul.mubr.bf16.gmra.mrb[0].mxu0 %v707
        %v2395 = vpop.f32.mrb[0].mxu0
        %v2396 = vadd.f32 %v2356, %v2395
        %v2397 = vpop.f32.mrb[0].mxu0
        %v2398 = vpop.f32.mrb[0].mxu0
        %v2399 = vpop.f32.mrb[0].mxu0
        %2400 = vdwg.mxu0
        %2401 = vmatprep.subr.bf16.mxu0 0
        %2402 = vmatpush1.bf16.msra.mxu0 %v1753
        %2403 = vmatprep.subr.bf16.mxu0 0
        %2404 = vmatpush1.bf16.msra.mxu0 %v1754
        %2405 = vmatprep.subr.bf16.mxu0 0
        %2406 = vmatpush1.bf16.msra.mxu0 %v1755
        %2407 = vmatprep.subr.bf16.mxu0 0
        %2408 = vmatpush1.bf16.msra.mxu0 %v1756
        %2409 = vmatprep.subr.bf16.mxu0 0
        %2410 = vmatpush1.bf16.msra.mxu0 %v1757
        %2411 = vmatprep.subr.bf16.mxu0 0
        %2412 = vmatpush1.bf16.msra.mxu0 %v1758
        %2413 = vmatprep.subr.bf16.mxu0 0
        %2414 = vmatpush1.bf16.msra.mxu0 %v1759
        %2415 = vmatprep.subr.bf16.mxu0 0
        %2416 = vmatpush1.bf16.msra.mxu0 %v1760
        %2417 = vmatprep.subr.bf16.mxu0 0
        %2418 = vmatpush1.bf16.msra.mxu0 %v1761
        %2419 = vmatprep.subr.bf16.mxu0 0
        %2420 = vmatpush1.bf16.msra.mxu0 %v1762
        %2421 = vmatprep.subr.bf16.mxu0 0
        %2422 = vmatpush1.bf16.msra.mxu0 %v1763
        %2423 = vmatprep.subr.bf16.mxu0 0
        %2424 = vmatpush1.bf16.msra.mxu0 %v1764
        %2425 = vmatprep.subr.bf16.mxu0 0
        %2426 = vmatpush1.bf16.msra.mxu0 %v1765
        %2427 = vmatprep.subr.bf16.mxu0 0
        %2428 = vmatpush1.bf16.msra.mxu0 %v1766
        %2429 = vmatprep.subr.bf16.mxu0 0
        %2430 = vmatpush1.bf16.msra.mxu0 %v1767
        %2431 = vmatprep.subr.bf16.mxu0 0
        %2432 = vmatpush1.bf16.msra.mxu0 %v1768
        %2433 = vmatprep.mubr.bf16.mxu0 %v710
        %2434 = vmatmul.mubr.bf16.gmra.mrb[0].mxu0 %v709
        %v2435 = vpop.f32.mrb[0].mxu0
        %v2436 = vadd.f32 %v2396, %v2435
        %v2437 = vpop.f32.mrb[0].mxu0
        %v2438 = vpop.f32.mrb[0].mxu0
        %v2439 = vpop.f32.mrb[0].mxu0
        %2440 = vdwg.mxu0
        %2441 = vmatprep.subr.bf16.mxu0 0
        %2442 = vmatpush1.bf16.msra.mxu0 %v1769
        %2443 = vmatprep.subr.bf16.mxu0 0
        %2444 = vmatpush1.bf16.msra.mxu0 %v1770
        %2445 = vmatprep.subr.bf16.mxu0 0
        %2446 = vmatpush1.bf16.msra.mxu0 %v1771
        %2447 = vmatprep.subr.bf16.mxu0 0
        %2448 = vmatpush1.bf16.msra.mxu0 %v1772
        %2449 = vmatprep.subr.bf16.mxu0 0
        %2450 = vmatpush1.bf16.msra.mxu0 %v1773
        %2451 = vmatprep.subr.bf16.mxu0 0
        %2452 = vmatpush1.bf16.msra.mxu0 %v1774
        %2453 = vmatprep.subr.bf16.mxu0 0
        %2454 = vmatpush1.bf16.msra.mxu0 %v1775
        %2455 = vmatprep.subr.bf16.mxu0 0
        %2456 = vmatpush1.bf16.msra.mxu0 %v1776
        %2457 = vmatprep.subr.bf16.mxu0 0
        %2458 = vmatpush1.bf16.msra.mxu0 %v1777
        %2459 = vmatprep.subr.bf16.mxu0 0
        %2460 = vmatpush1.bf16.msra.mxu0 %v1778
        %2461 = vmatprep.subr.bf16.mxu0 0
        %2462 = vmatpush1.bf16.msra.mxu0 %v1779
        %2463 = vmatprep.subr.bf16.mxu0 0
        %2464 = vmatpush1.bf16.msra.mxu0 %v1780
        %2465 = vmatprep.subr.bf16.mxu0 0
        %2466 = vmatpush1.bf16.msra.mxu0 %v1781
        %2467 = vmatprep.subr.bf16.mxu0 0
        %2468 = vmatpush1.bf16.msra.mxu0 %v1782
        %2469 = vmatprep.subr.bf16.mxu0 0
        %2470 = vmatpush1.bf16.msra.mxu0 %v1783
        %2471 = vmatprep.subr.bf16.mxu0 0
        %2472 = vmatpush1.bf16.msra.mxu0 %v1784
        %2473 = vmatprep.mubr.bf16.mxu0 %v712
        %2474 = vmatmul.mubr.bf16.gmra.mrb[0].mxu0 %v711
        %v2475 = vpop.f32.mrb[0].mxu0
        %v2476 = vadd.f32 %v2436, %v2475
        %v2477 = vpop.f32.mrb[0].mxu0
        %v2478 = vpop.f32.mrb[0].mxu0
        %v2479 = vpop.f32.mrb[0].mxu0
        %2480 = vdwg.mxu0
        %2481 = vmatprep.subr.bf16.mxu0 0
        %2482 = vmatpush1.bf16.msra.mxu0 %v1785
        %2483 = vmatprep.subr.bf16.mxu0 0
        %2484 = vmatpush1.bf16.msra.mxu0 %v1786
        %2485 = vmatprep.subr.bf16.mxu0 0
        %2486 = vmatpush1.bf16.msra.mxu0 %v1787
        %2487 = vmatprep.subr.bf16.mxu0 0
        %2488 = vmatpush1.bf16.msra.mxu0 %v1788
        %2489 = vmatprep.subr.bf16.mxu0 0
        %2490 = vmatpush1.bf16.msra.mxu0 %v1789
        %2491 = vmatprep.subr.bf16.mxu0 0
        %2492 = vmatpush1.bf16.msra.mxu0 %v1790
        %2493 = vmatprep.subr.bf16.mxu0 0
        %2494 = vmatpush1.bf16.msra.mxu0 %v1791
        %2495 = vmatprep.subr.bf16.mxu0 0
        %2496 = vmatpush1.bf16.msra.mxu0 %v1792
        %2497 = vmatprep.subr.bf16.mxu0 0
        %2498 = vmatpush1.bf16.msra.mxu0 %v1793
        %2499 = vmatprep.subr.bf16.mxu0 0
        %2500 = vmatpush1.bf16.msra.mxu0 %v1794
        %2501 = vmatprep.subr.bf16.mxu0 0
        %2502 = vmatpush1.bf16.msra.mxu0 %v1795
        %2503 = vmatprep.subr.bf16.mxu0 0
        %2504 = vmatpush1.bf16.msra.mxu0 %v1796
        %2505 = vmatprep.subr.bf16.mxu0 0
        %2506 = vmatpush1.bf16.msra.mxu0 %v1797
        %2507 = vmatprep.subr.bf16.mxu0 0
        %2508 = vmatpush1.bf16.msra.mxu0 %v1798
        %2509 = vmatprep.subr.bf16.mxu0 0
        %2510 = vmatpush1.bf16.msra.mxu0 %v1799
        %2511 = vmatprep.subr.bf16.mxu0 0
        %2512 = vmatpush1.bf16.msra.mxu0 %v1800
        %2513 = vmatprep.mubr.bf16.mxu0 %v714
        %2514 = vmatmul.mubr.bf16.gmra.mrb[0].mxu0 %v713
        %v2515 = vpop.f32.mrb[0].mxu0
        %v2516 = vadd.f32 %v2476, %v2515
        %v2517 = vpop.f32.mrb[0].mxu0
        %v2518 = vpop.f32.mrb[0].mxu0
        %v2519 = vpop.f32.mrb[0].mxu0
        %2520 = vdwg.mxu0
        %2521 = vmatprep.subr.bf16.mxu0 0
        %2522 = vmatpush1.bf16.msra.mxu0 %v1801
        %2523 = vmatprep.subr.bf16.mxu0 0
        %2524 = vmatpush1.bf16.msra.mxu0 %v1802
        %2525 = vmatprep.subr.bf16.mxu0 0
        %2526 = vmatpush1.bf16.msra.mxu0 %v1803
        %2527 = vmatprep.subr.bf16.mxu0 0
        %2528 = vmatpush1.bf16.msra.mxu0 %v1804
        %2529 = vmatprep.subr.bf16.mxu0 0
        %2530 = vmatpush1.bf16.msra.mxu0 %v1805
        %2531 = vmatprep.subr.bf16.mxu0 0
        %2532 = vmatpush1.bf16.msra.mxu0 %v1806
        %2533 = vmatprep.subr.bf16.mxu0 0
        %2534 = vmatpush1.bf16.msra.mxu0 %v1807
        %2535 = vmatprep.subr.bf16.mxu0 0
        %2536 = vmatpush1.bf16.msra.mxu0 %v1808
        %2537 = vmatprep.subr.bf16.mxu0 0
        %2538 = vmatpush1.bf16.msra.mxu0 %v1809
        %2539 = vmatprep.subr.bf16.mxu0 0
        %2540 = vmatpush1.bf16.msra.mxu0 %v1810
        %2541 = vmatprep.subr.bf16.mxu0 0
        %2542 = vmatpush1.bf16.msra.mxu0 %v1811
        %2543 = vmatprep.subr.bf16.mxu0 0
        %2544 = vmatpush1.bf16.msra.mxu0 %v1812
        %2545 = vmatprep.subr.bf16.mxu0 0
        %2546 = vmatpush1.bf16.msra.mxu0 %v1813
        %2547 = vmatprep.subr.bf16.mxu0 0
        %2548 = vmatpush1.bf16.msra.mxu0 %v1814
        %2549 = vmatprep.subr.bf16.mxu0 0
        %2550 = vmatpush1.bf16.msra.mxu0 %v1815
        %2551 = vmatprep.subr.bf16.mxu0 0
        %2552 = vmatpush1.bf16.msra.mxu0 %v1816
        %2553 = vmatprep.mubr.bf16.mxu0 %v716
        %2554 = vmatmul.mubr.bf16.gmra.mrb[0].mxu0 %v715
        %v2555 = vpop.f32.mrb[0].mxu0
        %v2556 = vadd.f32 %v2516, %v2555
        %v2557 = vpop.f32.mrb[0].mxu0
        %v2558 = vpop.f32.mrb[0].mxu0
        %v2559 = vpop.f32.mrb[0].mxu0
        %2560 = vdwg.mxu0
        %2561 = vmatprep.subr.bf16.mxu0 0
        %2562 = vmatpush1.bf16.msra.mxu0 %v1817
        %2563 = vmatprep.subr.bf16.mxu0 0
        %2564 = vmatpush1.bf16.msra.mxu0 %v1818
        %2565 = vmatprep.subr.bf16.mxu0 0
        %2566 = vmatpush1.bf16.msra.mxu0 %v1819
        %2567 = vmatprep.subr.bf16.mxu0 0
        %2568 = vmatpush1.bf16.msra.mxu0 %v1820
        %2569 = vmatprep.subr.bf16.mxu0 0
        %2570 = vmatpush1.bf16.msra.mxu0 %v1821
        %2571 = vmatprep.subr.bf16.mxu0 0
        %2572 = vmatpush1.bf16.msra.mxu0 %v1822
        %2573 = vmatprep.subr.bf16.mxu0 0
        %2574 = vmatpush1.bf16.msra.mxu0 %v1823
        %2575 = vmatprep.subr.bf16.mxu0 0
        %2576 = vmatpush1.bf16.msra.mxu0 %v1824
        %2577 = vmatprep.subr.bf16.mxu0 0
        %2578 = vmatpush1.bf16.msra.mxu0 0
        %2579 = vmatprep.subr.bf16.mxu0 0
        %2580 = vmatpush1.bf16.msra.mxu0 0
        %2581 = vmatprep.subr.bf16.mxu0 0
        %2582 = vmatpush1.bf16.msra.mxu0 0
        %2583 = vmatprep.subr.bf16.mxu0 0
        %2584 = vmatpush1.bf16.msra.mxu0 0
        %2585 = vmatprep.subr.bf16.mxu0 0
        %2586 = vmatpush1.bf16.msra.mxu0 0
        %2587 = vmatprep.subr.bf16.mxu0 0
        %2588 = vmatpush1.bf16.msra.mxu0 0
        %2589 = vmatprep.subr.bf16.mxu0 0
        %2590 = vmatpush1.bf16.msra.mxu0 0
        %2591 = vmatprep.subr.bf16.mxu0 0
        %2592 = vmatpush1.bf16.msra.mxu0 0
        %2593 = vmatprep.mubr.bf16.mxu0 0
        %2594 = vmatmul.mubr.bf16.gmra.mrb[0].mxu0 %v717
        %v2595 = vpop.f32.mrb[0].mxu0
        %v2596 = vadd.f32 %v2556, %v2595
        %v2597 = vpop.f32.mrb[0].mxu0
        %v2598 = vpop.f32.mrb[0].mxu0
        %v2599 = vpop.f32.mrb[0].mxu0
        %2600 = vdwg.mxu0
        %v2601 = vld [vmem:[%s3] sm:$0xf]
        %vm2602 = vcmask 64512
        %v2604 = vsel %vm2602, %v2601, 0
        %2606 = vmatprep.subr.mxu0 0.0
        %2607 = vmatpush1.msra.mxu0 %v2596
        %2608 = vmatprep.subr.mxu0 0.0
        %2609 = vmatpush1.msra.mxu0 0.0
        %2610 = vmatprep.subr.mxu0 0.0
        %2611 = vmatpush1.msra.mxu0 0.0
        %2612 = vmatprep.subr.mxu0 0.0
        %2613 = vmatpush1.msra.mxu0 0.0
        %2614 = vmatprep.subr.mxu0 0.0
        %2615 = vmatpush1.msra.mxu0 0.0
        %2616 = vmatprep.subr.mxu0 0.0
        %2617 = vmatpush1.msra.mxu0 0.0
        %2618 = vmatprep.subr.mxu0 0.0
        %2619 = vmatpush1.msra.mxu0 0.0
        %2620 = vmatprep.subr.mxu0 0.0
        %2621 = vmatpush1.msra.mxu0 0.0
        %2622 = vmatprep.subr.mxu0 0.0
        %2623 = vmatpush1.msra.mxu0 0.0
        %2624 = vmatprep.subr.mxu0 0.0
        %2625 = vmatpush1.msra.mxu0 0.0
        %2626 = vmatprep.subr.mxu0 0.0
        %2627 = vmatpush1.msra.mxu0 0.0
        %2628 = vmatprep.subr.mxu0 0.0
        %2629 = vmatpush1.msra.mxu0 0.0
        %2630 = vmatprep.subr.mxu0 0.0
        %2631 = vmatpush1.msra.mxu0 0.0
        %2632 = vmatprep.subr.mxu0 0.0
        %2633 = vmatpush1.msra.mxu0 0.0
        %2634 = vmatprep.subr.mxu0 0.0
        %2635 = vmatpush1.msra.mxu0 0.0
        %2636 = vmatprep.subr.mxu0 0.0
        %2637 = vmatpush1.msra.mxu0 0.0
        %2638 = vmatprep.subr.mxu0 0.0
        %2639 = vmatpush1.msra.mxu0 0.0
        %2640 = vmatprep.subr.mxu0 0.0
        %2641 = vmatpush1.msra.mxu0 0.0
        %2642 = vmatprep.subr.mxu0 0.0
        %2643 = vmatpush1.msra.mxu0 0.0
        %2644 = vmatprep.subr.mxu0 0.0
        %2645 = vmatpush1.msra.mxu0 0.0
        %2646 = vmatprep.subr.mxu0 0.0
        %2647 = vmatpush1.msra.mxu0 0.0
        %2648 = vmatprep.subr.mxu0 0.0
        %2649 = vmatpush1.msra.mxu0 0.0
        %2650 = vmatprep.subr.mxu0 0.0
        %2651 = vmatpush1.msra.mxu0 0.0
        %2652 = vmatprep.subr.mxu0 0.0
        %2653 = vmatpush1.msra.mxu0 0.0
        %2654 = vmatprep.subr.mxu0 0.0
        %2655 = vmatpush1.msra.mxu0 0.0
        %2656 = vmatprep.subr.mxu0 0.0
        %2657 = vmatpush1.msra.mxu0 0.0
        %2658 = vmatprep.subr.mxu0 0.0
        %2659 = vmatpush1.msra.mxu0 0.0
        %2660 = vmatprep.subr.mxu0 0.0
        %2661 = vmatpush1.msra.mxu0 0.0
        %2662 = vmatprep.subr.mxu0 0.0
        %2663 = vmatpush1.msra.mxu0 0.0
        %2664 = vmatprep.subr.mxu0 0.0
        %2665 = vmatpush1.msra.mxu0 0.0
        %2666 = vmatprep.subr.mxu0 0.0
        %2667 = vmatpush1.msra.mxu0 0.0
        %2668 = vmatprep.subr.mxu0 0.0
        %2669 = vmatpush1.msra.mxu0 0.0
        %2670 = vmatprep.mubr.f32.mxu0 0.0
        %2671 = vmatmul.mubr.f32.gmra.mrb[0].mxu0 %v2604
        %v2672 = vpop.f32.mrb[0].mxu0
        %v2673 = vadd.f32 0.0, %v2672
        %v2674 = vpop.f32.mrb[0].mxu0
        %2675 = vdwg.mxu0
        %2676 = vst [vmem:[%s190] sm:$0xf] %v2673
        %s2677 = sand.u32 %s115, 1
        %s2678 = scalar_lea.sflag [#allocation3], %s2677
        %s2679 = sand.u32 %s115, 1
        %s2680 = smul.addr %s2679, 4
        %s2681 = scalar_lea.vmem [#allocation2], %s2680
        // Predicated region
        $region37: #{_lambda_.5} parent=35 // pred_check
          %p2682 = pneg %p125
        $region38: #{_lambda_.5} parent=35 // pred_check_branch
          %2684 = sbr.rel (%p2682) target = $region40
        $region39: #{_lambda_.5} parent=35 // pred_region
          %s2686 = ssub.s32 64, 64
          %2687 = vsyncadd %s2678, %s2686
          %s2688 = smul.addr %s18, 64
          %s2689 = scalar_lea.hbm %s4, %s2688
          %s2691 = sshll.u32 %s2681, 4
          %s2692 = int_to_ptr.vmem [resolvable:$true] %s2691
          %2694 = dma.vmem_to_hbm [thread:$0]  %s2692, 64, %s2689, %s2678
        $region40: #{_lambda_.5} parent=35 // pred_fallthru
          _
      $region36: #{_lambda_.5} parent=5 // pred_fallthru
        _
      %p2695 = scmp.le.s32.totalorder 2, %s13
      // Predicated region
      $region41: #{_lambda_.5} parent=5 // pred_check
        %p2696 = pneg %p2695
      $region42: #{_lambda_.5} parent=5 // pred_check_branch
        %2698 = sbr.rel (%p2696) target = $region44
      $region43: #{_lambda_.5} parent=5 // pred_region
        %s2699 = ssub.s32 %s13, 2
        // Predicated region
        $region45: #{_lambda_.5} parent=43 // pred_check
          %p2700 = pneg %p131
        $region46: #{_lambda_.5} parent=43 // pred_check_branch
          %2702 = sbr.rel (%p2700) target = $region48
        $region47: #{_lambda_.5} parent=43 // pred_region
          %s2703 = sand.u32 %s116, 1
          %s2704 = scalar_lea.sflag [#allocation3], %s2703
          %s2705 = sand.u32 %s116, 1
          %s2706 = smul.addr %s2705, 4
          %s2707 = scalar_lea.vmem [#allocation2], %s2706
          %2708 = dma.done %s2704, 64
        $region48: #{_lambda_.5} parent=43 // pred_fallthru
          _
      $region44: #{_lambda_.5} parent=5 // pred_fallthru
        _
    $region6: #{_lambda_.5} parent=1 // loop_footer
      %s17 = sadd.s32 1, %s13
    $region7: #{_lambda_.5} parent=1 // loop_footer_branch
      %12 = sbr.rel target = $region3
    $region8: #{_lambda_.5} parent=1 // loop_exit
      _
    %2709 = vsyncpa [#allocation3], 1
    %s2710 = scalar_lea.sflag [#allocation3], 1
    %2711 = vsyncpa %s2710, 1

</llo_original>
